<compile_context>
chip_gen: v5e
topology: v5e:2x2
jax: 0.10.0
libtpu: 0.0.40
codegen_flags: <defaults>
</compile_context>

<pallas_src>
import jax
import jax.numpy as jnp
from jax.experimental import pallas as pl
from jax.experimental.pallas import tpu as pltpu

H = W = 7
HW = H * W
CIN = 128
COUT = 32
KH = KW = 3
K_IM2COL = KH * KW * CIN            # 1152
C_PRE = 896 + 32 + 32 + 32          # x481 + x488 + x495 + x502 = 992
C_TOTAL = C_PRE + COUT + 32         # 1056
EPS = 1e-5
USE_BF16_MXU = False                # flip to True for the v5e build


def _fused_conv_cat_bn_kernel(im2col_ref, w_ref, xpre_ref, x516_ref, gb_ref,
                              o_ref):
    # ---- Conv2d(128->32, 3x3, pad 1) as a single K=1152 MXU contraction ----
    conv = jnp.dot(im2col_ref[...], w_ref[...],
                   preferred_element_type=jnp.float32)          # [49, 32] f32

    # ---- channel concat (in lane space, never touches HBM) -----------------
    xcat = jnp.concatenate([xpre_ref[...], conv, x516_ref[...]], axis=1)
    # xcat: [49, 1056] = [x481|x488|x495|x502 | conv | x516]

    # ---- BatchNorm2d(1056): batch stats (biased var) + folded affine -------
    mean = jnp.mean(xcat, axis=0, keepdims=True)                # [1, 1056]
    var = jnp.mean(jnp.square(xcat - mean), axis=0, keepdims=True)
    scale = gb_ref[0:1, :] * jax.lax.rsqrt(var + EPS)           # gamma * invstd
    shift = gb_ref[1:2, :] - mean * scale                       # beta - mean*scale
    o_ref[...] = xcat * scale + shift                           # one FMA / elem


def _nchw_to_flat(x):
    n, c, h, w = x.shape
    return jnp.transpose(x, (0, 2, 3, 1)).reshape(n * h * w, c)


@jax.jit
def forward(x508, x481, x488, x495, x502, x516, conv_w, gamma, beta):
    # Conv input: NCHW -> channels-last, zero-pad H/W by 1, build the [49,1152]
    # im2col tile (K order = (kh, kw, cin)); all tiny XLA ops, fusable into the
    # pallas_call operands via allow_input_fusion.
    xpad = jnp.pad(jnp.transpose(x508, (0, 2, 3, 1))[0],
                   ((1, 1), (1, 1), (0, 0)))                    # [9, 9, 128]
    im2col = jnp.concatenate(
        [xpad[kh:kh + H, kw:kw + W, :] for kh in range(KH) for kw in range(KW)],
        axis=-1).reshape(HW, K_IM2COL)                          # [49, 1152]
    # Weight: [Cout, Cin, 3, 3] -> [(kh,kw,cin), Cout] = [1152, 32].
    w2 = jnp.transpose(conv_w, (2, 3, 1, 0)).reshape(K_IM2COL, COUT)

    if USE_BF16_MXU:  # v5e: no native f32 MXU path
        im2col = im2col.astype(jnp.bfloat16)
        w2 = w2.astype(jnp.bfloat16)

    # Pre-concat the four leading segments and pack gamma/beta: 5 operands.
    xpre = jnp.concatenate(
        [_nchw_to_flat(t) for t in (x481, x488, x495, x502)], axis=1)  # [49,992]
    x516f = _nchw_to_flat(x516)                                        # [49, 32]
    gb = jnp.stack([gamma, beta], axis=0)                              # [2,1056]

    vmem = pl.BlockSpec(memory_space=pltpu.MemorySpace.VMEM)
    bytes_accessed = 4 * (HW * K_IM2COL + K_IM2COL * COUT + HW * C_PRE
                          + HW * 32 + 2 * C_TOTAL + HW * C_TOTAL)
    y = pl.pallas_call(
        _fused_conv_cat_bn_kernel,
        out_shape=jax.ShapeDtypeStruct((HW, C_TOTAL), jnp.float32),
        in_specs=[vmem] * 5,
        out_specs=vmem,
        compiler_params=pltpu.CompilerParams(allow_input_fusion=[True] * 5),
        cost_estimate=pl.CostEstimate(
            flops=2 * HW * K_IM2COL * COUT + 8 * HW * C_TOTAL,
            transcendentals=C_TOTAL,
            bytes_accessed=bytes_accessed),
    )(im2col, w2, xpre, x516f, gb)

    # Channels-last flat -> NCHW (one small fused transpose in XLA).
    return jnp.transpose(y.reshape(1, H, W, C_TOTAL), (0, 3, 1, 2))


def reference(x508, x481, x488, x495, x502, x516, conv_w, gamma, beta):
    # Pure-JAX reference for a sanity check.
    y = jax.lax.conv_general_dilated(
        jnp.transpose(x508, (0, 2, 3, 1)),
        jnp.transpose(conv_w, (2, 3, 1, 0)),
        window_strides=(1, 1), padding=((1, 1), (1, 1)),
        dimension_numbers=('NHWC', 'HWIO', 'NHWC'),
        preferred_element_type=jnp.float32)
    x509 = jnp.transpose(y, (0, 3, 1, 2))
    xcat = jnp.concatenate([x481, x488, x495, x502, x509, x516], axis=1)
    mean = jnp.mean(xcat, axis=(0, 2, 3), keepdims=True)
    var = jnp.mean((xcat - mean) ** 2, axis=(0, 2, 3), keepdims=True)
    return ((xcat - mean) * jax.lax.rsqrt(var + EPS) * gamma.reshape(1, -1, 1, 1)
            + beta.reshape(1, -1, 1, 1))


if __name__ == "__main__":
    key = jax.random.PRNGKey(0)
    ks = jax.random.split(key, 9)
    x481 = jax.random.normal(ks[0], (1, 896, 7, 7), jnp.float32)
    x488 = jax.random.normal(ks[1], (1, 32, 7, 7), jnp.float32)
    x495 = jax.random.normal(ks[2], (1, 32, 7, 7), jnp.float32)
    x502 = jax.random.normal(ks[3], (1, 32, 7, 7), jnp.float32)
    x508 = jax.random.normal(ks[4], (1, 128, 7, 7), jnp.float32)
    x516 = jax.random.normal(ks[5], (1, 32, 7, 7), jnp.float32)

    # Conv2d(128, 32, 3x3) weight: PyTorch-style uniform(-1/sqrt(fan_in), ...).
    fan_in = CIN * KH * KW
    bound = (1.0 / fan_in) ** 0.5
    conv_w = jax.random.uniform(ks[6], (COUT, CIN, KH, KW), jnp.float32,
                                minval=-bound, maxval=bound)
    # BatchNorm affine params (nontrivial, deterministic).
    gamma = 1.0 + 0.1 * jax.random.normal(ks[7], (C_TOTAL,), jnp.float32)
    beta = 0.1 * jax.random.normal(ks[8], (C_TOTAL,), jnp.float32)
    # TODO(synk): BatchNorm running_mean/running_var momentum update is a
    # training-time buffer side effect, not part of the returned forward value,
    # so it is not modeled here.

    out = forward(x508, x481, x488, x495, x502, x516, conv_w, gamma, beta)
    out = jax.block_until_ready(out)
    assert out.shape == (1, C_TOTAL, 7, 7), out.shape

    ref = reference(x508, x481, x488, x495, x502, x516, conv_w, gamma, beta)
    # Tight tolerance for the all-f32 path (loosen to ~1e-2 if USE_BF16_MXU).
    tol = 1e-2 if USE_BF16_MXU else 1e-3
    assert jnp.allclose(out, ref, atol=tol, rtol=tol), \
        float(jnp.max(jnp.abs(out - ref)))
    print("KERNEL_OK")
</pallas_src>

<mosaic_0001>
module attributes {stable_mosaic.version = 11 : i64} {
  func.func @_fused_conv_cat_bn_kernel(%arg0: memref<49x1152xf32, #tpu.memory_space<vmem>>, %arg1: memref<1152x32xf32, #tpu.memory_space<vmem>>, %arg2: memref<49x992xf32, #tpu.memory_space<vmem>>, %arg3: memref<49x32xf32, #tpu.memory_space<vmem>>, %arg4: memref<2x1056xf32, #tpu.memory_space<vmem>>, %arg5: memref<49x1056xf32, #tpu.memory_space<vmem>>) attributes {dimension_semantics = [], scalar_prefetch = 0 : i64, scratch_operands = 0 : i64, tpu.core_type = #tpu.core_type<tc>} {
    %c0 = arith.constant 0 : index
    %c0_0 = arith.constant 0 : index
    %0 = vector.load %arg0[%c0, %c0_0] : memref<49x1152xf32, #tpu.memory_space<vmem>>, vector<49x1152xf32>
    %c0_1 = arith.constant 0 : index
    %c0_2 = arith.constant 0 : index
    %1 = vector.load %arg1[%c0_1, %c0_2] : memref<1152x32xf32, #tpu.memory_space<vmem>>, vector<1152x32xf32>
    %cst = arith.constant dense<0.000000e+00> : vector<49x32xf32>
    %2 = tpu.matmul %0, %1, %cst {dimension_numbers = #tpu.dot_dimension_numbers<[1], [0], [0], [1], [0, 0, 1, 1], [], []>} : vector<49x1152xf32>, vector<1152x32xf32>, vector<49x32xf32> -> vector<49x32xf32>
    %c0_3 = arith.constant 0 : index
    %c0_4 = arith.constant 0 : index
    %3 = vector.load %arg2[%c0_3, %c0_4] : memref<49x992xf32, #tpu.memory_space<vmem>>, vector<49x992xf32>
    %c0_5 = arith.constant 0 : index
    %c0_6 = arith.constant 0 : index
    %4 = vector.load %arg3[%c0_5, %c0_6] : memref<49x32xf32, #tpu.memory_space<vmem>>, vector<49x32xf32>
    %5 = tpu.concatenate %3, %2, %4 in 1 : vector<49x992xf32>, vector<49x32xf32>, vector<49x32xf32> -> vector<49x1056xf32>
    %cst_7 = arith.constant dense<0.000000e+00> : vector<1056xf32>
    %6 = vector.multi_reduction <add>, %5, %cst_7 [0] : vector<49x1056xf32> to vector<1056xf32>
    %7 = vector.shape_cast %6 : vector<1056xf32> to vector<1x1056xf32>
    %cst_8 = arith.constant 4.900000e+01 : f32
    %8 = vector.broadcast %cst_8 : f32 to vector<1x1056xf32>
    %9 = arith.divf %7, %8 : vector<1x1056xf32>
    %10 = vector.broadcast %9 : vector<1x1056xf32> to vector<49x1056xf32>
    %11 = arith.subf %5, %10 : vector<49x1056xf32>
    %12 = arith.mulf %11, %11 : vector<49x1056xf32>
    %cst_9 = arith.constant dense<0.000000e+00> : vector<1056xf32>
    %13 = vector.multi_reduction <add>, %12, %cst_9 [0] : vector<49x1056xf32> to vector<1056xf32>
    %14 = vector.shape_cast %13 : vector<1056xf32> to vector<1x1056xf32>
    %cst_10 = arith.constant 4.900000e+01 : f32
    %15 = vector.broadcast %cst_10 : f32 to vector<1x1056xf32>
    %16 = arith.divf %14, %15 : vector<1x1056xf32>
    %c0_11 = arith.constant 0 : index
    %c0_12 = arith.constant 0 : index
    %17 = vector.load %arg4[%c0_11, %c0_12] : memref<2x1056xf32, #tpu.memory_space<vmem>>, vector<1x1056xf32>
    %cst_13 = arith.constant 9.99999974E-6 : f32
    %18 = vector.broadcast %cst_13 : f32 to vector<1x1056xf32>
    %19 = arith.addf %16, %18 : vector<1x1056xf32>
    %20 = math.rsqrt %19 : vector<1x1056xf32>
    %21 = arith.mulf %17, %20 : vector<1x1056xf32>
    %c1 = arith.constant 1 : index
    %c0_14 = arith.constant 0 : index
    %22 = vector.load %arg4[%c1, %c0_14] : memref<2x1056xf32, #tpu.memory_space<vmem>>, vector<1x1056xf32>
    %23 = arith.mulf %9, %21 : vector<1x1056xf32>
    %24 = arith.subf %22, %23 : vector<1x1056xf32>
    %25 = vector.broadcast %21 : vector<1x1056xf32> to vector<49x1056xf32>
    %26 = arith.mulf %5, %25 : vector<49x1056xf32>
    %27 = vector.broadcast %24 : vector<1x1056xf32> to vector<49x1056xf32>
    %28 = arith.addf %26, %27 : vector<49x1056xf32>
    %c0_15 = arith.constant 0 : index
    %c0_16 = arith.constant 0 : index
    %29 = vector.load %arg5[%c0_15, %c0_16] : memref<49x1056xf32, #tpu.memory_space<vmem>>, vector<49x1056xf32>
    tpu.vector_store %arg5[%c0_15, %c0_16], %28 {strides = array<i32>} : memref<49x1056xf32, #tpu.memory_space<vmem>>, vector<49x1056xf32>,
    return
  }
}

</mosaic_0001>

<llo_original>
// kernel: forward.2
$region0: #{forward.2}
  #allocation0 [shape = 'u32[]', space=smem, size = 0x4, offset = 0x4, fixed_abs, tag = 'smem constant byte address 0x4 - core index']
  #allocation1 [shape = 'u32[72,128]{1,0:T(1,128)}', space=vmem, size = 0x9000, scoped, tag = 'internal scratch']
  #allocation2 [shape = 'u32[2048]{0}', space=vmem, size = 0x2000, scoped, tag = 'scoped memory for forward.2']
  #allocation3 [shape = 'u32[2048]{0}', space=vmem, size = 0x2000, scoped, tag = 'scoped memory for forward.2']
  #allocation4 [shape = 'u32[2048]{0}', space=vmem, size = 0x2000, scoped, tag = 'scoped memory for forward.2']
  #allocation5 [shape = 'u32[2048]{0}', space=vmem, size = 0x2000, scoped, tag = 'scoped memory for forward.2']
  #allocation6 [shape = 'u32[2048]{0}', space=vmem, size = 0x2000, scoped, tag = 'scoped memory for forward.2']
  #allocation7 [shape = 'u32[2048]{0}', space=vmem, size = 0x2000, scoped, tag = 'scoped memory for forward.2']
  #allocation8 [shape = 'u32[2048]{0}', space=vmem, size = 0x2000, scoped, tag = 'scoped memory for forward.2']
  #allocation9 [shape = 'u32[2048]{0}', space=vmem, size = 0x2000, scoped, tag = 'scoped memory for forward.2']
  #allocation10 [shape = 'u32[2048]{0}', space=vmem, size = 0x2000, scoped, tag = 'scoped memory for forward.2']
  #allocation11 [shape = 'u32[2048]{0}', space=vmem, size = 0x2000, scoped, tag = 'scoped memory for forward.2']
  #allocation12 [shape = 'u32[2048]{0}', space=vmem, size = 0x2000, scoped, tag = 'scoped memory for forward.2']
  #allocation13 [shape = 'u32[2048]{0}', space=vmem, size = 0x2000, scoped, tag = 'scoped memory for forward.2']
  #allocation14 [shape = 'u32[2048]{0}', space=vmem, size = 0x2000, scoped, tag = 'scoped memory for forward.2']
  #allocation15 [shape = 'u32[2048]{0}', space=vmem, size = 0x2000, scoped, tag = 'scoped memory for forward.2']
  #allocation16 [shape = 'u32[2048]{0}', space=vmem, size = 0x2000, scoped, tag = 'scoped memory for forward.2']
  #allocation17 [shape = 'u32[2048]{0}', space=vmem, size = 0x2000, scoped, tag = 'scoped memory for forward.2']
  #allocation18 [shape = 'u32[2048]{0}', space=vmem, size = 0x2000, scoped, tag = 'scoped memory for forward.2']
  #allocation19 [shape = 'u32[2048]{0}', space=vmem, size = 0x2000, scoped, tag = 'scoped memory for forward.2']
  #allocation20 [shape = 'u32[2048]{0}', space=vmem, size = 0x2000, scoped, tag = 'scoped memory for forward.2']
  #allocation21 [shape = 'u32[2048]{0}', space=vmem, size = 0x2000, scoped, tag = 'scoped memory for forward.2']
  #allocation22 [shape = 'u32[2048]{0}', space=vmem, size = 0x2000, scoped, tag = 'scoped memory for forward.2']
  #allocation23 [shape = 'u32[2048]{0}', space=vmem, size = 0x2000, scoped, tag = 'scoped memory for forward.2']
  #allocation24 [shape = 'u32[2048]{0}', space=vmem, size = 0x2000, scoped, tag = 'scoped memory for forward.2']
  #allocation25 [shape = 'u32[2048]{0}', space=vmem, size = 0x2000, scoped, tag = 'scoped memory for forward.2']
  #allocation26 [shape = 'u32[2048]{0}', space=vmem, size = 0x2000, scoped, tag = 'scoped memory for forward.2']
  #allocation27 [shape = 'u32[2048]{0}', space=vmem, size = 0x2000, scoped, tag = 'scoped memory for forward.2']
  #allocation28 [shape = 'u32[2048]{0}', space=vmem, size = 0x2000, scoped, tag = 'scoped memory for forward.2']
  #allocation29 [shape = 'u32[2048]{0}', space=vmem, size = 0x2000, scoped, tag = 'scoped memory for forward.2']
  #allocation30 [shape = 'u32[2048]{0}', space=vmem, size = 0x2000, scoped, tag = 'scoped memory for forward.2']
  #allocation31 [shape = 'u32[2048]{0}', space=vmem, size = 0x2000, scoped, tag = 'scoped memory for forward.2']
  %s0 = inlined_call_operand.vmem [shape: f32[49,1152], index: 0, kind: input, shape index: {}]
  %s1 = inlined_call_operand.vmem [shape: f32[1152,32], index: 1, kind: input, shape index: {}]
  %s2 = inlined_call_operand.vmem [shape: f32[49,32], index: 2, kind: input, shape index: {}]
  %s3 = inlined_call_operand.vmem [shape: f32[49,32], index: 3, kind: input, shape index: {}]
  %s4 = inlined_call_operand.<no memory space> [shape: f32[], index: 4, kind: input, shape index: {}]
  %s5 = inlined_call_operand.vmem [shape: f32[49,32], index: 5, kind: input, shape index: {}]
  %s6 = inlined_call_operand.vmem [shape: f32[49,32], index: 6, kind: input, shape index: {}]
  %s7 = inlined_call_operand.vmem [shape: f32[49,896], index: 7, kind: input, shape index: {}]
  %s8 = inlined_call_operand.vmem [shape: f32[1,1056], index: 8, kind: input, shape index: {}]
  %s9 = inlined_call_operand.vmem [shape: f32[1,1056], index: 9, kind: input, shape index: {}]
  %s10 = inlined_call_operand.vmem [shape: f32[49,1056], index: 10, kind: output, shape index: {}]
  %s11 = sld [smem:[#allocation0]]
  $region46: #{forward.2} parent=0
    _
  %s13 = ssub.s32 1, %s11
  %s14 = scalar_select 0, %s13, %s11
  %v15 = vstv %s4
  %v16 = vstv %s4
  %v17 = vstv %s4
  %v18 = vstv %s4
  %v19 = vstv %s4
  %v20 = vstv %s4
  $region1: #{forward.2} parent=0
    #allocation32 [shape = 'u8[229376]{0}', space=vmem, size = 0x38000, dematerialized = true, scoped, tag = 'FusionAdapter Buffer %fusion.1 = f32[49,992]{1,0:T(8,128)} fusion(%param_3.14, %param_4.6, %param_5.3, %param_6.3, %param_7.4), kind=kLoop, calls=%fused_computation.1.clone, metadata={op_name="jit(forward)/concatenate" stack_frame_id=15}']
    #allocation33 [shape = 'u8[9216]{0}', space=vmem, size = 0x2400, dematerialized = true, scoped, tag = 'FusionAdapter Buffer %fusion.8 = f32[2,1056]{1,0:T(2,128)} fusion(%param_8.4, %param_4.6, %param_9.2), kind=kLoop, calls=%fused_computation.31.clone, metadata={op_name="jit(forward)/concatenate" stack_frame_id=18}']
    // Predicated region
    $region2: #{forward.2} parent=1 // pred_check
      _
    $region3: #{forward.2} parent=1 // pred_check_branch
      %22 = sbr.rel (0) target = $region5
    $region4: #{forward.2} parent=1 // pred_region
      _
    $region5: #{forward.2} parent=1 // pred_fallthru
      _
    // Predicated region
    $region6: #{forward.2} parent=1 // pred_check
      _
    $region7: #{forward.2} parent=1 // pred_check_branch
      %24 = sbr.rel (0) target = $region9
    $region8: #{forward.2} parent=1 // pred_region
      _
    $region9: #{forward.2} parent=1 // pred_fallthru
      _
    // Predicated region
    $region10: #{forward.2} parent=1 // pred_check
      _
    $region11: #{forward.2} parent=1 // pred_check_branch
      %26 = sbr.rel (0) target = $region13
    $region12: #{forward.2} parent=1 // pred_region
      %s28 = ssub.s32 1, 0
      %s29 = smul.u32 56, %s28
      %p30 = scmp.lt.s32.totalorder 0, 0
      %s31 = scalar_select %p30, 0, 0
      %s32 = smul.addr %s31, 8
      %s33 = scalar_lea.vmem %s3, %s32
      %s35 = ssub.s32 1, 0
      %s36 = smul.u32 56, %s35
    $region13: #{forward.2} parent=1 // pred_fallthru
      _
    // Predicated region
    $region14: #{forward.2} parent=1 // pred_check
      _
    $region15: #{forward.2} parent=1 // pred_check_branch
      %38 = sbr.rel (0) target = $region17
    $region16: #{forward.2} parent=1 // pred_region
      %s40 = ssub.s32 1, 0
      %s41 = smul.u32 56, %s40
      %p42 = scmp.lt.s32.totalorder 0, 0
      %s43 = scalar_select %p42, 0, 0
      %s44 = smul.addr %s43, 8
      %s45 = scalar_lea.vmem %s5, %s44
      %s47 = ssub.s32 1, 0
      %s48 = smul.u32 56, %s47
    $region17: #{forward.2} parent=1 // pred_fallthru
      _
    // Predicated region
    $region18: #{forward.2} parent=1 // pred_check
      _
    $region19: #{forward.2} parent=1 // pred_check_branch
      %50 = sbr.rel (0) target = $region21
    $region20: #{forward.2} parent=1 // pred_region
      %s52 = ssub.s32 1, 0
      %s53 = smul.u32 56, %s52
      %p54 = scmp.lt.s32.totalorder 0, 0
      %s55 = scalar_select %p54, 0, 0
      %s56 = smul.addr %s55, 8
      %s57 = scalar_lea.vmem %s6, %s56
      %s59 = ssub.s32 1, 0
      %s60 = smul.u32 56, %s59
    $region21: #{forward.2} parent=1 // pred_fallthru
      _
    // Predicated region
    $region22: #{forward.2} parent=1 // pred_check
      _
    $region23: #{forward.2} parent=1 // pred_check_branch
      %62 = sbr.rel (0) target = $region25
    $region24: #{forward.2} parent=1 // pred_region
      _
    $region25: #{forward.2} parent=1 // pred_fallthru
      _
    // Predicated region
    $region26: #{forward.2} parent=1 // pred_check
      _
    $region27: #{forward.2} parent=1 // pred_check_branch
      %64 = sbr.rel (0) target = $region29
    $region28: #{forward.2} parent=1 // pred_region
      _
    $region29: #{forward.2} parent=1 // pred_fallthru
      _
    // Predicated region
    $region30: #{forward.2} parent=1 // pred_check
      _
    $region31: #{forward.2} parent=1 // pred_check_branch
      %66 = sbr.rel (0) target = $region33
    $region32: #{forward.2} parent=1 // pred_region
      %s68 = ssub.s32 1, 0
      %s69 = smul.u32 %s68, 9
      %p70 = scmp.lt.s32.totalorder 0, 0
      %s71 = scalar_select %p70, 0, 0
      %s72 = smul.addr %s71, 9
      %s73 = scalar_lea.vmem %s8, %s72
      %s75 = ssub.s32 1, 0
      %s76 = smul.u32 %s75, 9
    $region33: #{forward.2} parent=1 // pred_fallthru
      _
    // Predicated region
    $region34: #{forward.2} parent=1 // pred_check
      _
    $region35: #{forward.2} parent=1 // pred_check_branch
      %78 = sbr.rel (0) target = $region37
    $region36: #{forward.2} parent=1 // pred_region
      _
    $region37: #{forward.2} parent=1 // pred_fallthru
      _
    %s80 = ssub.s32 1, 0
    %s81 = smul.u32 56, %s80
    %p82 = scmp.lt.s32.totalorder 0, 0
    %s83 = scalar_select %p82, 0, 0
    %s84 = smul.addr %s83, 8
    %s85 = scalar_lea.vmem %s3, %s84
    %s87 = ssub.s32 1, 0
    %s88 = smul.u32 56, %s87
    %p89 = scmp.lt.s32.totalorder 0, 0
    %s90 = scalar_select %p89, 0, 0
    %s91 = smul.addr %s90, 8
    %s92 = scalar_lea.vmem %s5, %s91
    %s94 = ssub.s32 1, 0
    %s95 = smul.u32 56, %s94
    %p96 = scmp.lt.s32.totalorder 0, 0
    %s97 = scalar_select %p96, 0, 0
    %s98 = smul.addr %s97, 8
    %s99 = scalar_lea.vmem %s6, %s98
    %s101 = ssub.s32 1, 0
    %s102 = smul.u32 %s101, 9
    %p103 = scmp.lt.s32.totalorder 0, 0
    %s104 = scalar_select %p103, 0, 0
    %s105 = smul.addr %s104, 9
    %s106 = scalar_lea.vmem %s8, %s105
    %s108 = ssub.s32 1, 0
    %s109 = smul.u32 56, %s108
    %p110 = scmp.lt.s32.totalorder 0, 0
    %s111 = scalar_select %p110, 0, 0
    %s112 = smul.addr %s111, 8
    %s113 = scalar_lea.vmem %s3, %s112
    %s115 = ssub.s32 1, 0
    %s116 = smul.u32 56, %s115
    %s118 = ssub.s32 1, 0
    %s119 = smul.u32 56, %s118
    %p120 = scmp.lt.s32.totalorder 0, 0
    %s121 = scalar_select %p120, 0, 0
    %s122 = smul.addr %s121, 8
    %s123 = scalar_lea.vmem %s5, %s122
    %s125 = ssub.s32 1, 0
    %s126 = smul.u32 56, %s125
    %s128 = ssub.s32 1, 0
    %s129 = smul.u32 56, %s128
    %p130 = scmp.lt.s32.totalorder 0, 0
    %s131 = scalar_select %p130, 0, 0
    %s132 = smul.addr %s131, 8
    %s133 = scalar_lea.vmem %s6, %s132
    %s135 = ssub.s32 1, 0
    %s136 = smul.u32 56, %s135
    %s138 = ssub.s32 1, 0
    %s139 = smul.u32 %s138, 9
    %p140 = scmp.lt.s32.totalorder 0, 0
    %s141 = scalar_select %p140, 0, 0
    %s142 = smul.addr %s141, 9
    %s143 = scalar_lea.vmem %s8, %s142
    %s145 = ssub.s32 1, 0
    %s146 = smul.u32 %s145, 9
    %s147 = ssub.s32 0, 0
    %p148 = scmp.lt.s32.totalorder %s147, 0
    %s149 = scalar_select %p148, 0, 255
    %v150 = vld [vmem:[%s113] sm:%s149]
    %s151 = ssub.s32 0, 0
    %p152 = scmp.lt.s32.totalorder %s151, 0
    %s153 = scalar_select %p152, 0, 255
    %v154 = vld [vmem:[%s123] sm:%s153]
    %s155 = ssub.s32 0, 0
    %p156 = scmp.lt.s32.totalorder %s155, 0
    %s157 = scalar_select %p156, 0, 255
    %v158 = vld [vmem:[%s133] sm:%s157]
    %v159 = vld [vmem:[%s7] sm:$0xff]
    %v160 = vlaneseq
    %v161 = vshrl.u32 %v160, 7
    %vm163 = vcmp.lt.s32.totalorder %v161, 49
    %v164 = vsel %vm163, %v159, %v18
    %165 = xla_tuple %v164, %v17
    %166 = xla_tuple %165
    %v167 = vmax.f32 %v164, %v17
    %168 = xla_tuple %v167
    %169 = xla_tuple %v167, %v16
    %170 = xla_tuple %169
    %v171 = vmax.f32 %v167, %v16
    %172 = xla_tuple %v171
    %173 = xla_tuple %v171, %v15
    %174 = xla_tuple %173
    %v175 = vmax.f32 %v171, %v15
    %176 = xla_tuple %v175
    %s178 = ssub.s32 256, 1
    %179 = vst [vmem:[#allocation32] sm:%s178] %v175
    %s180 = scalar_lea.vmem %s7, 8
    %v181 = vld [vmem:[%s180] sm:$0xff]
    %v182 = vlaneseq
    %v183 = vshrl.u32 %v182, 7
    %vm185 = vcmp.lt.s32.totalorder %v183, 49
    %v186 = vsel %vm185, %v181, %v18
    %187 = xla_tuple %v186, %v17
    %188 = xla_tuple %187
    %v189 = vmax.f32 %v186, %v17
    %190 = xla_tuple %v189
    %191 = xla_tuple %v189, %v16
    %192 = xla_tuple %191
    %v193 = vmax.f32 %v189, %v16
    %194 = xla_tuple %v193
    %195 = xla_tuple %v193, %v15
    %196 = xla_tuple %195
    %v197 = vmax.f32 %v193, %v15
    %198 = xla_tuple %v197
    %s199 = scalar_lea.vmem [#allocation32], 8
    %s201 = ssub.s32 256, 1
    %202 = vst [vmem:[%s199] sm:%s201] %v197
    %s203 = scalar_lea.vmem %s7, 16
    %v204 = vld [vmem:[%s203] sm:$0xff]
    %v205 = vlaneseq
    %v206 = vshrl.u32 %v205, 7
    %vm208 = vcmp.lt.s32.totalorder %v206, 49
    %v209 = vsel %vm208, %v204, %v18
    %210 = xla_tuple %v209, %v17
    %211 = xla_tuple %210
    %v212 = vmax.f32 %v209, %v17
    %213 = xla_tuple %v212
    %214 = xla_tuple %v212, %v16
    %215 = xla_tuple %214
    %v216 = vmax.f32 %v212, %v16
    %217 = xla_tuple %v216
    %218 = xla_tuple %v216, %v15
    %219 = xla_tuple %218
    %v220 = vmax.f32 %v216, %v15
    %221 = xla_tuple %v220
    %s222 = scalar_lea.vmem [#allocation32], 16
    %s224 = ssub.s32 256, 1
    %225 = vst [vmem:[%s222] sm:%s224] %v220
    %s226 = scalar_lea.vmem %s7, 24
    %v227 = vld [vmem:[%s226] sm:$0xff]
    %v228 = vlaneseq
    %v229 = vshrl.u32 %v228, 7
    %vm231 = vcmp.lt.s32.totalorder %v229, 49
    %v232 = vsel %vm231, %v227, %v18
    %233 = xla_tuple %v232, %v17
    %234 = xla_tuple %233
    %v235 = vmax.f32 %v232, %v17
    %236 = xla_tuple %v235
    %237 = xla_tuple %v235, %v16
    %238 = xla_tuple %237
    %v239 = vmax.f32 %v235, %v16
    %240 = xla_tuple %v239
    %241 = xla_tuple %v239, %v15
    %242 = xla_tuple %241
    %v243 = vmax.f32 %v239, %v15
    %244 = xla_tuple %v243
    %s245 = scalar_lea.vmem [#allocation32], 24
    %s247 = ssub.s32 256, 1
    %248 = vst [vmem:[%s245] sm:%s247] %v243
    %s249 = scalar_lea.vmem %s7, 32
    %v250 = vld [vmem:[%s249] sm:$0xff]
    %v251 = vlaneseq
    %v252 = vshrl.u32 %v251, 7
    %vm254 = vcmp.lt.s32.totalorder %v252, 49
    %v255 = vsel %vm254, %v250, %v18
    %256 = xla_tuple %v255, %v17
    %257 = xla_tuple %256
    %v258 = vmax.f32 %v255, %v17
    %259 = xla_tuple %v258
    %260 = xla_tuple %v258, %v16
    %261 = xla_tuple %260
    %v262 = vmax.f32 %v258, %v16
    %263 = xla_tuple %v262
    %264 = xla_tuple %v262, %v15
    %265 = xla_tuple %264
    %v266 = vmax.f32 %v262, %v15
    %267 = xla_tuple %v266
    %s268 = scalar_lea.vmem [#allocation32], 32
    %s270 = ssub.s32 256, 1
    %271 = vst [vmem:[%s268] sm:%s270] %v266
    %s272 = scalar_lea.vmem %s7, 40
    %v273 = vld [vmem:[%s272] sm:$0xff]
    %v274 = vlaneseq
    %v275 = vshrl.u32 %v274, 7
    %vm277 = vcmp.lt.s32.totalorder %v275, 49
    %v278 = vsel %vm277, %v273, %v18
    %279 = xla_tuple %v278, %v17
    %280 = xla_tuple %279
    %v281 = vmax.f32 %v278, %v17
    %282 = xla_tuple %v281
    %283 = xla_tuple %v281, %v16
    %284 = xla_tuple %283
    %v285 = vmax.f32 %v281, %v16
    %286 = xla_tuple %v285
    %287 = xla_tuple %v285, %v15
    %288 = xla_tuple %287
    %v289 = vmax.f32 %v285, %v15
    %290 = xla_tuple %v289
    %s291 = scalar_lea.vmem [#allocation32], 40
    %s293 = ssub.s32 256, 1
    %294 = vst [vmem:[%s291] sm:%s293] %v289
    %s295 = scalar_lea.vmem %s7, 48
    %v296 = vld [vmem:[%s295] sm:$0xff]
    %v297 = vlaneseq
    %v298 = vshrl.u32 %v297, 7
    %vm300 = vcmp.lt.s32.totalorder %v298, 49
    %v301 = vsel %vm300, %v296, %v18
    %302 = xla_tuple %v301, %v17
    %303 = xla_tuple %302
    %v304 = vmax.f32 %v301, %v17
    %305 = xla_tuple %v304
    %306 = xla_tuple %v304, %v16
    %307 = xla_tuple %306
    %v308 = vmax.f32 %v304, %v16
    %309 = xla_tuple %v308
    %310 = xla_tuple %v308, %v15
    %311 = xla_tuple %310
    %v312 = vmax.f32 %v308, %v15
    %313 = xla_tuple %v312
    %s314 = scalar_lea.vmem [#allocation32], 48
    %s316 = ssub.s32 256, 1
    %317 = vst [vmem:[%s314] sm:%s316] %v312
    %v318 = vlaneseq
    %v319 = vshrl.u32 %v318, 7
    %vm321 = vcmp.lt.s32.totalorder %v319, 49
    %v322 = vsel %vm321, %v150, %v15
    %v323 = vlaneseq
    %v324 = vand.u32 %v323, 127
    %v325 = vadd.s32 %v324, 1024
    %vm326 = vcmp.lt.s32.totalorder %v325, 1056
    %v327 = vsel %vm326, %v322, %v15
    %v328 = vlaneseq
    %v329 = vand.u32 %v328, 127
    %vm330 = vcmp.lt.s32.totalorder %v329, 64
    %v331 = vsel %vm330, %v327, %v15
    %332 = vrot.lane.b32.xlu0 %v331, 64
    %v333 = vpop.permute.xlu0 %332
    %v334 = vlaneseq
    %v335 = vshrl.u32 %v334, 7
    %vm337 = vcmp.lt.s32.totalorder %v335, 49
    %v338 = vsel %vm337, %v154, %v16
    %v339 = vlaneseq
    %v340 = vand.u32 %v339, 127
    %v341 = vadd.s32 %v340, 1024
    %vm342 = vcmp.lt.s32.totalorder %v341, 1056
    %v343 = vsel %vm342, %v338, %v16
    %v344 = vlaneseq
    %v345 = vand.u32 %v344, 127
    %vm346 = vcmp.lt.s32.totalorder %v345, 96
    %v347 = vsel %vm346, %v343, %v16
    %348 = vrot.lane.b32.xlu0 %v347, 32
    %v349 = vpop.permute.xlu0 %348
    %v350 = vlaneseq
    %v351 = vshrl.u32 %v350, 7
    %vm353 = vcmp.lt.s32.totalorder %v351, 49
    %v354 = vsel %vm353, %v158, %v17
    %v355 = vlaneseq
    %v356 = vand.u32 %v355, 127
    %v357 = vadd.s32 %v356, 896
    %vm358 = vcmp.lt.s32.totalorder %v357, 928
    %v359 = vsel %vm358, %v354, %v17
    %360 = xla_tuple %v18, %v359
    %361 = xla_tuple %360
    %v362 = vmax.f32 %v18, %v359
    %363 = xla_tuple %v362
    %364 = xla_tuple %v362, %v349
    %365 = xla_tuple %364
    %v366 = vmax.f32 %v362, %v349
    %367 = xla_tuple %v366
    %368 = xla_tuple %v366, %v333
    %369 = xla_tuple %368
    %v370 = vmax.f32 %v366, %v333
    %371 = xla_tuple %v370
    %s372 = scalar_lea.vmem [#allocation32], 56
    %s374 = ssub.s32 256, 1
    %375 = vst [vmem:[%s372] sm:%s374] %v370
    %s376 = scalar_lea.vmem %s113, 8
    %s377 = ssub.s32 0, 0
    %p378 = scmp.lt.s32.totalorder %s377, 0
    %s379 = scalar_select %p378, 0, 255
    %v380 = vld [vmem:[%s376] sm:%s379]
    %s381 = scalar_lea.vmem %s113, 8
    %s382 = scalar_lea.vmem %s123, 8
    %s383 = ssub.s32 0, 0
    %p384 = scmp.lt.s32.totalorder %s383, 0
    %s385 = scalar_select %p384, 0, 255
    %v386 = vld [vmem:[%s382] sm:%s385]
    %s387 = scalar_lea.vmem %s123, 8
    %s388 = scalar_lea.vmem %s133, 8
    %s389 = ssub.s32 0, 0
    %p390 = scmp.lt.s32.totalorder %s389, 0
    %s391 = scalar_select %p390, 0, 255
    %v392 = vld [vmem:[%s388] sm:%s391]
    %s393 = scalar_lea.vmem %s7, 56
    %v394 = vld [vmem:[%s393] sm:$0xff]
    %v395 = vlaneseq
    %v396 = vshrl.u32 %v395, 7
    %v397 = vadd.s32 %v396, 8
    %vm398 = vcmp.lt.s32.totalorder %v397, 49
    %v399 = vsel %vm398, %v394, %v18
    %400 = xla_tuple %v399, %v17
    %401 = xla_tuple %400
    %v402 = vmax.f32 %v399, %v17
    %403 = xla_tuple %v402
    %404 = xla_tuple %v402, %v16
    %405 = xla_tuple %404
    %v406 = vmax.f32 %v402, %v16
    %407 = xla_tuple %v406
    %408 = xla_tuple %v406, %v15
    %409 = xla_tuple %408
    %v410 = vmax.f32 %v406, %v15
    %411 = xla_tuple %v410
    %s412 = scalar_lea.vmem [#allocation32], 64
    %s414 = ssub.s32 256, 1
    %415 = vst [vmem:[%s412] sm:%s414] %v410
    %s416 = scalar_lea.vmem %s113, 8
    %s417 = scalar_lea.vmem %s123, 8
    %s418 = scalar_lea.vmem %s133, 8
    %s419 = scalar_lea.vmem %s7, 64
    %v420 = vld [vmem:[%s419] sm:$0xff]
    %v421 = vlaneseq
    %v422 = vshrl.u32 %v421, 7
    %v423 = vadd.s32 %v422, 8
    %vm424 = vcmp.lt.s32.totalorder %v423, 49
    %v425 = vsel %vm424, %v420, %v18
    %426 = xla_tuple %v425, %v17
    %427 = xla_tuple %426
    %v428 = vmax.f32 %v425, %v17
    %429 = xla_tuple %v428
    %430 = xla_tuple %v428, %v16
    %431 = xla_tuple %430
    %v432 = vmax.f32 %v428, %v16
    %433 = xla_tuple %v432
    %434 = xla_tuple %v432, %v15
    %435 = xla_tuple %434
    %v436 = vmax.f32 %v432, %v15
    %437 = xla_tuple %v436
    %s438 = scalar_lea.vmem [#allocation32], 72
    %s440 = ssub.s32 256, 1
    %441 = vst [vmem:[%s438] sm:%s440] %v436
    %s442 = scalar_lea.vmem %s113, 8
    %s443 = scalar_lea.vmem %s123, 8
    %s444 = scalar_lea.vmem %s133, 8
    %s445 = scalar_lea.vmem %s7, 72
    %v446 = vld [vmem:[%s445] sm:$0xff]
    %v447 = vlaneseq
    %v448 = vshrl.u32 %v447, 7
    %v449 = vadd.s32 %v448, 8
    %vm450 = vcmp.lt.s32.totalorder %v449, 49
    %v451 = vsel %vm450, %v446, %v18
    %452 = xla_tuple %v451, %v17
    %453 = xla_tuple %452
    %v454 = vmax.f32 %v451, %v17
    %455 = xla_tuple %v454
    %456 = xla_tuple %v454, %v16
    %457 = xla_tuple %456
    %v458 = vmax.f32 %v454, %v16
    %459 = xla_tuple %v458
    %460 = xla_tuple %v458, %v15
    %461 = xla_tuple %460
    %v462 = vmax.f32 %v458, %v15
    %463 = xla_tuple %v462
    %s464 = scalar_lea.vmem [#allocation32], 80
    %s466 = ssub.s32 256, 1
    %467 = vst [vmem:[%s464] sm:%s466] %v462
    %s468 = scalar_lea.vmem %s113, 8
    %s469 = scalar_lea.vmem %s123, 8
    %s470 = scalar_lea.vmem %s133, 8
    %s471 = scalar_lea.vmem %s7, 80
    %v472 = vld [vmem:[%s471] sm:$0xff]
    %v473 = vlaneseq
    %v474 = vshrl.u32 %v473, 7
    %v475 = vadd.s32 %v474, 8
    %vm476 = vcmp.lt.s32.totalorder %v475, 49
    %v477 = vsel %vm476, %v472, %v18
    %478 = xla_tuple %v477, %v17
    %479 = xla_tuple %478
    %v480 = vmax.f32 %v477, %v17
    %481 = xla_tuple %v480
    %482 = xla_tuple %v480, %v16
    %483 = xla_tuple %482
    %v484 = vmax.f32 %v480, %v16
    %485 = xla_tuple %v484
    %486 = xla_tuple %v484, %v15
    %487 = xla_tuple %486
    %v488 = vmax.f32 %v484, %v15
    %489 = xla_tuple %v488
    %s490 = scalar_lea.vmem [#allocation32], 88
    %s492 = ssub.s32 256, 1
    %493 = vst [vmem:[%s490] sm:%s492] %v488
    %s494 = scalar_lea.vmem %s113, 8
    %s495 = scalar_lea.vmem %s123, 8
    %s496 = scalar_lea.vmem %s133, 8
    %s497 = scalar_lea.vmem %s7, 88
    %v498 = vld [vmem:[%s497] sm:$0xff]
    %v499 = vlaneseq
    %v500 = vshrl.u32 %v499, 7
    %v501 = vadd.s32 %v500, 8
    %vm502 = vcmp.lt.s32.totalorder %v501, 49
    %v503 = vsel %vm502, %v498, %v18
    %504 = xla_tuple %v503, %v17
    %505 = xla_tuple %504
    %v506 = vmax.f32 %v503, %v17
    %507 = xla_tuple %v506
    %508 = xla_tuple %v506, %v16
    %509 = xla_tuple %508
    %v510 = vmax.f32 %v506, %v16
    %511 = xla_tuple %v510
    %512 = xla_tuple %v510, %v15
    %513 = xla_tuple %512
    %v514 = vmax.f32 %v510, %v15
    %515 = xla_tuple %v514
    %s516 = scalar_lea.vmem [#allocation32], 96
    %s518 = ssub.s32 256, 1
    %519 = vst [vmem:[%s516] sm:%s518] %v514
    %s520 = scalar_lea.vmem %s113, 8
    %s521 = scalar_lea.vmem %s123, 8
    %s522 = scalar_lea.vmem %s133, 8
    %s523 = scalar_lea.vmem %s7, 96
    %v524 = vld [vmem:[%s523] sm:$0xff]
    %v525 = vlaneseq
    %v526 = vshrl.u32 %v525, 7
    %v527 = vadd.s32 %v526, 8
    %vm528 = vcmp.lt.s32.totalorder %v527, 49
    %v529 = vsel %vm528, %v524, %v18
    %530 = xla_tuple %v529, %v17
    %531 = xla_tuple %530
    %v532 = vmax.f32 %v529, %v17
    %533 = xla_tuple %v532
    %534 = xla_tuple %v532, %v16
    %535 = xla_tuple %534
    %v536 = vmax.f32 %v532, %v16
    %537 = xla_tuple %v536
    %538 = xla_tuple %v536, %v15
    %539 = xla_tuple %538
    %v540 = vmax.f32 %v536, %v15
    %541 = xla_tuple %v540
    %s542 = scalar_lea.vmem [#allocation32], 104
    %s544 = ssub.s32 256, 1
    %545 = vst [vmem:[%s542] sm:%s544] %v540
    %s546 = scalar_lea.vmem %s113, 8
    %s547 = scalar_lea.vmem %s123, 8
    %s548 = scalar_lea.vmem %s133, 8
    %s549 = scalar_lea.vmem %s7, 104
    %v550 = vld [vmem:[%s549] sm:$0xff]
    %v551 = vlaneseq
    %v552 = vshrl.u32 %v551, 7
    %v553 = vadd.s32 %v552, 8
    %vm554 = vcmp.lt.s32.totalorder %v553, 49
    %v555 = vsel %vm554, %v550, %v18
    %556 = xla_tuple %v555, %v17
    %557 = xla_tuple %556
    %v558 = vmax.f32 %v555, %v17
    %559 = xla_tuple %v558
    %560 = xla_tuple %v558, %v16
    %561 = xla_tuple %560
    %v562 = vmax.f32 %v558, %v16
    %563 = xla_tuple %v562
    %564 = xla_tuple %v562, %v15
    %565 = xla_tuple %564
    %v566 = vmax.f32 %v562, %v15
    %567 = xla_tuple %v566
    %s568 = scalar_lea.vmem [#allocation32], 112
    %s570 = ssub.s32 256, 1
    %571 = vst [vmem:[%s568] sm:%s570] %v566
    %s572 = scalar_lea.vmem %s113, 8
    %v573 = vlaneseq
    %v574 = vshrl.u32 %v573, 7
    %v575 = vadd.s32 %v574, 8
    %vm576 = vcmp.lt.s32.totalorder %v575, 49
    %v577 = vsel %vm576, %v380, %v15
    %v578 = vlaneseq
    %v579 = vand.u32 %v578, 127
    %v580 = vadd.s32 %v579, 1024
    %vm581 = vcmp.lt.s32.totalorder %v580, 1056
    %v582 = vsel %vm581, %v577, %v15
    %v583 = vlaneseq
    %v584 = vand.u32 %v583, 127
    %vm585 = vcmp.lt.s32.totalorder %v584, 64
    %v586 = vsel %vm585, %v582, %v15
    %587 = vrot.lane.b32.xlu0 %v586, 64
    %v588 = vpop.permute.xlu0 %587
    %s589 = scalar_lea.vmem %s123, 8
    %v590 = vlaneseq
    %v591 = vshrl.u32 %v590, 7
    %v592 = vadd.s32 %v591, 8
    %vm593 = vcmp.lt.s32.totalorder %v592, 49
    %v594 = vsel %vm593, %v386, %v16
    %v595 = vlaneseq
    %v596 = vand.u32 %v595, 127
    %v597 = vadd.s32 %v596, 1024
    %vm598 = vcmp.lt.s32.totalorder %v597, 1056
    %v599 = vsel %vm598, %v594, %v16
    %v600 = vlaneseq
    %v601 = vand.u32 %v600, 127
    %vm602 = vcmp.lt.s32.totalorder %v601, 96
    %v603 = vsel %vm602, %v599, %v16
    %604 = vrot.lane.b32.xlu0 %v603, 32
    %v605 = vpop.permute.xlu0 %604
    %s606 = scalar_lea.vmem %s133, 8
    %v607 = vlaneseq
    %v608 = vshrl.u32 %v607, 7
    %v609 = vadd.s32 %v608, 8
    %vm610 = vcmp.lt.s32.totalorder %v609, 49
    %v611 = vsel %vm610, %v392, %v17
    %v612 = vlaneseq
    %v613 = vand.u32 %v612, 127
    %v614 = vadd.s32 %v613, 896
    %vm615 = vcmp.lt.s32.totalorder %v614, 928
    %v616 = vsel %vm615, %v611, %v17
    %617 = xla_tuple %v18, %v616
    %618 = xla_tuple %617
    %v619 = vmax.f32 %v18, %v616
    %620 = xla_tuple %v619
    %621 = xla_tuple %v619, %v605
    %622 = xla_tuple %621
    %v623 = vmax.f32 %v619, %v605
    %624 = xla_tuple %v623
    %625 = xla_tuple %v623, %v588
    %626 = xla_tuple %625
    %v627 = vmax.f32 %v623, %v588
    %628 = xla_tuple %v627
    %s629 = scalar_lea.vmem [#allocation32], 120
    %s631 = ssub.s32 256, 1
    %632 = vst [vmem:[%s629] sm:%s631] %v627
    %s633 = scalar_lea.vmem %s113, 16
    %s634 = ssub.s32 0, 0
    %p635 = scmp.lt.s32.totalorder %s634, 0
    %s636 = scalar_select %p635, 0, 255
    %v637 = vld [vmem:[%s633] sm:%s636]
    %s638 = scalar_lea.vmem %s113, 16
    %s639 = scalar_lea.vmem %s123, 16
    %s640 = ssub.s32 0, 0
    %p641 = scmp.lt.s32.totalorder %s640, 0
    %s642 = scalar_select %p641, 0, 255
    %v643 = vld [vmem:[%s639] sm:%s642]
    %s644 = scalar_lea.vmem %s123, 16
    %s645 = scalar_lea.vmem %s133, 16
    %s646 = ssub.s32 0, 0
    %p647 = scmp.lt.s32.totalorder %s646, 0
    %s648 = scalar_select %p647, 0, 255
    %v649 = vld [vmem:[%s645] sm:%s648]
    %s650 = scalar_lea.vmem %s7, 112
    %v651 = vld [vmem:[%s650] sm:$0xff]
    %v652 = vlaneseq
    %v653 = vshrl.u32 %v652, 7
    %v654 = vadd.s32 %v653, 16
    %vm655 = vcmp.lt.s32.totalorder %v654, 49
    %v656 = vsel %vm655, %v651, %v18
    %657 = xla_tuple %v656, %v17
    %658 = xla_tuple %657
    %v659 = vmax.f32 %v656, %v17
    %660 = xla_tuple %v659
    %661 = xla_tuple %v659, %v16
    %662 = xla_tuple %661
    %v663 = vmax.f32 %v659, %v16
    %664 = xla_tuple %v663
    %665 = xla_tuple %v663, %v15
    %666 = xla_tuple %665
    %v667 = vmax.f32 %v663, %v15
    %668 = xla_tuple %v667
    %s669 = scalar_lea.vmem [#allocation32], 128
    %s671 = ssub.s32 256, 1
    %672 = vst [vmem:[%s669] sm:%s671] %v667
    %s673 = scalar_lea.vmem %s113, 16
    %s674 = scalar_lea.vmem %s123, 16
    %s675 = scalar_lea.vmem %s133, 16
    %s676 = scalar_lea.vmem %s7, 120
    %v677 = vld [vmem:[%s676] sm:$0xff]
    %v678 = vlaneseq
    %v679 = vshrl.u32 %v678, 7
    %v680 = vadd.s32 %v679, 16
    %vm681 = vcmp.lt.s32.totalorder %v680, 49
    %v682 = vsel %vm681, %v677, %v18
    %683 = xla_tuple %v682, %v17
    %684 = xla_tuple %683
    %v685 = vmax.f32 %v682, %v17
    %686 = xla_tuple %v685
    %687 = xla_tuple %v685, %v16
    %688 = xla_tuple %687
    %v689 = vmax.f32 %v685, %v16
    %690 = xla_tuple %v689
    %691 = xla_tuple %v689, %v15
    %692 = xla_tuple %691
    %v693 = vmax.f32 %v689, %v15
    %694 = xla_tuple %v693
    %s695 = scalar_lea.vmem [#allocation32], 136
    %s697 = ssub.s32 256, 1
    %698 = vst [vmem:[%s695] sm:%s697] %v693
    %s699 = scalar_lea.vmem %s113, 16
    %s700 = scalar_lea.vmem %s123, 16
    %s701 = scalar_lea.vmem %s133, 16
    %s702 = scalar_lea.vmem %s7, 128
    %v703 = vld [vmem:[%s702] sm:$0xff]
    %v704 = vlaneseq
    %v705 = vshrl.u32 %v704, 7
    %v706 = vadd.s32 %v705, 16
    %vm707 = vcmp.lt.s32.totalorder %v706, 49
    %v708 = vsel %vm707, %v703, %v18
    %709 = xla_tuple %v708, %v17
    %710 = xla_tuple %709
    %v711 = vmax.f32 %v708, %v17
    %712 = xla_tuple %v711
    %713 = xla_tuple %v711, %v16
    %714 = xla_tuple %713
    %v715 = vmax.f32 %v711, %v16
    %716 = xla_tuple %v715
    %717 = xla_tuple %v715, %v15
    %718 = xla_tuple %717
    %v719 = vmax.f32 %v715, %v15
    %720 = xla_tuple %v719
    %s721 = scalar_lea.vmem [#allocation32], 144
    %s723 = ssub.s32 256, 1
    %724 = vst [vmem:[%s721] sm:%s723] %v719
    %s725 = scalar_lea.vmem %s113, 16
    %s726 = scalar_lea.vmem %s123, 16
    %s727 = scalar_lea.vmem %s133, 16
    %s728 = scalar_lea.vmem %s7, 136
    %v729 = vld [vmem:[%s728] sm:$0xff]
    %v730 = vlaneseq
    %v731 = vshrl.u32 %v730, 7
    %v732 = vadd.s32 %v731, 16
    %vm733 = vcmp.lt.s32.totalorder %v732, 49
    %v734 = vsel %vm733, %v729, %v18
    %735 = xla_tuple %v734, %v17
    %736 = xla_tuple %735
    %v737 = vmax.f32 %v734, %v17
    %738 = xla_tuple %v737
    %739 = xla_tuple %v737, %v16
    %740 = xla_tuple %739
    %v741 = vmax.f32 %v737, %v16
    %742 = xla_tuple %v741
    %743 = xla_tuple %v741, %v15
    %744 = xla_tuple %743
    %v745 = vmax.f32 %v741, %v15
    %746 = xla_tuple %v745
    %s747 = scalar_lea.vmem [#allocation32], 152
    %s749 = ssub.s32 256, 1
    %750 = vst [vmem:[%s747] sm:%s749] %v745
    %s751 = scalar_lea.vmem %s113, 16
    %s752 = scalar_lea.vmem %s123, 16
    %s753 = scalar_lea.vmem %s133, 16
    %s754 = scalar_lea.vmem %s7, 144
    %v755 = vld [vmem:[%s754] sm:$0xff]
    %v756 = vlaneseq
    %v757 = vshrl.u32 %v756, 7
    %v758 = vadd.s32 %v757, 16
    %vm759 = vcmp.lt.s32.totalorder %v758, 49
    %v760 = vsel %vm759, %v755, %v18
    %761 = xla_tuple %v760, %v17
    %762 = xla_tuple %761
    %v763 = vmax.f32 %v760, %v17
    %764 = xla_tuple %v763
    %765 = xla_tuple %v763, %v16
    %766 = xla_tuple %765
    %v767 = vmax.f32 %v763, %v16
    %768 = xla_tuple %v767
    %769 = xla_tuple %v767, %v15
    %770 = xla_tuple %769
    %v771 = vmax.f32 %v767, %v15
    %772 = xla_tuple %v771
    %s773 = scalar_lea.vmem [#allocation32], 160
    %s775 = ssub.s32 256, 1
    %776 = vst [vmem:[%s773] sm:%s775] %v771
    %s777 = scalar_lea.vmem %s113, 16
    %s778 = scalar_lea.vmem %s123, 16
    %s779 = scalar_lea.vmem %s133, 16
    %s780 = scalar_lea.vmem %s7, 152
    %v781 = vld [vmem:[%s780] sm:$0xff]
    %v782 = vlaneseq
    %v783 = vshrl.u32 %v782, 7
    %v784 = vadd.s32 %v783, 16
    %vm785 = vcmp.lt.s32.totalorder %v784, 49
    %v786 = vsel %vm785, %v781, %v18
    %787 = xla_tuple %v786, %v17
    %788 = xla_tuple %787
    %v789 = vmax.f32 %v786, %v17
    %790 = xla_tuple %v789
    %791 = xla_tuple %v789, %v16
    %792 = xla_tuple %791
    %v793 = vmax.f32 %v789, %v16
    %794 = xla_tuple %v793
    %795 = xla_tuple %v793, %v15
    %796 = xla_tuple %795
    %v797 = vmax.f32 %v793, %v15
    %798 = xla_tuple %v797
    %s799 = scalar_lea.vmem [#allocation32], 168
    %s801 = ssub.s32 256, 1
    %802 = vst [vmem:[%s799] sm:%s801] %v797
    %s803 = scalar_lea.vmem %s113, 16
    %s804 = scalar_lea.vmem %s123, 16
    %s805 = scalar_lea.vmem %s133, 16
    %s806 = scalar_lea.vmem %s7, 160
    %v807 = vld [vmem:[%s806] sm:$0xff]
    %v808 = vlaneseq
    %v809 = vshrl.u32 %v808, 7
    %v810 = vadd.s32 %v809, 16
    %vm811 = vcmp.lt.s32.totalorder %v810, 49
    %v812 = vsel %vm811, %v807, %v18
    %813 = xla_tuple %v812, %v17
    %814 = xla_tuple %813
    %v815 = vmax.f32 %v812, %v17
    %816 = xla_tuple %v815
    %817 = xla_tuple %v815, %v16
    %818 = xla_tuple %817
    %v819 = vmax.f32 %v815, %v16
    %820 = xla_tuple %v819
    %821 = xla_tuple %v819, %v15
    %822 = xla_tuple %821
    %v823 = vmax.f32 %v819, %v15
    %824 = xla_tuple %v823
    %s825 = scalar_lea.vmem [#allocation32], 176
    %s827 = ssub.s32 256, 1
    %828 = vst [vmem:[%s825] sm:%s827] %v823
    %s829 = scalar_lea.vmem %s113, 16
    %v830 = vlaneseq
    %v831 = vshrl.u32 %v830, 7
    %v832 = vadd.s32 %v831, 16
    %vm833 = vcmp.lt.s32.totalorder %v832, 49
    %v834 = vsel %vm833, %v637, %v15
    %v835 = vlaneseq
    %v836 = vand.u32 %v835, 127
    %v837 = vadd.s32 %v836, 1024
    %vm838 = vcmp.lt.s32.totalorder %v837, 1056
    %v839 = vsel %vm838, %v834, %v15
    %v840 = vlaneseq
    %v841 = vand.u32 %v840, 127
    %vm842 = vcmp.lt.s32.totalorder %v841, 64
    %v843 = vsel %vm842, %v839, %v15
    %844 = vrot.lane.b32.xlu0 %v843, 64
    %v845 = vpop.permute.xlu0 %844
    %s846 = scalar_lea.vmem %s123, 16
    %v847 = vlaneseq
    %v848 = vshrl.u32 %v847, 7
    %v849 = vadd.s32 %v848, 16
    %vm850 = vcmp.lt.s32.totalorder %v849, 49
    %v851 = vsel %vm850, %v643, %v16
    %v852 = vlaneseq
    %v853 = vand.u32 %v852, 127
    %v854 = vadd.s32 %v853, 1024
    %vm855 = vcmp.lt.s32.totalorder %v854, 1056
    %v856 = vsel %vm855, %v851, %v16
    %v857 = vlaneseq
    %v858 = vand.u32 %v857, 127
    %vm859 = vcmp.lt.s32.totalorder %v858, 96
    %v860 = vsel %vm859, %v856, %v16
    %861 = vrot.lane.b32.xlu0 %v860, 32
    %v862 = vpop.permute.xlu0 %861
    %s863 = scalar_lea.vmem %s133, 16
    %v864 = vlaneseq
    %v865 = vshrl.u32 %v864, 7
    %v866 = vadd.s32 %v865, 16
    %vm867 = vcmp.lt.s32.totalorder %v866, 49
    %v868 = vsel %vm867, %v649, %v17
    %v869 = vlaneseq
    %v870 = vand.u32 %v869, 127
    %v871 = vadd.s32 %v870, 896
    %vm872 = vcmp.lt.s32.totalorder %v871, 928
    %v873 = vsel %vm872, %v868, %v17
    %874 = xla_tuple %v18, %v873
    %875 = xla_tuple %874
    %v876 = vmax.f32 %v18, %v873
    %877 = xla_tuple %v876
    %878 = xla_tuple %v876, %v862
    %879 = xla_tuple %878
    %v880 = vmax.f32 %v876, %v862
    %881 = xla_tuple %v880
    %882 = xla_tuple %v880, %v845
    %883 = xla_tuple %882
    %v884 = vmax.f32 %v880, %v845
    %885 = xla_tuple %v884
    %s886 = scalar_lea.vmem [#allocation32], 184
    %s888 = ssub.s32 256, 1
    %889 = vst [vmem:[%s886] sm:%s888] %v884
    %s890 = scalar_lea.vmem %s113, 24
    %s891 = ssub.s32 0, 0
    %p892 = scmp.lt.s32.totalorder %s891, 0
    %s893 = scalar_select %p892, 0, 255
    %v894 = vld [vmem:[%s890] sm:%s893]
    %s895 = scalar_lea.vmem %s113, 24
    %s896 = scalar_lea.vmem %s123, 24
    %s897 = ssub.s32 0, 0
    %p898 = scmp.lt.s32.totalorder %s897, 0
    %s899 = scalar_select %p898, 0, 255
    %v900 = vld [vmem:[%s896] sm:%s899]
    %s901 = scalar_lea.vmem %s123, 24
    %s902 = scalar_lea.vmem %s133, 24
    %s903 = ssub.s32 0, 0
    %p904 = scmp.lt.s32.totalorder %s903, 0
    %s905 = scalar_select %p904, 0, 255
    %v906 = vld [vmem:[%s902] sm:%s905]
    %s907 = scalar_lea.vmem %s7, 168
    %v908 = vld [vmem:[%s907] sm:$0xff]
    %v909 = vlaneseq
    %v910 = vshrl.u32 %v909, 7
    %v911 = vadd.s32 %v910, 24
    %vm912 = vcmp.lt.s32.totalorder %v911, 49
    %v913 = vsel %vm912, %v908, %v18
    %914 = xla_tuple %v913, %v17
    %915 = xla_tuple %914
    %v916 = vmax.f32 %v913, %v17
    %917 = xla_tuple %v916
    %918 = xla_tuple %v916, %v16
    %919 = xla_tuple %918
    %v920 = vmax.f32 %v916, %v16
    %921 = xla_tuple %v920
    %922 = xla_tuple %v920, %v15
    %923 = xla_tuple %922
    %v924 = vmax.f32 %v920, %v15
    %925 = xla_tuple %v924
    %s926 = scalar_lea.vmem [#allocation32], 192
    %s928 = ssub.s32 256, 1
    %929 = vst [vmem:[%s926] sm:%s928] %v924
    %s930 = scalar_lea.vmem %s113, 24
    %s931 = scalar_lea.vmem %s123, 24
    %s932 = scalar_lea.vmem %s133, 24
    %s933 = scalar_lea.vmem %s7, 176
    %v934 = vld [vmem:[%s933] sm:$0xff]
    %v935 = vlaneseq
    %v936 = vshrl.u32 %v935, 7
    %v937 = vadd.s32 %v936, 24
    %vm938 = vcmp.lt.s32.totalorder %v937, 49
    %v939 = vsel %vm938, %v934, %v18
    %940 = xla_tuple %v939, %v17
    %941 = xla_tuple %940
    %v942 = vmax.f32 %v939, %v17
    %943 = xla_tuple %v942
    %944 = xla_tuple %v942, %v16
    %945 = xla_tuple %944
    %v946 = vmax.f32 %v942, %v16
    %947 = xla_tuple %v946
    %948 = xla_tuple %v946, %v15
    %949 = xla_tuple %948
    %v950 = vmax.f32 %v946, %v15
    %951 = xla_tuple %v950
    %s952 = scalar_lea.vmem [#allocation32], 200
    %s954 = ssub.s32 256, 1
    %955 = vst [vmem:[%s952] sm:%s954] %v950
    %s956 = scalar_lea.vmem %s113, 24
    %s957 = scalar_lea.vmem %s123, 24
    %s958 = scalar_lea.vmem %s133, 24
    %s959 = scalar_lea.vmem %s7, 184
    %v960 = vld [vmem:[%s959] sm:$0xff]
    %v961 = vlaneseq
    %v962 = vshrl.u32 %v961, 7
    %v963 = vadd.s32 %v962, 24
    %vm964 = vcmp.lt.s32.totalorder %v963, 49
    %v965 = vsel %vm964, %v960, %v18
    %966 = xla_tuple %v965, %v17
    %967 = xla_tuple %966
    %v968 = vmax.f32 %v965, %v17
    %969 = xla_tuple %v968
    %970 = xla_tuple %v968, %v16
    %971 = xla_tuple %970
    %v972 = vmax.f32 %v968, %v16
    %973 = xla_tuple %v972
    %974 = xla_tuple %v972, %v15
    %975 = xla_tuple %974
    %v976 = vmax.f32 %v972, %v15
    %977 = xla_tuple %v976
    %s978 = scalar_lea.vmem [#allocation32], 208
    %s980 = ssub.s32 256, 1
    %981 = vst [vmem:[%s978] sm:%s980] %v976
    %s982 = scalar_lea.vmem %s113, 24
    %s983 = scalar_lea.vmem %s123, 24
    %s984 = scalar_lea.vmem %s133, 24
    %s985 = scalar_lea.vmem %s7, 192
    %v986 = vld [vmem:[%s985] sm:$0xff]
    %v987 = vlaneseq
    %v988 = vshrl.u32 %v987, 7
    %v989 = vadd.s32 %v988, 24
    %vm990 = vcmp.lt.s32.totalorder %v989, 49
    %v991 = vsel %vm990, %v986, %v18
    %992 = xla_tuple %v991, %v17
    %993 = xla_tuple %992
    %v994 = vmax.f32 %v991, %v17
    %995 = xla_tuple %v994
    %996 = xla_tuple %v994, %v16
    %997 = xla_tuple %996
    %v998 = vmax.f32 %v994, %v16
    %999 = xla_tuple %v998
    %1000 = xla_tuple %v998, %v15
    %1001 = xla_tuple %1000
    %v1002 = vmax.f32 %v998, %v15
    %1003 = xla_tuple %v1002
    %s1004 = scalar_lea.vmem [#allocation32], 216
    %s1006 = ssub.s32 256, 1
    %1007 = vst [vmem:[%s1004] sm:%s1006] %v1002
    %s1008 = scalar_lea.vmem %s113, 24
    %s1009 = scalar_lea.vmem %s123, 24
    %s1010 = scalar_lea.vmem %s133, 24
    %s1011 = scalar_lea.vmem %s7, 200
    %v1012 = vld [vmem:[%s1011] sm:$0xff]
    %v1013 = vlaneseq
    %v1014 = vshrl.u32 %v1013, 7
    %v1015 = vadd.s32 %v1014, 24
    %vm1016 = vcmp.lt.s32.totalorder %v1015, 49
    %v1017 = vsel %vm1016, %v1012, %v18
    %1018 = xla_tuple %v1017, %v17
    %1019 = xla_tuple %1018
    %v1020 = vmax.f32 %v1017, %v17
    %1021 = xla_tuple %v1020
    %1022 = xla_tuple %v1020, %v16
    %1023 = xla_tuple %1022
    %v1024 = vmax.f32 %v1020, %v16
    %1025 = xla_tuple %v1024
    %1026 = xla_tuple %v1024, %v15
    %1027 = xla_tuple %1026
    %v1028 = vmax.f32 %v1024, %v15
    %1029 = xla_tuple %v1028
    %s1030 = scalar_lea.vmem [#allocation32], 224
    %s1032 = ssub.s32 256, 1
    %1033 = vst [vmem:[%s1030] sm:%s1032] %v1028
    %s1034 = scalar_lea.vmem %s113, 24
    %s1035 = scalar_lea.vmem %s123, 24
    %s1036 = scalar_lea.vmem %s133, 24
    %s1037 = scalar_lea.vmem %s7, 208
    %v1038 = vld [vmem:[%s1037] sm:$0xff]
    %v1039 = vlaneseq
    %v1040 = vshrl.u32 %v1039, 7
    %v1041 = vadd.s32 %v1040, 24
    %vm1042 = vcmp.lt.s32.totalorder %v1041, 49
    %v1043 = vsel %vm1042, %v1038, %v18
    %1044 = xla_tuple %v1043, %v17
    %1045 = xla_tuple %1044
    %v1046 = vmax.f32 %v1043, %v17
    %1047 = xla_tuple %v1046
    %1048 = xla_tuple %v1046, %v16
    %1049 = xla_tuple %1048
    %v1050 = vmax.f32 %v1046, %v16
    %1051 = xla_tuple %v1050
    %1052 = xla_tuple %v1050, %v15
    %1053 = xla_tuple %1052
    %v1054 = vmax.f32 %v1050, %v15
    %1055 = xla_tuple %v1054
    %s1056 = scalar_lea.vmem [#allocation32], 232
    %s1058 = ssub.s32 256, 1
    %1059 = vst [vmem:[%s1056] sm:%s1058] %v1054
    %s1060 = scalar_lea.vmem %s113, 24
    %s1061 = scalar_lea.vmem %s123, 24
    %s1062 = scalar_lea.vmem %s133, 24
    %s1063 = scalar_lea.vmem %s7, 216
    %v1064 = vld [vmem:[%s1063] sm:$0xff]
    %v1065 = vlaneseq
    %v1066 = vshrl.u32 %v1065, 7
    %v1067 = vadd.s32 %v1066, 24
    %vm1068 = vcmp.lt.s32.totalorder %v1067, 49
    %v1069 = vsel %vm1068, %v1064, %v18
    %1070 = xla_tuple %v1069, %v17
    %1071 = xla_tuple %1070
    %v1072 = vmax.f32 %v1069, %v17
    %1073 = xla_tuple %v1072
    %1074 = xla_tuple %v1072, %v16
    %1075 = xla_tuple %1074
    %v1076 = vmax.f32 %v1072, %v16
    %1077 = xla_tuple %v1076
    %1078 = xla_tuple %v1076, %v15
    %1079 = xla_tuple %1078
    %v1080 = vmax.f32 %v1076, %v15
    %1081 = xla_tuple %v1080
    %s1082 = scalar_lea.vmem [#allocation32], 240
    %s1084 = ssub.s32 256, 1
    %1085 = vst [vmem:[%s1082] sm:%s1084] %v1080
    %s1086 = scalar_lea.vmem %s113, 24
    %v1087 = vlaneseq
    %v1088 = vshrl.u32 %v1087, 7
    %v1089 = vadd.s32 %v1088, 24
    %vm1090 = vcmp.lt.s32.totalorder %v1089, 49
    %v1091 = vsel %vm1090, %v894, %v15
    %v1092 = vlaneseq
    %v1093 = vand.u32 %v1092, 127
    %v1094 = vadd.s32 %v1093, 1024
    %vm1095 = vcmp.lt.s32.totalorder %v1094, 1056
    %v1096 = vsel %vm1095, %v1091, %v15
    %v1097 = vlaneseq
    %v1098 = vand.u32 %v1097, 127
    %vm1099 = vcmp.lt.s32.totalorder %v1098, 64
    %v1100 = vsel %vm1099, %v1096, %v15
    %1101 = vrot.lane.b32.xlu0 %v1100, 64
    %v1102 = vpop.permute.xlu0 %1101
    %s1103 = scalar_lea.vmem %s123, 24
    %v1104 = vlaneseq
    %v1105 = vshrl.u32 %v1104, 7
    %v1106 = vadd.s32 %v1105, 24
    %vm1107 = vcmp.lt.s32.totalorder %v1106, 49
    %v1108 = vsel %vm1107, %v900, %v16
    %v1109 = vlaneseq
    %v1110 = vand.u32 %v1109, 127
    %v1111 = vadd.s32 %v1110, 1024
    %vm1112 = vcmp.lt.s32.totalorder %v1111, 1056
    %v1113 = vsel %vm1112, %v1108, %v16
    %v1114 = vlaneseq
    %v1115 = vand.u32 %v1114, 127
    %vm1116 = vcmp.lt.s32.totalorder %v1115, 96
    %v1117 = vsel %vm1116, %v1113, %v16
    %1118 = vrot.lane.b32.xlu0 %v1117, 32
    %v1119 = vpop.permute.xlu0 %1118
    %s1120 = scalar_lea.vmem %s133, 24
    %v1121 = vlaneseq
    %v1122 = vshrl.u32 %v1121, 7
    %v1123 = vadd.s32 %v1122, 24
    %vm1124 = vcmp.lt.s32.totalorder %v1123, 49
    %v1125 = vsel %vm1124, %v906, %v17
    %v1126 = vlaneseq
    %v1127 = vand.u32 %v1126, 127
    %v1128 = vadd.s32 %v1127, 896
    %vm1129 = vcmp.lt.s32.totalorder %v1128, 928
    %v1130 = vsel %vm1129, %v1125, %v17
    %1131 = xla_tuple %v18, %v1130
    %1132 = xla_tuple %1131
    %v1133 = vmax.f32 %v18, %v1130
    %1134 = xla_tuple %v1133
    %1135 = xla_tuple %v1133, %v1119
    %1136 = xla_tuple %1135
    %v1137 = vmax.f32 %v1133, %v1119
    %1138 = xla_tuple %v1137
    %1139 = xla_tuple %v1137, %v1102
    %1140 = xla_tuple %1139
    %v1141 = vmax.f32 %v1137, %v1102
    %1142 = xla_tuple %v1141
    %s1143 = scalar_lea.vmem [#allocation32], 248
    %s1145 = ssub.s32 256, 1
    %1146 = vst [vmem:[%s1143] sm:%s1145] %v1141
    %s1147 = scalar_lea.vmem %s113, 32
    %s1148 = ssub.s32 0, 0
    %p1149 = scmp.lt.s32.totalorder %s1148, 0
    %s1150 = scalar_select %p1149, 0, 255
    %v1151 = vld [vmem:[%s1147] sm:%s1150]
    %s1152 = scalar_lea.vmem %s113, 32
    %s1153 = scalar_lea.vmem %s123, 32
    %s1154 = ssub.s32 0, 0
    %p1155 = scmp.lt.s32.totalorder %s1154, 0
    %s1156 = scalar_select %p1155, 0, 255
    %v1157 = vld [vmem:[%s1153] sm:%s1156]
    %s1158 = scalar_lea.vmem %s123, 32
    %s1159 = scalar_lea.vmem %s133, 32
    %s1160 = ssub.s32 0, 0
    %p1161 = scmp.lt.s32.totalorder %s1160, 0
    %s1162 = scalar_select %p1161, 0, 255
    %v1163 = vld [vmem:[%s1159] sm:%s1162]
    %s1164 = scalar_lea.vmem %s7, 224
    %v1165 = vld [vmem:[%s1164] sm:$0xff]
    %v1166 = vlaneseq
    %v1167 = vshrl.u32 %v1166, 7
    %v1168 = vadd.s32 %v1167, 32
    %vm1169 = vcmp.lt.s32.totalorder %v1168, 49
    %v1170 = vsel %vm1169, %v1165, %v18
    %1171 = xla_tuple %v1170, %v17
    %1172 = xla_tuple %1171
    %v1173 = vmax.f32 %v1170, %v17
    %1174 = xla_tuple %v1173
    %1175 = xla_tuple %v1173, %v16
    %1176 = xla_tuple %1175
    %v1177 = vmax.f32 %v1173, %v16
    %1178 = xla_tuple %v1177
    %1179 = xla_tuple %v1177, %v15
    %1180 = xla_tuple %1179
    %v1181 = vmax.f32 %v1177, %v15
    %1182 = xla_tuple %v1181
    %s1183 = scalar_lea.vmem [#allocation32], 256
    %s1185 = ssub.s32 256, 1
    %1186 = vst [vmem:[%s1183] sm:%s1185] %v1181
    %s1187 = scalar_lea.vmem %s113, 32
    %s1188 = scalar_lea.vmem %s123, 32
    %s1189 = scalar_lea.vmem %s133, 32
    %s1190 = scalar_lea.vmem %s7, 232
    %v1191 = vld [vmem:[%s1190] sm:$0xff]
    %v1192 = vlaneseq
    %v1193 = vshrl.u32 %v1192, 7
    %v1194 = vadd.s32 %v1193, 32
    %vm1195 = vcmp.lt.s32.totalorder %v1194, 49
    %v1196 = vsel %vm1195, %v1191, %v18
    %1197 = xla_tuple %v1196, %v17
    %1198 = xla_tuple %1197
    %v1199 = vmax.f32 %v1196, %v17
    %1200 = xla_tuple %v1199
    %1201 = xla_tuple %v1199, %v16
    %1202 = xla_tuple %1201
    %v1203 = vmax.f32 %v1199, %v16
    %1204 = xla_tuple %v1203
    %1205 = xla_tuple %v1203, %v15
    %1206 = xla_tuple %1205
    %v1207 = vmax.f32 %v1203, %v15
    %1208 = xla_tuple %v1207
    %s1209 = scalar_lea.vmem [#allocation32], 264
    %s1211 = ssub.s32 256, 1
    %1212 = vst [vmem:[%s1209] sm:%s1211] %v1207
    %s1213 = scalar_lea.vmem %s113, 32
    %s1214 = scalar_lea.vmem %s123, 32
    %s1215 = scalar_lea.vmem %s133, 32
    %s1216 = scalar_lea.vmem %s7, 240
    %v1217 = vld [vmem:[%s1216] sm:$0xff]
    %v1218 = vlaneseq
    %v1219 = vshrl.u32 %v1218, 7
    %v1220 = vadd.s32 %v1219, 32
    %vm1221 = vcmp.lt.s32.totalorder %v1220, 49
    %v1222 = vsel %vm1221, %v1217, %v18
    %1223 = xla_tuple %v1222, %v17
    %1224 = xla_tuple %1223
    %v1225 = vmax.f32 %v1222, %v17
    %1226 = xla_tuple %v1225
    %1227 = xla_tuple %v1225, %v16
    %1228 = xla_tuple %1227
    %v1229 = vmax.f32 %v1225, %v16
    %1230 = xla_tuple %v1229
    %1231 = xla_tuple %v1229, %v15
    %1232 = xla_tuple %1231
    %v1233 = vmax.f32 %v1229, %v15
    %1234 = xla_tuple %v1233
    %s1235 = scalar_lea.vmem [#allocation32], 272
    %s1237 = ssub.s32 256, 1
    %1238 = vst [vmem:[%s1235] sm:%s1237] %v1233
    %s1239 = scalar_lea.vmem %s113, 32
    %s1240 = scalar_lea.vmem %s123, 32
    %s1241 = scalar_lea.vmem %s133, 32
    %s1242 = scalar_lea.vmem %s7, 248
    %v1243 = vld [vmem:[%s1242] sm:$0xff]
    %v1244 = vlaneseq
    %v1245 = vshrl.u32 %v1244, 7
    %v1246 = vadd.s32 %v1245, 32
    %vm1247 = vcmp.lt.s32.totalorder %v1246, 49
    %v1248 = vsel %vm1247, %v1243, %v18
    %1249 = xla_tuple %v1248, %v17
    %1250 = xla_tuple %1249
    %v1251 = vmax.f32 %v1248, %v17
    %1252 = xla_tuple %v1251
    %1253 = xla_tuple %v1251, %v16
    %1254 = xla_tuple %1253
    %v1255 = vmax.f32 %v1251, %v16
    %1256 = xla_tuple %v1255
    %1257 = xla_tuple %v1255, %v15
    %1258 = xla_tuple %1257
    %v1259 = vmax.f32 %v1255, %v15
    %1260 = xla_tuple %v1259
    %s1261 = scalar_lea.vmem [#allocation32], 280
    %s1263 = ssub.s32 256, 1
    %1264 = vst [vmem:[%s1261] sm:%s1263] %v1259
    %s1265 = scalar_lea.vmem %s113, 32
    %s1266 = scalar_lea.vmem %s123, 32
    %s1267 = scalar_lea.vmem %s133, 32
    %s1268 = scalar_lea.vmem %s7, 256
    %v1269 = vld [vmem:[%s1268] sm:$0xff]
    %v1270 = vlaneseq
    %v1271 = vshrl.u32 %v1270, 7
    %v1272 = vadd.s32 %v1271, 32
    %vm1273 = vcmp.lt.s32.totalorder %v1272, 49
    %v1274 = vsel %vm1273, %v1269, %v18
    %1275 = xla_tuple %v1274, %v17
    %1276 = xla_tuple %1275
    %v1277 = vmax.f32 %v1274, %v17
    %1278 = xla_tuple %v1277
    %1279 = xla_tuple %v1277, %v16
    %1280 = xla_tuple %1279
    %v1281 = vmax.f32 %v1277, %v16
    %1282 = xla_tuple %v1281
    %1283 = xla_tuple %v1281, %v15
    %1284 = xla_tuple %1283
    %v1285 = vmax.f32 %v1281, %v15
    %1286 = xla_tuple %v1285
    %s1287 = scalar_lea.vmem [#allocation32], 288
    %s1289 = ssub.s32 256, 1
    %1290 = vst [vmem:[%s1287] sm:%s1289] %v1285
    %s1291 = scalar_lea.vmem %s113, 32
    %s1292 = scalar_lea.vmem %s123, 32
    %s1293 = scalar_lea.vmem %s133, 32
    %s1294 = scalar_lea.vmem %s7, 264
    %v1295 = vld [vmem:[%s1294] sm:$0xff]
    %v1296 = vlaneseq
    %v1297 = vshrl.u32 %v1296, 7
    %v1298 = vadd.s32 %v1297, 32
    %vm1299 = vcmp.lt.s32.totalorder %v1298, 49
    %v1300 = vsel %vm1299, %v1295, %v18
    %1301 = xla_tuple %v1300, %v17
    %1302 = xla_tuple %1301
    %v1303 = vmax.f32 %v1300, %v17
    %1304 = xla_tuple %v1303
    %1305 = xla_tuple %v1303, %v16
    %1306 = xla_tuple %1305
    %v1307 = vmax.f32 %v1303, %v16
    %1308 = xla_tuple %v1307
    %1309 = xla_tuple %v1307, %v15
    %1310 = xla_tuple %1309
    %v1311 = vmax.f32 %v1307, %v15
    %1312 = xla_tuple %v1311
    %s1313 = scalar_lea.vmem [#allocation32], 296
    %s1315 = ssub.s32 256, 1
    %1316 = vst [vmem:[%s1313] sm:%s1315] %v1311
    %s1317 = scalar_lea.vmem %s113, 32
    %s1318 = scalar_lea.vmem %s123, 32
    %s1319 = scalar_lea.vmem %s133, 32
    %s1320 = scalar_lea.vmem %s7, 272
    %v1321 = vld [vmem:[%s1320] sm:$0xff]
    %v1322 = vlaneseq
    %v1323 = vshrl.u32 %v1322, 7
    %v1324 = vadd.s32 %v1323, 32
    %vm1325 = vcmp.lt.s32.totalorder %v1324, 49
    %v1326 = vsel %vm1325, %v1321, %v18
    %1327 = xla_tuple %v1326, %v17
    %1328 = xla_tuple %1327
    %v1329 = vmax.f32 %v1326, %v17
    %1330 = xla_tuple %v1329
    %1331 = xla_tuple %v1329, %v16
    %1332 = xla_tuple %1331
    %v1333 = vmax.f32 %v1329, %v16
    %1334 = xla_tuple %v1333
    %1335 = xla_tuple %v1333, %v15
    %1336 = xla_tuple %1335
    %v1337 = vmax.f32 %v1333, %v15
    %1338 = xla_tuple %v1337
    %s1339 = scalar_lea.vmem [#allocation32], 304
    %s1341 = ssub.s32 256, 1
    %1342 = vst [vmem:[%s1339] sm:%s1341] %v1337
    %s1343 = scalar_lea.vmem %s113, 32
    %v1344 = vlaneseq
    %v1345 = vshrl.u32 %v1344, 7
    %v1346 = vadd.s32 %v1345, 32
    %vm1347 = vcmp.lt.s32.totalorder %v1346, 49
    %v1348 = vsel %vm1347, %v1151, %v15
    %v1349 = vlaneseq
    %v1350 = vand.u32 %v1349, 127
    %v1351 = vadd.s32 %v1350, 1024
    %vm1352 = vcmp.lt.s32.totalorder %v1351, 1056
    %v1353 = vsel %vm1352, %v1348, %v15
    %v1354 = vlaneseq
    %v1355 = vand.u32 %v1354, 127
    %vm1356 = vcmp.lt.s32.totalorder %v1355, 64
    %v1357 = vsel %vm1356, %v1353, %v15
    %1358 = vrot.lane.b32.xlu0 %v1357, 64
    %v1359 = vpop.permute.xlu0 %1358
    %s1360 = scalar_lea.vmem %s123, 32
    %v1361 = vlaneseq
    %v1362 = vshrl.u32 %v1361, 7
    %v1363 = vadd.s32 %v1362, 32
    %vm1364 = vcmp.lt.s32.totalorder %v1363, 49
    %v1365 = vsel %vm1364, %v1157, %v16
    %v1366 = vlaneseq
    %v1367 = vand.u32 %v1366, 127
    %v1368 = vadd.s32 %v1367, 1024
    %vm1369 = vcmp.lt.s32.totalorder %v1368, 1056
    %v1370 = vsel %vm1369, %v1365, %v16
    %v1371 = vlaneseq
    %v1372 = vand.u32 %v1371, 127
    %vm1373 = vcmp.lt.s32.totalorder %v1372, 96
    %v1374 = vsel %vm1373, %v1370, %v16
    %1375 = vrot.lane.b32.xlu0 %v1374, 32
    %v1376 = vpop.permute.xlu0 %1375
    %s1377 = scalar_lea.vmem %s133, 32
    %v1378 = vlaneseq
    %v1379 = vshrl.u32 %v1378, 7
    %v1380 = vadd.s32 %v1379, 32
    %vm1381 = vcmp.lt.s32.totalorder %v1380, 49
    %v1382 = vsel %vm1381, %v1163, %v17
    %v1383 = vlaneseq
    %v1384 = vand.u32 %v1383, 127
    %v1385 = vadd.s32 %v1384, 896
    %vm1386 = vcmp.lt.s32.totalorder %v1385, 928
    %v1387 = vsel %vm1386, %v1382, %v17
    %1388 = xla_tuple %v18, %v1387
    %1389 = xla_tuple %1388
    %v1390 = vmax.f32 %v18, %v1387
    %1391 = xla_tuple %v1390
    %1392 = xla_tuple %v1390, %v1376
    %1393 = xla_tuple %1392
    %v1394 = vmax.f32 %v1390, %v1376
    %1395 = xla_tuple %v1394
    %1396 = xla_tuple %v1394, %v1359
    %1397 = xla_tuple %1396
    %v1398 = vmax.f32 %v1394, %v1359
    %1399 = xla_tuple %v1398
    %s1400 = scalar_lea.vmem [#allocation32], 312
    %s1402 = ssub.s32 256, 1
    %1403 = vst [vmem:[%s1400] sm:%s1402] %v1398
    %s1404 = scalar_lea.vmem %s113, 40
    %s1405 = ssub.s32 0, 0
    %p1406 = scmp.lt.s32.totalorder %s1405, 0
    %s1407 = scalar_select %p1406, 0, 255
    %v1408 = vld [vmem:[%s1404] sm:%s1407]
    %s1409 = scalar_lea.vmem %s113, 40
    %s1410 = scalar_lea.vmem %s123, 40
    %s1411 = ssub.s32 0, 0
    %p1412 = scmp.lt.s32.totalorder %s1411, 0
    %s1413 = scalar_select %p1412, 0, 255
    %v1414 = vld [vmem:[%s1410] sm:%s1413]
    %s1415 = scalar_lea.vmem %s123, 40
    %s1416 = scalar_lea.vmem %s133, 40
    %s1417 = ssub.s32 0, 0
    %p1418 = scmp.lt.s32.totalorder %s1417, 0
    %s1419 = scalar_select %p1418, 0, 255
    %v1420 = vld [vmem:[%s1416] sm:%s1419]
    %s1421 = scalar_lea.vmem %s7, 280
    %v1422 = vld [vmem:[%s1421] sm:$0xff]
    %v1423 = vlaneseq
    %v1424 = vshrl.u32 %v1423, 7
    %v1425 = vadd.s32 %v1424, 40
    %vm1426 = vcmp.lt.s32.totalorder %v1425, 49
    %v1427 = vsel %vm1426, %v1422, %v18
    %1428 = xla_tuple %v1427, %v17
    %1429 = xla_tuple %1428
    %v1430 = vmax.f32 %v1427, %v17
    %1431 = xla_tuple %v1430
    %1432 = xla_tuple %v1430, %v16
    %1433 = xla_tuple %1432
    %v1434 = vmax.f32 %v1430, %v16
    %1435 = xla_tuple %v1434
    %1436 = xla_tuple %v1434, %v15
    %1437 = xla_tuple %1436
    %v1438 = vmax.f32 %v1434, %v15
    %1439 = xla_tuple %v1438
    %s1440 = scalar_lea.vmem [#allocation32], 320
    %s1442 = ssub.s32 256, 1
    %1443 = vst [vmem:[%s1440] sm:%s1442] %v1438
    %s1444 = scalar_lea.vmem %s113, 40
    %s1445 = scalar_lea.vmem %s123, 40
    %s1446 = scalar_lea.vmem %s133, 40
    %s1447 = scalar_lea.vmem %s7, 288
    %v1448 = vld [vmem:[%s1447] sm:$0xff]
    %v1449 = vlaneseq
    %v1450 = vshrl.u32 %v1449, 7
    %v1451 = vadd.s32 %v1450, 40
    %vm1452 = vcmp.lt.s32.totalorder %v1451, 49
    %v1453 = vsel %vm1452, %v1448, %v18
    %1454 = xla_tuple %v1453, %v17
    %1455 = xla_tuple %1454
    %v1456 = vmax.f32 %v1453, %v17
    %1457 = xla_tuple %v1456
    %1458 = xla_tuple %v1456, %v16
    %1459 = xla_tuple %1458
    %v1460 = vmax.f32 %v1456, %v16
    %1461 = xla_tuple %v1460
    %1462 = xla_tuple %v1460, %v15
    %1463 = xla_tuple %1462
    %v1464 = vmax.f32 %v1460, %v15
    %1465 = xla_tuple %v1464
    %s1466 = scalar_lea.vmem [#allocation32], 328
    %s1468 = ssub.s32 256, 1
    %1469 = vst [vmem:[%s1466] sm:%s1468] %v1464
    %s1470 = scalar_lea.vmem %s113, 40
    %s1471 = scalar_lea.vmem %s123, 40
    %s1472 = scalar_lea.vmem %s133, 40
    %s1473 = scalar_lea.vmem %s7, 296
    %v1474 = vld [vmem:[%s1473] sm:$0xff]
    %v1475 = vlaneseq
    %v1476 = vshrl.u32 %v1475, 7
    %v1477 = vadd.s32 %v1476, 40
    %vm1478 = vcmp.lt.s32.totalorder %v1477, 49
    %v1479 = vsel %vm1478, %v1474, %v18
    %1480 = xla_tuple %v1479, %v17
    %1481 = xla_tuple %1480
    %v1482 = vmax.f32 %v1479, %v17
    %1483 = xla_tuple %v1482
    %1484 = xla_tuple %v1482, %v16
    %1485 = xla_tuple %1484
    %v1486 = vmax.f32 %v1482, %v16
    %1487 = xla_tuple %v1486
    %1488 = xla_tuple %v1486, %v15
    %1489 = xla_tuple %1488
    %v1490 = vmax.f32 %v1486, %v15
    %1491 = xla_tuple %v1490
    %s1492 = scalar_lea.vmem [#allocation32], 336
    %s1494 = ssub.s32 256, 1
    %1495 = vst [vmem:[%s1492] sm:%s1494] %v1490
    %s1496 = scalar_lea.vmem %s113, 40
    %s1497 = scalar_lea.vmem %s123, 40
    %s1498 = scalar_lea.vmem %s133, 40
    %s1499 = scalar_lea.vmem %s7, 304
    %v1500 = vld [vmem:[%s1499] sm:$0xff]
    %v1501 = vlaneseq
    %v1502 = vshrl.u32 %v1501, 7
    %v1503 = vadd.s32 %v1502, 40
    %vm1504 = vcmp.lt.s32.totalorder %v1503, 49
    %v1505 = vsel %vm1504, %v1500, %v18
    %1506 = xla_tuple %v1505, %v17
    %1507 = xla_tuple %1506
    %v1508 = vmax.f32 %v1505, %v17
    %1509 = xla_tuple %v1508
    %1510 = xla_tuple %v1508, %v16
    %1511 = xla_tuple %1510
    %v1512 = vmax.f32 %v1508, %v16
    %1513 = xla_tuple %v1512
    %1514 = xla_tuple %v1512, %v15
    %1515 = xla_tuple %1514
    %v1516 = vmax.f32 %v1512, %v15
    %1517 = xla_tuple %v1516
    %s1518 = scalar_lea.vmem [#allocation32], 344
    %s1520 = ssub.s32 256, 1
    %1521 = vst [vmem:[%s1518] sm:%s1520] %v1516
    %s1522 = scalar_lea.vmem %s113, 40
    %s1523 = scalar_lea.vmem %s123, 40
    %s1524 = scalar_lea.vmem %s133, 40
    %s1525 = scalar_lea.vmem %s7, 312
    %v1526 = vld [vmem:[%s1525] sm:$0xff]
    %v1527 = vlaneseq
    %v1528 = vshrl.u32 %v1527, 7
    %v1529 = vadd.s32 %v1528, 40
    %vm1530 = vcmp.lt.s32.totalorder %v1529, 49
    %v1531 = vsel %vm1530, %v1526, %v18
    %1532 = xla_tuple %v1531, %v17
    %1533 = xla_tuple %1532
    %v1534 = vmax.f32 %v1531, %v17
    %1535 = xla_tuple %v1534
    %1536 = xla_tuple %v1534, %v16
    %1537 = xla_tuple %1536
    %v1538 = vmax.f32 %v1534, %v16
    %1539 = xla_tuple %v1538
    %1540 = xla_tuple %v1538, %v15
    %1541 = xla_tuple %1540
    %v1542 = vmax.f32 %v1538, %v15
    %1543 = xla_tuple %v1542
    %s1544 = scalar_lea.vmem [#allocation32], 352
    %s1546 = ssub.s32 256, 1
    %1547 = vst [vmem:[%s1544] sm:%s1546] %v1542
    %s1548 = scalar_lea.vmem %s113, 40
    %s1549 = scalar_lea.vmem %s123, 40
    %s1550 = scalar_lea.vmem %s133, 40
    %s1551 = scalar_lea.vmem %s7, 320
    %v1552 = vld [vmem:[%s1551] sm:$0xff]
    %v1553 = vlaneseq
    %v1554 = vshrl.u32 %v1553, 7
    %v1555 = vadd.s32 %v1554, 40
    %vm1556 = vcmp.lt.s32.totalorder %v1555, 49
    %v1557 = vsel %vm1556, %v1552, %v18
    %1558 = xla_tuple %v1557, %v17
    %1559 = xla_tuple %1558
    %v1560 = vmax.f32 %v1557, %v17
    %1561 = xla_tuple %v1560
    %1562 = xla_tuple %v1560, %v16
    %1563 = xla_tuple %1562
    %v1564 = vmax.f32 %v1560, %v16
    %1565 = xla_tuple %v1564
    %1566 = xla_tuple %v1564, %v15
    %1567 = xla_tuple %1566
    %v1568 = vmax.f32 %v1564, %v15
    %1569 = xla_tuple %v1568
    %s1570 = scalar_lea.vmem [#allocation32], 360
    %s1572 = ssub.s32 256, 1
    %1573 = vst [vmem:[%s1570] sm:%s1572] %v1568
    %s1574 = scalar_lea.vmem %s113, 40
    %s1575 = scalar_lea.vmem %s123, 40
    %s1576 = scalar_lea.vmem %s133, 40
    %s1577 = scalar_lea.vmem %s7, 328
    %v1578 = vld [vmem:[%s1577] sm:$0xff]
    %v1579 = vlaneseq
    %v1580 = vshrl.u32 %v1579, 7
    %v1581 = vadd.s32 %v1580, 40
    %vm1582 = vcmp.lt.s32.totalorder %v1581, 49
    %v1583 = vsel %vm1582, %v1578, %v18
    %1584 = xla_tuple %v1583, %v17
    %1585 = xla_tuple %1584
    %v1586 = vmax.f32 %v1583, %v17
    %1587 = xla_tuple %v1586
    %1588 = xla_tuple %v1586, %v16
    %1589 = xla_tuple %1588
    %v1590 = vmax.f32 %v1586, %v16
    %1591 = xla_tuple %v1590
    %1592 = xla_tuple %v1590, %v15
    %1593 = xla_tuple %1592
    %v1594 = vmax.f32 %v1590, %v15
    %1595 = xla_tuple %v1594
    %s1596 = scalar_lea.vmem [#allocation32], 368
    %s1598 = ssub.s32 256, 1
    %1599 = vst [vmem:[%s1596] sm:%s1598] %v1594
    %s1600 = scalar_lea.vmem %s113, 40
    %v1601 = vlaneseq
    %v1602 = vshrl.u32 %v1601, 7
    %v1603 = vadd.s32 %v1602, 40
    %vm1604 = vcmp.lt.s32.totalorder %v1603, 49
    %v1605 = vsel %vm1604, %v1408, %v15
    %v1606 = vlaneseq
    %v1607 = vand.u32 %v1606, 127
    %v1608 = vadd.s32 %v1607, 1024
    %vm1609 = vcmp.lt.s32.totalorder %v1608, 1056
    %v1610 = vsel %vm1609, %v1605, %v15
    %v1611 = vlaneseq
    %v1612 = vand.u32 %v1611, 127
    %vm1613 = vcmp.lt.s32.totalorder %v1612, 64
    %v1614 = vsel %vm1613, %v1610, %v15
    %1615 = vrot.lane.b32.xlu0 %v1614, 64
    %v1616 = vpop.permute.xlu0 %1615
    %s1617 = scalar_lea.vmem %s123, 40
    %v1618 = vlaneseq
    %v1619 = vshrl.u32 %v1618, 7
    %v1620 = vadd.s32 %v1619, 40
    %vm1621 = vcmp.lt.s32.totalorder %v1620, 49
    %v1622 = vsel %vm1621, %v1414, %v16
    %v1623 = vlaneseq
    %v1624 = vand.u32 %v1623, 127
    %v1625 = vadd.s32 %v1624, 1024
    %vm1626 = vcmp.lt.s32.totalorder %v1625, 1056
    %v1627 = vsel %vm1626, %v1622, %v16
    %v1628 = vlaneseq
    %v1629 = vand.u32 %v1628, 127
    %vm1630 = vcmp.lt.s32.totalorder %v1629, 96
    %v1631 = vsel %vm1630, %v1627, %v16
    %1632 = vrot.lane.b32.xlu0 %v1631, 32
    %v1633 = vpop.permute.xlu0 %1632
    %s1634 = scalar_lea.vmem %s133, 40
    %v1635 = vlaneseq
    %v1636 = vshrl.u32 %v1635, 7
    %v1637 = vadd.s32 %v1636, 40
    %vm1638 = vcmp.lt.s32.totalorder %v1637, 49
    %v1639 = vsel %vm1638, %v1420, %v17
    %v1640 = vlaneseq
    %v1641 = vand.u32 %v1640, 127
    %v1642 = vadd.s32 %v1641, 896
    %vm1643 = vcmp.lt.s32.totalorder %v1642, 928
    %v1644 = vsel %vm1643, %v1639, %v17
    %1645 = xla_tuple %v18, %v1644
    %1646 = xla_tuple %1645
    %v1647 = vmax.f32 %v18, %v1644
    %1648 = xla_tuple %v1647
    %1649 = xla_tuple %v1647, %v1633
    %1650 = xla_tuple %1649
    %v1651 = vmax.f32 %v1647, %v1633
    %1652 = xla_tuple %v1651
    %1653 = xla_tuple %v1651, %v1616
    %1654 = xla_tuple %1653
    %v1655 = vmax.f32 %v1651, %v1616
    %1656 = xla_tuple %v1655
    %s1657 = scalar_lea.vmem [#allocation32], 376
    %s1659 = ssub.s32 256, 1
    %1660 = vst [vmem:[%s1657] sm:%s1659] %v1655
    %s1661 = scalar_lea.vmem %s113, 48
    %s1662 = ssub.s32 0, 0
    %p1663 = scmp.lt.s32.totalorder %s1662, 0
    %s1664 = scalar_select %p1663, 0, 255
    %v1665 = vld [vmem:[%s1661] sm:%s1664]
    %s1666 = scalar_lea.vmem %s113, 48
    %s1667 = scalar_lea.vmem %s123, 48
    %s1668 = ssub.s32 0, 0
    %p1669 = scmp.lt.s32.totalorder %s1668, 0
    %s1670 = scalar_select %p1669, 0, 255
    %v1671 = vld [vmem:[%s1667] sm:%s1670]
    %s1672 = scalar_lea.vmem %s123, 48
    %s1673 = scalar_lea.vmem %s133, 48
    %s1674 = ssub.s32 0, 0
    %p1675 = scmp.lt.s32.totalorder %s1674, 0
    %s1676 = scalar_select %p1675, 0, 255
    %v1677 = vld [vmem:[%s1673] sm:%s1676]
    %s1678 = scalar_lea.vmem %s7, 336
    %v1679 = vld [vmem:[%s1678] sm:$0xff]
    %v1680 = vlaneseq
    %v1681 = vshrl.u32 %v1680, 7
    %v1682 = vadd.s32 %v1681, 48
    %vm1683 = vcmp.lt.s32.totalorder %v1682, 49
    %v1684 = vsel %vm1683, %v1679, %v18
    %1685 = xla_tuple %v1684, %v17
    %1686 = xla_tuple %1685
    %v1687 = vmax.f32 %v1684, %v17
    %1688 = xla_tuple %v1687
    %1689 = xla_tuple %v1687, %v16
    %1690 = xla_tuple %1689
    %v1691 = vmax.f32 %v1687, %v16
    %1692 = xla_tuple %v1691
    %1693 = xla_tuple %v1691, %v15
    %1694 = xla_tuple %1693
    %v1695 = vmax.f32 %v1691, %v15
    %1696 = xla_tuple %v1695
    %s1697 = scalar_lea.vmem [#allocation32], 384
    %s1699 = ssub.s32 256, 1
    %1700 = vst [vmem:[%s1697] sm:%s1699] %v1695
    %s1701 = scalar_lea.vmem %s113, 48
    %s1702 = scalar_lea.vmem %s123, 48
    %s1703 = scalar_lea.vmem %s133, 48
    %s1704 = scalar_lea.vmem %s7, 344
    %v1705 = vld [vmem:[%s1704] sm:$0xff]
    %v1706 = vlaneseq
    %v1707 = vshrl.u32 %v1706, 7
    %v1708 = vadd.s32 %v1707, 48
    %vm1709 = vcmp.lt.s32.totalorder %v1708, 49
    %v1710 = vsel %vm1709, %v1705, %v18
    %1711 = xla_tuple %v1710, %v17
    %1712 = xla_tuple %1711
    %v1713 = vmax.f32 %v1710, %v17
    %1714 = xla_tuple %v1713
    %1715 = xla_tuple %v1713, %v16
    %1716 = xla_tuple %1715
    %v1717 = vmax.f32 %v1713, %v16
    %1718 = xla_tuple %v1717
    %1719 = xla_tuple %v1717, %v15
    %1720 = xla_tuple %1719
    %v1721 = vmax.f32 %v1717, %v15
    %1722 = xla_tuple %v1721
    %s1723 = scalar_lea.vmem [#allocation32], 392
    %s1725 = ssub.s32 256, 1
    %1726 = vst [vmem:[%s1723] sm:%s1725] %v1721
    %s1727 = scalar_lea.vmem %s113, 48
    %s1728 = scalar_lea.vmem %s123, 48
    %s1729 = scalar_lea.vmem %s133, 48
    %s1730 = scalar_lea.vmem %s7, 352
    %v1731 = vld [vmem:[%s1730] sm:$0xff]
    %v1732 = vlaneseq
    %v1733 = vshrl.u32 %v1732, 7
    %v1734 = vadd.s32 %v1733, 48
    %vm1735 = vcmp.lt.s32.totalorder %v1734, 49
    %v1736 = vsel %vm1735, %v1731, %v18
    %1737 = xla_tuple %v1736, %v17
    %1738 = xla_tuple %1737
    %v1739 = vmax.f32 %v1736, %v17
    %1740 = xla_tuple %v1739
    %1741 = xla_tuple %v1739, %v16
    %1742 = xla_tuple %1741
    %v1743 = vmax.f32 %v1739, %v16
    %1744 = xla_tuple %v1743
    %1745 = xla_tuple %v1743, %v15
    %1746 = xla_tuple %1745
    %v1747 = vmax.f32 %v1743, %v15
    %1748 = xla_tuple %v1747
    %s1749 = scalar_lea.vmem [#allocation32], 400
    %s1751 = ssub.s32 256, 1
    %1752 = vst [vmem:[%s1749] sm:%s1751] %v1747
    %s1753 = scalar_lea.vmem %s113, 48
    %s1754 = scalar_lea.vmem %s123, 48
    %s1755 = scalar_lea.vmem %s133, 48
    %s1756 = scalar_lea.vmem %s7, 360
    %v1757 = vld [vmem:[%s1756] sm:$0xff]
    %v1758 = vlaneseq
    %v1759 = vshrl.u32 %v1758, 7
    %v1760 = vadd.s32 %v1759, 48
    %vm1761 = vcmp.lt.s32.totalorder %v1760, 49
    %v1762 = vsel %vm1761, %v1757, %v18
    %1763 = xla_tuple %v1762, %v17
    %1764 = xla_tuple %1763
    %v1765 = vmax.f32 %v1762, %v17
    %1766 = xla_tuple %v1765
    %1767 = xla_tuple %v1765, %v16
    %1768 = xla_tuple %1767
    %v1769 = vmax.f32 %v1765, %v16
    %1770 = xla_tuple %v1769
    %1771 = xla_tuple %v1769, %v15
    %1772 = xla_tuple %1771
    %v1773 = vmax.f32 %v1769, %v15
    %1774 = xla_tuple %v1773
    %s1775 = scalar_lea.vmem [#allocation32], 408
    %s1777 = ssub.s32 256, 1
    %1778 = vst [vmem:[%s1775] sm:%s1777] %v1773
    %s1779 = scalar_lea.vmem %s113, 48
    %s1780 = scalar_lea.vmem %s123, 48
    %s1781 = scalar_lea.vmem %s133, 48
    %s1782 = scalar_lea.vmem %s7, 368
    %v1783 = vld [vmem:[%s1782] sm:$0xff]
    %v1784 = vlaneseq
    %v1785 = vshrl.u32 %v1784, 7
    %v1786 = vadd.s32 %v1785, 48
    %vm1787 = vcmp.lt.s32.totalorder %v1786, 49
    %v1788 = vsel %vm1787, %v1783, %v18
    %1789 = xla_tuple %v1788, %v17
    %1790 = xla_tuple %1789
    %v1791 = vmax.f32 %v1788, %v17
    %1792 = xla_tuple %v1791
    %1793 = xla_tuple %v1791, %v16
    %1794 = xla_tuple %1793
    %v1795 = vmax.f32 %v1791, %v16
    %1796 = xla_tuple %v1795
    %1797 = xla_tuple %v1795, %v15
    %1798 = xla_tuple %1797
    %v1799 = vmax.f32 %v1795, %v15
    %1800 = xla_tuple %v1799
    %s1801 = scalar_lea.vmem [#allocation32], 416
    %s1803 = ssub.s32 256, 1
    %1804 = vst [vmem:[%s1801] sm:%s1803] %v1799
    %s1805 = scalar_lea.vmem %s113, 48
    %s1806 = scalar_lea.vmem %s123, 48
    %s1807 = scalar_lea.vmem %s133, 48
    %s1808 = scalar_lea.vmem %s7, 376
    %v1809 = vld [vmem:[%s1808] sm:$0xff]
    %v1810 = vlaneseq
    %v1811 = vshrl.u32 %v1810, 7
    %v1812 = vadd.s32 %v1811, 48
    %vm1813 = vcmp.lt.s32.totalorder %v1812, 49
    %v1814 = vsel %vm1813, %v1809, %v18
    %1815 = xla_tuple %v1814, %v17
    %1816 = xla_tuple %1815
    %v1817 = vmax.f32 %v1814, %v17
    %1818 = xla_tuple %v1817
    %1819 = xla_tuple %v1817, %v16
    %1820 = xla_tuple %1819
    %v1821 = vmax.f32 %v1817, %v16
    %1822 = xla_tuple %v1821
    %1823 = xla_tuple %v1821, %v15
    %1824 = xla_tuple %1823
    %v1825 = vmax.f32 %v1821, %v15
    %1826 = xla_tuple %v1825
    %s1827 = scalar_lea.vmem [#allocation32], 424
    %s1829 = ssub.s32 256, 1
    %1830 = vst [vmem:[%s1827] sm:%s1829] %v1825
    %s1831 = scalar_lea.vmem %s113, 48
    %s1832 = scalar_lea.vmem %s123, 48
    %s1833 = scalar_lea.vmem %s133, 48
    %s1834 = scalar_lea.vmem %s7, 384
    %v1835 = vld [vmem:[%s1834] sm:$0xff]
    %v1836 = vlaneseq
    %v1837 = vshrl.u32 %v1836, 7
    %v1838 = vadd.s32 %v1837, 48
    %vm1839 = vcmp.lt.s32.totalorder %v1838, 49
    %v1840 = vsel %vm1839, %v1835, %v18
    %1841 = xla_tuple %v1840, %v17
    %1842 = xla_tuple %1841
    %v1843 = vmax.f32 %v1840, %v17
    %1844 = xla_tuple %v1843
    %1845 = xla_tuple %v1843, %v16
    %1846 = xla_tuple %1845
    %v1847 = vmax.f32 %v1843, %v16
    %1848 = xla_tuple %v1847
    %1849 = xla_tuple %v1847, %v15
    %1850 = xla_tuple %1849
    %v1851 = vmax.f32 %v1847, %v15
    %1852 = xla_tuple %v1851
    %s1853 = scalar_lea.vmem [#allocation32], 432
    %s1855 = ssub.s32 256, 1
    %1856 = vst [vmem:[%s1853] sm:%s1855] %v1851
    %s1857 = scalar_lea.vmem %s113, 48
    %v1858 = vlaneseq
    %v1859 = vshrl.u32 %v1858, 7
    %v1860 = vadd.s32 %v1859, 48
    %vm1861 = vcmp.lt.s32.totalorder %v1860, 49
    %v1862 = vsel %vm1861, %v1665, %v15
    %v1863 = vlaneseq
    %v1864 = vand.u32 %v1863, 127
    %v1865 = vadd.s32 %v1864, 1024
    %vm1866 = vcmp.lt.s32.totalorder %v1865, 1056
    %v1867 = vsel %vm1866, %v1862, %v15
    %v1868 = vlaneseq
    %v1869 = vand.u32 %v1868, 127
    %vm1870 = vcmp.lt.s32.totalorder %v1869, 64
    %v1871 = vsel %vm1870, %v1867, %v15
    %1872 = vrot.lane.b32.xlu0 %v1871, 64
    %v1873 = vpop.permute.xlu0 %1872
    %s1874 = scalar_lea.vmem %s123, 48
    %v1875 = vlaneseq
    %v1876 = vshrl.u32 %v1875, 7
    %v1877 = vadd.s32 %v1876, 48
    %vm1878 = vcmp.lt.s32.totalorder %v1877, 49
    %v1879 = vsel %vm1878, %v1671, %v16
    %v1880 = vlaneseq
    %v1881 = vand.u32 %v1880, 127
    %v1882 = vadd.s32 %v1881, 1024
    %vm1883 = vcmp.lt.s32.totalorder %v1882, 1056
    %v1884 = vsel %vm1883, %v1879, %v16
    %v1885 = vlaneseq
    %v1886 = vand.u32 %v1885, 127
    %vm1887 = vcmp.lt.s32.totalorder %v1886, 96
    %v1888 = vsel %vm1887, %v1884, %v16
    %1889 = vrot.lane.b32.xlu0 %v1888, 32
    %v1890 = vpop.permute.xlu0 %1889
    %s1891 = scalar_lea.vmem %s133, 48
    %v1892 = vlaneseq
    %v1893 = vshrl.u32 %v1892, 7
    %v1894 = vadd.s32 %v1893, 48
    %vm1895 = vcmp.lt.s32.totalorder %v1894, 49
    %v1896 = vsel %vm1895, %v1677, %v17
    %v1897 = vlaneseq
    %v1898 = vand.u32 %v1897, 127
    %v1899 = vadd.s32 %v1898, 896
    %vm1900 = vcmp.lt.s32.totalorder %v1899, 928
    %v1901 = vsel %vm1900, %v1896, %v17
    %1902 = xla_tuple %v18, %v1901
    %1903 = xla_tuple %1902
    %v1904 = vmax.f32 %v18, %v1901
    %1905 = xla_tuple %v1904
    %1906 = xla_tuple %v1904, %v1890
    %1907 = xla_tuple %1906
    %v1908 = vmax.f32 %v1904, %v1890
    %1909 = xla_tuple %v1908
    %1910 = xla_tuple %v1908, %v1873
    %1911 = xla_tuple %1910
    %v1912 = vmax.f32 %v1908, %v1873
    %1913 = xla_tuple %v1912
    %s1914 = scalar_lea.vmem [#allocation32], 440
    %s1916 = ssub.s32 256, 1
    %1917 = vst [vmem:[%s1914] sm:%s1916] %v1912
    %s1918 = ssub.s32 0, 0
    %p1919 = scmp.lt.s32.totalorder %s1918, 0
    %s1920 = scalar_select %p1919, 0, 255
    %s1921 = sand.u32 1, %s1920
    %s1922 = sand.u32 1, %s1921
    %v1923 = vld [vmem:[%s143] sm:%s1922]
    %v1924 = vlaneseq
    %v1925 = vshrl.u32 %v1924, 7
    %v1926 = vadd.s32 %v1925, 8
    %vm1927 = vcmp.lt.s32.totalorder %v1926, 9
    %v1928 = vsel %vm1927, %v1923, %v19
    %v1929 = vlaneseq
    %v1930 = vand.u32 %v1929, 127
    %vm1932 = vcmp.lt.s32.totalorder %v1930, 1056
    %v1933 = vsel %vm1932, %v1928, %v19
    %vm1934 = vcmask 1046528
    %v1935 = vsel %vm1934, %v1933, %v19
    %v1936 = vrot.slane %v1935, 7
    %v1937 = vld [vmem:[%s9] sm:$0x1]
    %v1938 = vlaneseq
    %v1939 = vshrl.u32 %v1938, 7
    %vm1941 = vcmp.lt.s32.totalorder %v1939, 1
    %v1942 = vsel %vm1941, %v1937, %v20
    %v1943 = vlaneseq
    %v1944 = vand.u32 %v1943, 127
    %vm1946 = vcmp.lt.s32.totalorder %v1944, 1056
    %v1947 = vsel %vm1946, %v1942, %v20
    %1948 = xla_tuple %v1947, %v1936
    %1949 = xla_tuple %1948
    %v1950 = vmax.f32 %v1947, %v1936
    %1951 = xla_tuple %v1950
    %s1953 = ssub.s32 4, 1
    %1954 = vst [vmem:[#allocation33] sm:%s1953] %v1950
    %s1955 = scalar_lea.vmem %s143, 1
    %s1956 = ssub.s32 0, 0
    %p1957 = scmp.lt.s32.totalorder %s1956, 0
    %s1958 = scalar_select %p1957, 0, 255
    %s1959 = sand.u32 1, %s1958
    %s1960 = sand.u32 1, %s1959
    %v1961 = vld [vmem:[%s1955] sm:%s1960]
    %s1962 = scalar_lea.vmem %s143, 1
    %v1963 = vlaneseq
    %v1964 = vshrl.u32 %v1963, 7
    %v1965 = vadd.s32 %v1964, 8
    %vm1966 = vcmp.lt.s32.totalorder %v1965, 9
    %v1967 = vsel %vm1966, %v1961, %v19
    %v1968 = vlaneseq
    %v1969 = vand.u32 %v1968, 127
    %v1970 = vadd.s32 %v1969, 128
    %vm1971 = vcmp.lt.s32.totalorder %v1970, 1056
    %v1972 = vsel %vm1971, %v1967, %v19
    %vm1973 = vcmask 1046528
    %v1974 = vsel %vm1973, %v1972, %v19
    %v1975 = vrot.slane %v1974, 7
    %s1976 = scalar_lea.vmem %s9, 1
    %v1977 = vld [vmem:[%s1976] sm:$0x1]
    %v1978 = vlaneseq
    %v1979 = vshrl.u32 %v1978, 7
    %vm1981 = vcmp.lt.s32.totalorder %v1979, 1
    %v1982 = vsel %vm1981, %v1977, %v20
    %v1983 = vlaneseq
    %v1984 = vand.u32 %v1983, 127
    %v1985 = vadd.s32 %v1984, 128
    %vm1986 = vcmp.lt.s32.totalorder %v1985, 1056
    %v1987 = vsel %vm1986, %v1982, %v20
    %1988 = xla_tuple %v1987, %v1975
    %1989 = xla_tuple %1988
    %v1990 = vmax.f32 %v1987, %v1975
    %1991 = xla_tuple %v1990
    %s1992 = scalar_lea.vmem [#allocation33], 2
    %s1994 = ssub.s32 4, 1
    %1995 = vst [vmem:[%s1992] sm:%s1994] %v1990
    %s1996 = scalar_lea.vmem %s143, 2
    %s1997 = ssub.s32 0, 0
    %p1998 = scmp.lt.s32.totalorder %s1997, 0
    %s1999 = scalar_select %p1998, 0, 255
    %s2000 = sand.u32 1, %s1999
    %s2001 = sand.u32 1, %s2000
    %v2002 = vld [vmem:[%s1996] sm:%s2001]
    %s2003 = scalar_lea.vmem %s143, 2
    %v2004 = vlaneseq
    %v2005 = vshrl.u32 %v2004, 7
    %v2006 = vadd.s32 %v2005, 8
    %vm2007 = vcmp.lt.s32.totalorder %v2006, 9
    %v2008 = vsel %vm2007, %v2002, %v19
    %v2009 = vlaneseq
    %v2010 = vand.u32 %v2009, 127
    %v2011 = vadd.s32 %v2010, 256
    %vm2012 = vcmp.lt.s32.totalorder %v2011, 1056
    %v2013 = vsel %vm2012, %v2008, %v19
    %vm2014 = vcmask 1046528
    %v2015 = vsel %vm2014, %v2013, %v19
    %v2016 = vrot.slane %v2015, 7
    %s2017 = scalar_lea.vmem %s9, 2
    %v2018 = vld [vmem:[%s2017] sm:$0x1]
    %v2019 = vlaneseq
    %v2020 = vshrl.u32 %v2019, 7
    %vm2022 = vcmp.lt.s32.totalorder %v2020, 1
    %v2023 = vsel %vm2022, %v2018, %v20
    %v2024 = vlaneseq
    %v2025 = vand.u32 %v2024, 127
    %v2026 = vadd.s32 %v2025, 256
    %vm2027 = vcmp.lt.s32.totalorder %v2026, 1056
    %v2028 = vsel %vm2027, %v2023, %v20
    %2029 = xla_tuple %v2028, %v2016
    %2030 = xla_tuple %2029
    %v2031 = vmax.f32 %v2028, %v2016
    %2032 = xla_tuple %v2031
    %s2033 = scalar_lea.vmem [#allocation33], 4
    %s2035 = ssub.s32 4, 1
    %2036 = vst [vmem:[%s2033] sm:%s2035] %v2031
    %s2037 = scalar_lea.vmem %s143, 3
    %s2038 = ssub.s32 0, 0
    %p2039 = scmp.lt.s32.totalorder %s2038, 0
    %s2040 = scalar_select %p2039, 0, 255
    %s2041 = sand.u32 1, %s2040
    %s2042 = sand.u32 1, %s2041
    %v2043 = vld [vmem:[%s2037] sm:%s2042]
    %s2044 = scalar_lea.vmem %s143, 3
    %v2045 = vlaneseq
    %v2046 = vshrl.u32 %v2045, 7
    %v2047 = vadd.s32 %v2046, 8
    %vm2048 = vcmp.lt.s32.totalorder %v2047, 9
    %v2049 = vsel %vm2048, %v2043, %v19
    %v2050 = vlaneseq
    %v2051 = vand.u32 %v2050, 127
    %v2052 = vadd.s32 %v2051, 384
    %vm2053 = vcmp.lt.s32.totalorder %v2052, 1056
    %v2054 = vsel %vm2053, %v2049, %v19
    %vm2055 = vcmask 1046528
    %v2056 = vsel %vm2055, %v2054, %v19
    %v2057 = vrot.slane %v2056, 7
    %s2058 = scalar_lea.vmem %s9, 3
    %v2059 = vld [vmem:[%s2058] sm:$0x1]
    %v2060 = vlaneseq
    %v2061 = vshrl.u32 %v2060, 7
    %vm2063 = vcmp.lt.s32.totalorder %v2061, 1
    %v2064 = vsel %vm2063, %v2059, %v20
    %v2065 = vlaneseq
    %v2066 = vand.u32 %v2065, 127
    %v2067 = vadd.s32 %v2066, 384
    %vm2068 = vcmp.lt.s32.totalorder %v2067, 1056
    %v2069 = vsel %vm2068, %v2064, %v20
    %2070 = xla_tuple %v2069, %v2057
    %2071 = xla_tuple %2070
    %v2072 = vmax.f32 %v2069, %v2057
    %2073 = xla_tuple %v2072
    %s2074 = scalar_lea.vmem [#allocation33], 6
    %s2076 = ssub.s32 4, 1
    %2077 = vst [vmem:[%s2074] sm:%s2076] %v2072
    %s2078 = scalar_lea.vmem %s143, 4
    %s2079 = ssub.s32 0, 0
    %p2080 = scmp.lt.s32.totalorder %s2079, 0
    %s2081 = scalar_select %p2080, 0, 255
    %s2082 = sand.u32 1, %s2081
    %s2083 = sand.u32 1, %s2082
    %v2084 = vld [vmem:[%s2078] sm:%s2083]
    %s2085 = scalar_lea.vmem %s143, 4
    %v2086 = vlaneseq
    %v2087 = vshrl.u32 %v2086, 7
    %v2088 = vadd.s32 %v2087, 8
    %vm2089 = vcmp.lt.s32.totalorder %v2088, 9
    %v2090 = vsel %vm2089, %v2084, %v19
    %v2091 = vlaneseq
    %v2092 = vand.u32 %v2091, 127
    %v2093 = vadd.s32 %v2092, 512
    %vm2094 = vcmp.lt.s32.totalorder %v2093, 1056
    %v2095 = vsel %vm2094, %v2090, %v19
    %vm2096 = vcmask 1046528
    %v2097 = vsel %vm2096, %v2095, %v19
    %v2098 = vrot.slane %v2097, 7
    %s2099 = scalar_lea.vmem %s9, 4
    %v2100 = vld [vmem:[%s2099] sm:$0x1]
    %v2101 = vlaneseq
    %v2102 = vshrl.u32 %v2101, 7
    %vm2104 = vcmp.lt.s32.totalorder %v2102, 1
    %v2105 = vsel %vm2104, %v2100, %v20
    %v2106 = vlaneseq
    %v2107 = vand.u32 %v2106, 127
    %v2108 = vadd.s32 %v2107, 512
    %vm2109 = vcmp.lt.s32.totalorder %v2108, 1056
    %v2110 = vsel %vm2109, %v2105, %v20
    %2111 = xla_tuple %v2110, %v2098
    %2112 = xla_tuple %2111
    %v2113 = vmax.f32 %v2110, %v2098
    %2114 = xla_tuple %v2113
    %s2115 = scalar_lea.vmem [#allocation33], 8
    %s2117 = ssub.s32 4, 1
    %2118 = vst [vmem:[%s2115] sm:%s2117] %v2113
    %s2119 = scalar_lea.vmem %s143, 5
    %s2120 = ssub.s32 0, 0
    %p2121 = scmp.lt.s32.totalorder %s2120, 0
    %s2122 = scalar_select %p2121, 0, 255
    %s2123 = sand.u32 1, %s2122
    %s2124 = sand.u32 1, %s2123
    %v2125 = vld [vmem:[%s2119] sm:%s2124]
    %s2126 = scalar_lea.vmem %s143, 5
    %v2127 = vlaneseq
    %v2128 = vshrl.u32 %v2127, 7
    %v2129 = vadd.s32 %v2128, 8
    %vm2130 = vcmp.lt.s32.totalorder %v2129, 9
    %v2131 = vsel %vm2130, %v2125, %v19
    %v2132 = vlaneseq
    %v2133 = vand.u32 %v2132, 127
    %v2134 = vadd.s32 %v2133, 640
    %vm2135 = vcmp.lt.s32.totalorder %v2134, 1056
    %v2136 = vsel %vm2135, %v2131, %v19
    %vm2137 = vcmask 1046528
    %v2138 = vsel %vm2137, %v2136, %v19
    %v2139 = vrot.slane %v2138, 7
    %s2140 = scalar_lea.vmem %s9, 5
    %v2141 = vld [vmem:[%s2140] sm:$0x1]
    %v2142 = vlaneseq
    %v2143 = vshrl.u32 %v2142, 7
    %vm2145 = vcmp.lt.s32.totalorder %v2143, 1
    %v2146 = vsel %vm2145, %v2141, %v20
    %v2147 = vlaneseq
    %v2148 = vand.u32 %v2147, 127
    %v2149 = vadd.s32 %v2148, 640
    %vm2150 = vcmp.lt.s32.totalorder %v2149, 1056
    %v2151 = vsel %vm2150, %v2146, %v20
    %2152 = xla_tuple %v2151, %v2139
    %2153 = xla_tuple %2152
    %v2154 = vmax.f32 %v2151, %v2139
    %2155 = xla_tuple %v2154
    %s2156 = scalar_lea.vmem [#allocation33], 10
    %s2158 = ssub.s32 4, 1
    %2159 = vst [vmem:[%s2156] sm:%s2158] %v2154
    %s2160 = scalar_lea.vmem %s143, 6
    %s2161 = ssub.s32 0, 0
    %p2162 = scmp.lt.s32.totalorder %s2161, 0
    %s2163 = scalar_select %p2162, 0, 255
    %s2164 = sand.u32 1, %s2163
    %s2165 = sand.u32 1, %s2164
    %v2166 = vld [vmem:[%s2160] sm:%s2165]
    %s2167 = scalar_lea.vmem %s143, 6
    %v2168 = vlaneseq
    %v2169 = vshrl.u32 %v2168, 7
    %v2170 = vadd.s32 %v2169, 8
    %vm2171 = vcmp.lt.s32.totalorder %v2170, 9
    %v2172 = vsel %vm2171, %v2166, %v19
    %v2173 = vlaneseq
    %v2174 = vand.u32 %v2173, 127
    %v2175 = vadd.s32 %v2174, 768
    %vm2176 = vcmp.lt.s32.totalorder %v2175, 1056
    %v2177 = vsel %vm2176, %v2172, %v19
    %vm2178 = vcmask 1046528
    %v2179 = vsel %vm2178, %v2177, %v19
    %v2180 = vrot.slane %v2179, 7
    %s2181 = scalar_lea.vmem %s9, 6
    %v2182 = vld [vmem:[%s2181] sm:$0x1]
    %v2183 = vlaneseq
    %v2184 = vshrl.u32 %v2183, 7
    %vm2186 = vcmp.lt.s32.totalorder %v2184, 1
    %v2187 = vsel %vm2186, %v2182, %v20
    %v2188 = vlaneseq
    %v2189 = vand.u32 %v2188, 127
    %v2190 = vadd.s32 %v2189, 768
    %vm2191 = vcmp.lt.s32.totalorder %v2190, 1056
    %v2192 = vsel %vm2191, %v2187, %v20
    %2193 = xla_tuple %v2192, %v2180
    %2194 = xla_tuple %2193
    %v2195 = vmax.f32 %v2192, %v2180
    %2196 = xla_tuple %v2195
    %s2197 = scalar_lea.vmem [#allocation33], 12
    %s2199 = ssub.s32 4, 1
    %2200 = vst [vmem:[%s2197] sm:%s2199] %v2195
    %s2201 = scalar_lea.vmem %s143, 7
    %s2202 = ssub.s32 0, 0
    %p2203 = scmp.lt.s32.totalorder %s2202, 0
    %s2204 = scalar_select %p2203, 0, 255
    %s2205 = sand.u32 1, %s2204
    %s2206 = sand.u32 1, %s2205
    %v2207 = vld [vmem:[%s2201] sm:%s2206]
    %s2208 = scalar_lea.vmem %s143, 7
    %v2209 = vlaneseq
    %v2210 = vshrl.u32 %v2209, 7
    %v2211 = vadd.s32 %v2210, 8
    %vm2212 = vcmp.lt.s32.totalorder %v2211, 9
    %v2213 = vsel %vm2212, %v2207, %v19
    %v2214 = vlaneseq
    %v2215 = vand.u32 %v2214, 127
    %v2216 = vadd.s32 %v2215, 896
    %vm2217 = vcmp.lt.s32.totalorder %v2216, 1056
    %v2218 = vsel %vm2217, %v2213, %v19
    %vm2219 = vcmask 1046528
    %v2220 = vsel %vm2219, %v2218, %v19
    %v2221 = vrot.slane %v2220, 7
    %s2222 = scalar_lea.vmem %s9, 7
    %v2223 = vld [vmem:[%s2222] sm:$0x1]
    %v2224 = vlaneseq
    %v2225 = vshrl.u32 %v2224, 7
    %vm2227 = vcmp.lt.s32.totalorder %v2225, 1
    %v2228 = vsel %vm2227, %v2223, %v20
    %v2229 = vlaneseq
    %v2230 = vand.u32 %v2229, 127
    %v2231 = vadd.s32 %v2230, 896
    %vm2232 = vcmp.lt.s32.totalorder %v2231, 1056
    %v2233 = vsel %vm2232, %v2228, %v20
    %2234 = xla_tuple %v2233, %v2221
    %2235 = xla_tuple %2234
    %v2236 = vmax.f32 %v2233, %v2221
    %2237 = xla_tuple %v2236
    %s2238 = scalar_lea.vmem [#allocation33], 14
    %s2240 = ssub.s32 4, 1
    %2241 = vst [vmem:[%s2238] sm:%s2240] %v2236
    %s2242 = scalar_lea.vmem %s143, 8
    %s2243 = ssub.s32 0, 0
    %p2244 = scmp.lt.s32.totalorder %s2243, 0
    %s2245 = scalar_select %p2244, 0, 255
    %s2246 = sand.u32 1, %s2245
    %s2247 = sand.u32 1, %s2246
    %v2248 = vld [vmem:[%s2242] sm:%s2247]
    %s2249 = scalar_lea.vmem %s143, 8
    %v2250 = vlaneseq
    %v2251 = vshrl.u32 %v2250, 7
    %v2252 = vadd.s32 %v2251, 8
    %vm2253 = vcmp.lt.s32.totalorder %v2252, 9
    %v2254 = vsel %vm2253, %v2248, %v19
    %v2255 = vlaneseq
    %v2256 = vand.u32 %v2255, 127
    %v2257 = vadd.s32 %v2256, 1024
    %vm2258 = vcmp.lt.s32.totalorder %v2257, 1056
    %v2259 = vsel %vm2258, %v2254, %v19
    %vm2260 = vcmask 1046528
    %v2261 = vsel %vm2260, %v2259, %v19
    %v2262 = vrot.slane %v2261, 7
    %s2263 = scalar_lea.vmem %s9, 8
    %v2264 = vld [vmem:[%s2263] sm:$0x1]
    %v2265 = vlaneseq
    %v2266 = vshrl.u32 %v2265, 7
    %vm2268 = vcmp.lt.s32.totalorder %v2266, 1
    %v2269 = vsel %vm2268, %v2264, %v20
    %v2270 = vlaneseq
    %v2271 = vand.u32 %v2270, 127
    %v2272 = vadd.s32 %v2271, 1024
    %vm2273 = vcmp.lt.s32.totalorder %v2272, 1056
    %v2274 = vsel %vm2273, %v2269, %v20
    %2275 = xla_tuple %v2274, %v2262
    %2276 = xla_tuple %2275
    %v2277 = vmax.f32 %v2274, %v2262
    %2278 = xla_tuple %v2277
    %s2279 = scalar_lea.vmem [#allocation33], 16
    %s2281 = ssub.s32 4, 1
    %2282 = vst [vmem:[%s2279] sm:%s2281] %v2277
    %v2283 = vld [vmem:[%s0] sm:$0xff]
    %v2284 = vld [vmem:[%s0 + $0x8] sm:$0xff]
    %v2285 = vld [vmem:[%s0 + $0x10] sm:$0xff]
    %v2286 = vld [vmem:[%s0 + $0x18] sm:$0xff]
    %v2287 = vld [vmem:[%s0 + $0x20] sm:$0xff]
    %v2288 = vld [vmem:[%s0 + $0x28] sm:$0xff]
    %v2289 = vld [vmem:[%s0 + $0x30] sm:$0xff]
    %v2290 = vld [vmem:[%s0 + $0x38] sm:$0xff]
    %v2291 = vld [vmem:[%s0 + $0x40] sm:$0xff]
    %v2292 = vld [vmem:[%s0 + $0x48] sm:$0xff]
    %v2293 = vld [vmem:[%s0 + $0x50] sm:$0xff]
    %v2294 = vld [vmem:[%s0 + $0x58] sm:$0xff]
    %v2295 = vld [vmem:[%s0 + $0x60] sm:$0xff]
    %v2296 = vld [vmem:[%s0 + $0x68] sm:$0xff]
    %v2297 = vld [vmem:[%s0 + $0x70] sm:$0xff]
    %v2298 = vld [vmem:[%s0 + $0x78] sm:$0xff]
    %v2299 = vld [vmem:[%s0 + $0x80] sm:$0xff]
    %v2300 = vld [vmem:[%s0 + $0x88] sm:$0xff]
    %v2301 = vld [vmem:[%s0 + $0x90] sm:$0xff]
    %v2302 = vld [vmem:[%s0 + $0x98] sm:$0xff]
    %v2303 = vld [vmem:[%s0 + $0xa0] sm:$0xff]
    %v2304 = vld [vmem:[%s0 + $0xa8] sm:$0xff]
    %v2305 = vld [vmem:[%s0 + $0xb0] sm:$0xff]
    %v2306 = vld [vmem:[%s0 + $0xb8] sm:$0xff]
    %v2307 = vld [vmem:[%s0 + $0xc0] sm:$0xff]
    %v2308 = vld [vmem:[%s0 + $0xc8] sm:$0xff]
    %v2309 = vld [vmem:[%s0 + $0xd0] sm:$0xff]
    %v2310 = vld [vmem:[%s0 + $0xd8] sm:$0xff]
    %v2311 = vld [vmem:[%s0 + $0xe0] sm:$0xff]
    %v2312 = vld [vmem:[%s0 + $0xe8] sm:$0xff]
    %v2313 = vld [vmem:[%s0 + $0xf0] sm:$0xff]
    %v2314 = vld [vmem:[%s0 + $0xf8] sm:$0xff]
    %v2315 = vld [vmem:[%s0 + $0x100] sm:$0xff]
    %v2316 = vld [vmem:[%s0 + $0x108] sm:$0xff]
    %v2317 = vld [vmem:[%s0 + $0x110] sm:$0xff]
    %v2318 = vld [vmem:[%s0 + $0x118] sm:$0xff]
    %v2319 = vld [vmem:[%s0 + $0x120] sm:$0xff]
    %v2320 = vld [vmem:[%s0 + $0x128] sm:$0xff]
    %v2321 = vld [vmem:[%s0 + $0x130] sm:$0xff]
    %v2322 = vld [vmem:[%s0 + $0x138] sm:$0xff]
    %v2323 = vld [vmem:[%s0 + $0x140] sm:$0xff]
    %v2324 = vld [vmem:[%s0 + $0x148] sm:$0xff]
    %v2325 = vld [vmem:[%s0 + $0x150] sm:$0xff]
    %v2326 = vld [vmem:[%s0 + $0x158] sm:$0xff]
    %v2327 = vld [vmem:[%s0 + $0x160] sm:$0xff]
    %v2328 = vld [vmem:[%s0 + $0x168] sm:$0xff]
    %v2329 = vld [vmem:[%s0 + $0x170] sm:$0xff]
    %v2330 = vld [vmem:[%s0 + $0x178] sm:$0xff]
    %v2331 = vld [vmem:[%s0 + $0x180] sm:$0xff]
    %v2332 = vld [vmem:[%s0 + $0x188] sm:$0xff]
    %v2333 = vld [vmem:[%s0 + $0x190] sm:$0xff]
    %v2334 = vld [vmem:[%s0 + $0x198] sm:$0xff]
    %v2335 = vld [vmem:[%s0 + $0x1a0] sm:$0xff]
    %v2336 = vld [vmem:[%s0 + $0x1a8] sm:$0xff]
    %v2337 = vld [vmem:[%s0 + $0x1b0] sm:$0x1]
    %v2338 = vld [vmem:[%s0 + $0x1b8] sm:$0x1]
    %v2339 = vld [vmem:[%s0 + $0x1c0] sm:$0x1]
    %v2340 = vld [vmem:[%s0 + $0x1c8] sm:$0x1]
    %v2341 = vld [vmem:[%s0 + $0x1d0] sm:$0x1]
    %v2342 = vld [vmem:[%s0 + $0x1d8] sm:$0x1]
    %v2343 = vld [vmem:[%s0 + $0x1e0] sm:$0x1]
    %v2344 = vld [vmem:[%s0 + $0x1e8] sm:$0x1]
    %v2345 = vld [vmem:[%s0 + $0x1f0] sm:$0x1]
    %v2346 = vld [vmem:[%s1] sm:$0xff]
    %v2347 = vld [vmem:[%s1 + $0x8] sm:$0xff]
    %v2348 = vld [vmem:[%s1 + $0x10] sm:$0xff]
    %v2349 = vld [vmem:[%s1 + $0x18] sm:$0xff]
    %v2350 = vld [vmem:[%s1 + $0x20] sm:$0xff]
    %v2351 = vld [vmem:[%s1 + $0x28] sm:$0xff]
    %v2352 = vld [vmem:[%s1 + $0x30] sm:$0xff]
    %v2353 = vld [vmem:[%s1 + $0x38] sm:$0xff]
    %v2354 = vld [vmem:[%s1 + $0x40] sm:$0xff]
    %v2355 = vld [vmem:[%s1 + $0x48] sm:$0xff]
    %v2356 = vld [vmem:[%s1 + $0x50] sm:$0xff]
    %v2357 = vld [vmem:[%s1 + $0x58] sm:$0xff]
    %v2358 = vld [vmem:[%s1 + $0x60] sm:$0xff]
    %v2359 = vld [vmem:[%s1 + $0x68] sm:$0xff]
    %v2360 = vld [vmem:[%s1 + $0x70] sm:$0xff]
    %v2361 = vld [vmem:[%s1 + $0x78] sm:$0xff]
    %v2362 = vld [vmem:[%s1 + $0x80] sm:$0xff]
    %v2363 = vld [vmem:[%s1 + $0x88] sm:$0xff]
    %v2364 = vld [vmem:[%s1 + $0x90] sm:$0xff]
    %v2365 = vld [vmem:[%s1 + $0x98] sm:$0xff]
    %v2366 = vld [vmem:[%s1 + $0xa0] sm:$0xff]
    %v2367 = vld [vmem:[%s1 + $0xa8] sm:$0xff]
    %v2368 = vld [vmem:[%s1 + $0xb0] sm:$0xff]
    %v2369 = vld [vmem:[%s1 + $0xb8] sm:$0xff]
    %v2370 = vld [vmem:[%s1 + $0xc0] sm:$0xff]
    %v2371 = vld [vmem:[%s1 + $0xc8] sm:$0xff]
    %v2372 = vld [vmem:[%s1 + $0xd0] sm:$0xff]
    %v2373 = vld [vmem:[%s1 + $0xd8] sm:$0xff]
    %v2374 = vld [vmem:[%s1 + $0xe0] sm:$0xff]
    %v2375 = vld [vmem:[%s1 + $0xe8] sm:$0xff]
    %v2376 = vld [vmem:[%s1 + $0xf0] sm:$0xff]
    %v2377 = vld [vmem:[%s1 + $0xf8] sm:$0xff]
    %v2378 = vld [vmem:[%s1 + $0x100] sm:$0xff]
    %v2379 = vld [vmem:[%s1 + $0x108] sm:$0xff]
    %v2380 = vld [vmem:[%s1 + $0x110] sm:$0xff]
    %v2381 = vld [vmem:[%s1 + $0x118] sm:$0xff]
    %v2382 = vld [vmem:[%s1 + $0x120] sm:$0xff]
    %v2383 = vld [vmem:[%s1 + $0x128] sm:$0xff]
    %v2384 = vld [vmem:[%s1 + $0x130] sm:$0xff]
    %v2385 = vld [vmem:[%s1 + $0x138] sm:$0xff]
    %v2386 = vld [vmem:[%s1 + $0x140] sm:$0xff]
    %v2387 = vld [vmem:[%s1 + $0x148] sm:$0xff]
    %v2388 = vld [vmem:[%s1 + $0x150] sm:$0xff]
    %v2389 = vld [vmem:[%s1 + $0x158] sm:$0xff]
    %v2390 = vld [vmem:[%s1 + $0x160] sm:$0xff]
    %v2391 = vld [vmem:[%s1 + $0x168] sm:$0xff]
    %v2392 = vld [vmem:[%s1 + $0x170] sm:$0xff]
    %v2393 = vld [vmem:[%s1 + $0x178] sm:$0xff]
    %v2394 = vld [vmem:[%s1 + $0x180] sm:$0xff]
    %v2395 = vld [vmem:[%s1 + $0x188] sm:$0xff]
    %v2396 = vld [vmem:[%s1 + $0x190] sm:$0xff]
    %v2397 = vld [vmem:[%s1 + $0x198] sm:$0xff]
    %v2398 = vld [vmem:[%s1 + $0x1a0] sm:$0xff]
    %v2399 = vld [vmem:[%s1 + $0x1a8] sm:$0xff]
    %v2400 = vld [vmem:[%s1 + $0x1b0] sm:$0xff]
    %v2401 = vld [vmem:[%s1 + $0x1b8] sm:$0xff]
    %v2402 = vld [vmem:[%s1 + $0x1c0] sm:$0xff]
    %v2403 = vld [vmem:[%s1 + $0x1c8] sm:$0xff]
    %v2404 = vld [vmem:[%s1 + $0x1d0] sm:$0xff]
    %v2405 = vld [vmem:[%s1 + $0x1d8] sm:$0xff]
    %v2406 = vld [vmem:[%s1 + $0x1e0] sm:$0xff]
    %v2407 = vld [vmem:[%s1 + $0x1e8] sm:$0xff]
    %v2408 = vld [vmem:[%s1 + $0x1f0] sm:$0xff]
    %v2409 = vld [vmem:[%s1 + $0x1f8] sm:$0xff]
    %v2410 = vld [vmem:[%s1 + $0x200] sm:$0xff]
    %v2411 = vld [vmem:[%s1 + $0x208] sm:$0xff]
    %v2412 = vld [vmem:[%s1 + $0x210] sm:$0xff]
    %v2413 = vld [vmem:[%s1 + $0x218] sm:$0xff]
    %v2414 = vld [vmem:[%s1 + $0x220] sm:$0xff]
    %v2415 = vld [vmem:[%s1 + $0x228] sm:$0xff]
    %v2416 = vld [vmem:[%s1 + $0x230] sm:$0xff]
    %v2417 = vld [vmem:[%s1 + $0x238] sm:$0xff]
    %v2418 = vld [vmem:[%s1 + $0x240] sm:$0xff]
    %v2419 = vld [vmem:[%s1 + $0x248] sm:$0xff]
    %v2420 = vld [vmem:[%s1 + $0x250] sm:$0xff]
    %v2421 = vld [vmem:[%s1 + $0x258] sm:$0xff]
    %v2422 = vld [vmem:[%s1 + $0x260] sm:$0xff]
    %v2423 = vld [vmem:[%s1 + $0x268] sm:$0xff]
    %v2424 = vld [vmem:[%s1 + $0x270] sm:$0xff]
    %v2425 = vld [vmem:[%s1 + $0x278] sm:$0xff]
    %v2426 = vld [vmem:[%s1 + $0x280] sm:$0xff]
    %v2427 = vld [vmem:[%s1 + $0x288] sm:$0xff]
    %v2428 = vld [vmem:[%s1 + $0x290] sm:$0xff]
    %v2429 = vld [vmem:[%s1 + $0x298] sm:$0xff]
    %v2430 = vld [vmem:[%s1 + $0x2a0] sm:$0xff]
    %v2431 = vld [vmem:[%s1 + $0x2a8] sm:$0xff]
    %v2432 = vld [vmem:[%s1 + $0x2b0] sm:$0xff]
    %v2433 = vld [vmem:[%s1 + $0x2b8] sm:$0xff]
    %v2434 = vld [vmem:[%s1 + $0x2c0] sm:$0xff]
    %v2435 = vld [vmem:[%s1 + $0x2c8] sm:$0xff]
    %v2436 = vld [vmem:[%s1 + $0x2d0] sm:$0xff]
    %v2437 = vld [vmem:[%s1 + $0x2d8] sm:$0xff]
    %v2438 = vld [vmem:[%s1 + $0x2e0] sm:$0xff]
    %v2439 = vld [vmem:[%s1 + $0x2e8] sm:$0xff]
    %v2440 = vld [vmem:[%s1 + $0x2f0] sm:$0xff]
    %v2441 = vld [vmem:[%s1 + $0x2f8] sm:$0xff]
    %v2442 = vld [vmem:[%s1 + $0x300] sm:$0xff]
    %v2443 = vld [vmem:[%s1 + $0x308] sm:$0xff]
    %v2444 = vld [vmem:[%s1 + $0x310] sm:$0xff]
    %v2445 = vld [vmem:[%s1 + $0x318] sm:$0xff]
    %v2446 = vld [vmem:[%s1 + $0x320] sm:$0xff]
    %v2447 = vld [vmem:[%s1 + $0x328] sm:$0xff]
    %v2448 = vld [vmem:[%s1 + $0x330] sm:$0xff]
    %v2449 = vld [vmem:[%s1 + $0x338] sm:$0xff]
    %v2450 = vld [vmem:[%s1 + $0x340] sm:$0xff]
    %v2451 = vld [vmem:[%s1 + $0x348] sm:$0xff]
    %v2452 = vld [vmem:[%s1 + $0x350] sm:$0xff]
    %v2453 = vld [vmem:[%s1 + $0x358] sm:$0xff]
    %v2454 = vld [vmem:[%s1 + $0x360] sm:$0xff]
    %v2455 = vld [vmem:[%s1 + $0x368] sm:$0xff]
    %v2456 = vld [vmem:[%s1 + $0x370] sm:$0xff]
    %v2457 = vld [vmem:[%s1 + $0x378] sm:$0xff]
    %v2458 = vld [vmem:[%s1 + $0x380] sm:$0xff]
    %v2459 = vld [vmem:[%s1 + $0x388] sm:$0xff]
    %v2460 = vld [vmem:[%s1 + $0x390] sm:$0xff]
    %v2461 = vld [vmem:[%s1 + $0x398] sm:$0xff]
    %v2462 = vld [vmem:[%s1 + $0x3a0] sm:$0xff]
    %v2463 = vld [vmem:[%s1 + $0x3a8] sm:$0xff]
    %v2464 = vld [vmem:[%s1 + $0x3b0] sm:$0xff]
    %v2465 = vld [vmem:[%s1 + $0x3b8] sm:$0xff]
    %v2466 = vld [vmem:[%s1 + $0x3c0] sm:$0xff]
    %v2467 = vld [vmem:[%s1 + $0x3c8] sm:$0xff]
    %v2468 = vld [vmem:[%s1 + $0x3d0] sm:$0xff]
    %v2469 = vld [vmem:[%s1 + $0x3d8] sm:$0xff]
    %v2470 = vld [vmem:[%s1 + $0x3e0] sm:$0xff]
    %v2471 = vld [vmem:[%s1 + $0x3e8] sm:$0xff]
    %v2472 = vld [vmem:[%s1 + $0x3f0] sm:$0xff]
    %v2473 = vld [vmem:[%s1 + $0x3f8] sm:$0xff]
    %v2474 = vld [vmem:[%s1 + $0x400] sm:$0xff]
    %v2475 = vld [vmem:[%s1 + $0x408] sm:$0xff]
    %v2476 = vld [vmem:[%s1 + $0x410] sm:$0xff]
    %v2477 = vld [vmem:[%s1 + $0x418] sm:$0xff]
    %v2478 = vld [vmem:[%s1 + $0x420] sm:$0xff]
    %v2479 = vld [vmem:[%s1 + $0x428] sm:$0xff]
    %v2480 = vld [vmem:[%s1 + $0x430] sm:$0xff]
    %v2481 = vld [vmem:[%s1 + $0x438] sm:$0xff]
    %v2482 = vld [vmem:[%s1 + $0x440] sm:$0xff]
    %v2483 = vld [vmem:[%s1 + $0x448] sm:$0xff]
    %v2484 = vld [vmem:[%s1 + $0x450] sm:$0xff]
    %v2485 = vld [vmem:[%s1 + $0x458] sm:$0xff]
    %v2486 = vld [vmem:[%s1 + $0x460] sm:$0xff]
    %v2487 = vld [vmem:[%s1 + $0x468] sm:$0xff]
    %v2488 = vld [vmem:[%s1 + $0x470] sm:$0xff]
    %v2489 = vld [vmem:[%s1 + $0x478] sm:$0xff]
    %2490 = vmatpush.msra.mxu0 %v2361
    %2491 = vmatpush.msra.mxu0 %v2360
    %2492 = vmatpush.msra.mxu0 %v2359
    %2493 = vmatpush.msra.mxu0 %v2358
    %2494 = vmatpush.msra.mxu0 %v2357
    %2495 = vmatpush.msra.mxu0 %v2356
    %2496 = vmatpush.msra.mxu0 %v2355
    %2497 = vmatpush.msra.mxu0 %v2354
    %2498 = vmatpush.msra.mxu0 %v2353
    %2499 = vmatpush.msra.mxu0 %v2352
    %2500 = vmatpush.msra.mxu0 %v2351
    %2501 = vmatpush.msra.mxu0 %v2350
    %2502 = vmatpush.msra.mxu0 %v2349
    %2503 = vmatpush.msra.mxu0 %v2348
    %2504 = vmatpush.msra.mxu0 %v2347
    %2505 = vmatpush.msra.mxu0 %v2346
    %2506 = vmatmul.f32.gmra.mxu0 %v2283
    %v2507 = vpop.f32.mrf.mxu0
    %v2508 = vadd.f32 0.0, %v2507
    %2509 = vmatmul.f32.gmra.mxu0 %v2292
    %v2510 = vpop.f32.mrf.mxu0
    %v2511 = vadd.f32 0.0, %v2510
    %2512 = vmatmul.f32.gmra.mxu0 %v2301
    %v2513 = vpop.f32.mrf.mxu0
    %v2514 = vadd.f32 0.0, %v2513
    %2515 = vmatmul.f32.gmra.mxu0 %v2310
    %v2516 = vpop.f32.mrf.mxu0
    %v2517 = vadd.f32 0.0, %v2516
    %2518 = vmatmul.f32.gmra.mxu0 %v2319
    %v2519 = vpop.f32.mrf.mxu0
    %v2520 = vadd.f32 0.0, %v2519
    %2521 = vmatmul.f32.gmra.mxu0 %v2328
    %v2522 = vpop.f32.mrf.mxu0
    %v2523 = vadd.f32 0.0, %v2522
    %2524 = vmatmul.f32.gmra.mxu0 %v2337
    %v2525 = vpop.f32.mrf.mxu0
    %v2526 = vadd.f32 0.0, %v2525
    %2527 = vdwg.mxu0
    %2528 = vmatpush.msra.mxu0 %v2377
    %2529 = vmatpush.msra.mxu0 %v2376
    %2530 = vmatpush.msra.mxu0 %v2375
    %2531 = vmatpush.msra.mxu0 %v2374
    %2532 = vmatpush.msra.mxu0 %v2373
    %2533 = vmatpush.msra.mxu0 %v2372
    %2534 = vmatpush.msra.mxu0 %v2371
    %2535 = vmatpush.msra.mxu0 %v2370
    %2536 = vmatpush.msra.mxu0 %v2369
    %2537 = vmatpush.msra.mxu0 %v2368
    %2538 = vmatpush.msra.mxu0 %v2367
    %2539 = vmatpush.msra.mxu0 %v2366
    %2540 = vmatpush.msra.mxu0 %v2365
    %2541 = vmatpush.msra.mxu0 %v2364
    %2542 = vmatpush.msra.mxu0 %v2363
    %2543 = vmatpush.msra.mxu0 %v2362
    %2544 = vmatmul.f32.gmra.mxu0 %v2284
    %v2545 = vpop.f32.mrf.mxu0
    %v2546 = vadd.f32 %v2508, %v2545
    %2547 = vmatmul.f32.gmra.mxu0 %v2293
    %v2548 = vpop.f32.mrf.mxu0
    %v2549 = vadd.f32 %v2511, %v2548
    %2550 = vmatmul.f32.gmra.mxu0 %v2302
    %v2551 = vpop.f32.mrf.mxu0
    %v2552 = vadd.f32 %v2514, %v2551
    %2553 = vmatmul.f32.gmra.mxu0 %v2311
    %v2554 = vpop.f32.mrf.mxu0
    %v2555 = vadd.f32 %v2517, %v2554
    %2556 = vmatmul.f32.gmra.mxu0 %v2320
    %v2557 = vpop.f32.mrf.mxu0
    %v2558 = vadd.f32 %v2520, %v2557
    %2559 = vmatmul.f32.gmra.mxu0 %v2329
    %v2560 = vpop.f32.mrf.mxu0
    %v2561 = vadd.f32 %v2523, %v2560
    %2562 = vmatmul.f32.gmra.mxu0 %v2338
    %v2563 = vpop.f32.mrf.mxu0
    %v2564 = vadd.f32 %v2526, %v2563
    %2565 = vdwg.mxu0
    %2566 = vmatpush.msra.mxu0 %v2393
    %2567 = vmatpush.msra.mxu0 %v2392
    %2568 = vmatpush.msra.mxu0 %v2391
    %2569 = vmatpush.msra.mxu0 %v2390
    %2570 = vmatpush.msra.mxu0 %v2389
    %2571 = vmatpush.msra.mxu0 %v2388
    %2572 = vmatpush.msra.mxu0 %v2387
    %2573 = vmatpush.msra.mxu0 %v2386
    %2574 = vmatpush.msra.mxu0 %v2385
    %2575 = vmatpush.msra.mxu0 %v2384
    %2576 = vmatpush.msra.mxu0 %v2383
    %2577 = vmatpush.msra.mxu0 %v2382
    %2578 = vmatpush.msra.mxu0 %v2381
    %2579 = vmatpush.msra.mxu0 %v2380
    %2580 = vmatpush.msra.mxu0 %v2379
    %2581 = vmatpush.msra.mxu0 %v2378
    %2582 = vmatmul.f32.gmra.mxu0 %v2285
    %v2583 = vpop.f32.mrf.mxu0
    %v2584 = vadd.f32 %v2546, %v2583
    %2585 = vmatmul.f32.gmra.mxu0 %v2294
    %v2586 = vpop.f32.mrf.mxu0
    %v2587 = vadd.f32 %v2549, %v2586
    %2588 = vmatmul.f32.gmra.mxu0 %v2303
    %v2589 = vpop.f32.mrf.mxu0
    %v2590 = vadd.f32 %v2552, %v2589
    %2591 = vmatmul.f32.gmra.mxu0 %v2312
    %v2592 = vpop.f32.mrf.mxu0
    %v2593 = vadd.f32 %v2555, %v2592
    %2594 = vmatmul.f32.gmra.mxu0 %v2321
    %v2595 = vpop.f32.mrf.mxu0
    %v2596 = vadd.f32 %v2558, %v2595
    %2597 = vmatmul.f32.gmra.mxu0 %v2330
    %v2598 = vpop.f32.mrf.mxu0
    %v2599 = vadd.f32 %v2561, %v2598
    %2600 = vmatmul.f32.gmra.mxu0 %v2339
    %v2601 = vpop.f32.mrf.mxu0
    %v2602 = vadd.f32 %v2564, %v2601
    %2603 = vdwg.mxu0
    %2604 = vmatpush.msra.mxu0 %v2409
    %2605 = vmatpush.msra.mxu0 %v2408
    %2606 = vmatpush.msra.mxu0 %v2407
    %2607 = vmatpush.msra.mxu0 %v2406
    %2608 = vmatpush.msra.mxu0 %v2405
    %2609 = vmatpush.msra.mxu0 %v2404
    %2610 = vmatpush.msra.mxu0 %v2403
    %2611 = vmatpush.msra.mxu0 %v2402
    %2612 = vmatpush.msra.mxu0 %v2401
    %2613 = vmatpush.msra.mxu0 %v2400
    %2614 = vmatpush.msra.mxu0 %v2399
    %2615 = vmatpush.msra.mxu0 %v2398
    %2616 = vmatpush.msra.mxu0 %v2397
    %2617 = vmatpush.msra.mxu0 %v2396
    %2618 = vmatpush.msra.mxu0 %v2395
    %2619 = vmatpush.msra.mxu0 %v2394
    %2620 = vmatmul.f32.gmra.mxu0 %v2286
    %v2621 = vpop.f32.mrf.mxu0
    %v2622 = vadd.f32 %v2584, %v2621
    %2623 = vmatmul.f32.gmra.mxu0 %v2295
    %v2624 = vpop.f32.mrf.mxu0
    %v2625 = vadd.f32 %v2587, %v2624
    %2626 = vmatmul.f32.gmra.mxu0 %v2304
    %v2627 = vpop.f32.mrf.mxu0
    %v2628 = vadd.f32 %v2590, %v2627
    %2629 = vmatmul.f32.gmra.mxu0 %v2313
    %v2630 = vpop.f32.mrf.mxu0
    %v2631 = vadd.f32 %v2593, %v2630
    %2632 = vmatmul.f32.gmra.mxu0 %v2322
    %v2633 = vpop.f32.mrf.mxu0
    %v2634 = vadd.f32 %v2596, %v2633
    %2635 = vmatmul.f32.gmra.mxu0 %v2331
    %v2636 = vpop.f32.mrf.mxu0
    %v2637 = vadd.f32 %v2599, %v2636
    %2638 = vmatmul.f32.gmra.mxu0 %v2340
    %v2639 = vpop.f32.mrf.mxu0
    %v2640 = vadd.f32 %v2602, %v2639
    %2641 = vdwg.mxu0
    %2642 = vmatpush.msra.mxu0 %v2425
    %2643 = vmatpush.msra.mxu0 %v2424
    %2644 = vmatpush.msra.mxu0 %v2423
    %2645 = vmatpush.msra.mxu0 %v2422
    %2646 = vmatpush.msra.mxu0 %v2421
    %2647 = vmatpush.msra.mxu0 %v2420
    %2648 = vmatpush.msra.mxu0 %v2419
    %2649 = vmatpush.msra.mxu0 %v2418
    %2650 = vmatpush.msra.mxu0 %v2417
    %2651 = vmatpush.msra.mxu0 %v2416
    %2652 = vmatpush.msra.mxu0 %v2415
    %2653 = vmatpush.msra.mxu0 %v2414
    %2654 = vmatpush.msra.mxu0 %v2413
    %2655 = vmatpush.msra.mxu0 %v2412
    %2656 = vmatpush.msra.mxu0 %v2411
    %2657 = vmatpush.msra.mxu0 %v2410
    %2658 = vmatmul.f32.gmra.mxu0 %v2287
    %v2659 = vpop.f32.mrf.mxu0
    %v2660 = vadd.f32 %v2622, %v2659
    %2661 = vmatmul.f32.gmra.mxu0 %v2296
    %v2662 = vpop.f32.mrf.mxu0
    %v2663 = vadd.f32 %v2625, %v2662
    %2664 = vmatmul.f32.gmra.mxu0 %v2305
    %v2665 = vpop.f32.mrf.mxu0
    %v2666 = vadd.f32 %v2628, %v2665
    %2667 = vmatmul.f32.gmra.mxu0 %v2314
    %v2668 = vpop.f32.mrf.mxu0
    %v2669 = vadd.f32 %v2631, %v2668
    %2670 = vmatmul.f32.gmra.mxu0 %v2323
    %v2671 = vpop.f32.mrf.mxu0
    %v2672 = vadd.f32 %v2634, %v2671
    %2673 = vmatmul.f32.gmra.mxu0 %v2332
    %v2674 = vpop.f32.mrf.mxu0
    %v2675 = vadd.f32 %v2637, %v2674
    %2676 = vmatmul.f32.gmra.mxu0 %v2341
    %v2677 = vpop.f32.mrf.mxu0
    %v2678 = vadd.f32 %v2640, %v2677
    %2679 = vdwg.mxu0
    %2680 = vmatpush.msra.mxu0 %v2441
    %2681 = vmatpush.msra.mxu0 %v2440
    %2682 = vmatpush.msra.mxu0 %v2439
    %2683 = vmatpush.msra.mxu0 %v2438
    %2684 = vmatpush.msra.mxu0 %v2437
    %2685 = vmatpush.msra.mxu0 %v2436
    %2686 = vmatpush.msra.mxu0 %v2435
    %2687 = vmatpush.msra.mxu0 %v2434
    %2688 = vmatpush.msra.mxu0 %v2433
    %2689 = vmatpush.msra.mxu0 %v2432
    %2690 = vmatpush.msra.mxu0 %v2431
    %2691 = vmatpush.msra.mxu0 %v2430
    %2692 = vmatpush.msra.mxu0 %v2429
    %2693 = vmatpush.msra.mxu0 %v2428
    %2694 = vmatpush.msra.mxu0 %v2427
    %2695 = vmatpush.msra.mxu0 %v2426
    %2696 = vmatmul.f32.gmra.mxu0 %v2288
    %v2697 = vpop.f32.mrf.mxu0
    %v2698 = vadd.f32 %v2660, %v2697
    %2699 = vmatmul.f32.gmra.mxu0 %v2297
    %v2700 = vpop.f32.mrf.mxu0
    %v2701 = vadd.f32 %v2663, %v2700
    %2702 = vmatmul.f32.gmra.mxu0 %v2306
    %v2703 = vpop.f32.mrf.mxu0
    %v2704 = vadd.f32 %v2666, %v2703
    %2705 = vmatmul.f32.gmra.mxu0 %v2315
    %v2706 = vpop.f32.mrf.mxu0
    %v2707 = vadd.f32 %v2669, %v2706
    %2708 = vmatmul.f32.gmra.mxu0 %v2324
    %v2709 = vpop.f32.mrf.mxu0
    %v2710 = vadd.f32 %v2672, %v2709
    %2711 = vmatmul.f32.gmra.mxu0 %v2333
    %v2712 = vpop.f32.mrf.mxu0
    %v2713 = vadd.f32 %v2675, %v2712
    %2714 = vmatmul.f32.gmra.mxu0 %v2342
    %v2715 = vpop.f32.mrf.mxu0
    %v2716 = vadd.f32 %v2678, %v2715
    %2717 = vdwg.mxu0
    %2718 = vmatpush.msra.mxu0 %v2457
    %2719 = vmatpush.msra.mxu0 %v2456
    %2720 = vmatpush.msra.mxu0 %v2455
    %2721 = vmatpush.msra.mxu0 %v2454
    %2722 = vmatpush.msra.mxu0 %v2453
    %2723 = vmatpush.msra.mxu0 %v2452
    %2724 = vmatpush.msra.mxu0 %v2451
    %2725 = vmatpush.msra.mxu0 %v2450
    %2726 = vmatpush.msra.mxu0 %v2449
    %2727 = vmatpush.msra.mxu0 %v2448
    %2728 = vmatpush.msra.mxu0 %v2447
    %2729 = vmatpush.msra.mxu0 %v2446
    %2730 = vmatpush.msra.mxu0 %v2445
    %2731 = vmatpush.msra.mxu0 %v2444
    %2732 = vmatpush.msra.mxu0 %v2443
    %2733 = vmatpush.msra.mxu0 %v2442
    %2734 = vmatmul.f32.gmra.mxu0 %v2289
    %v2735 = vpop.f32.mrf.mxu0
    %v2736 = vadd.f32 %v2698, %v2735
    %2737 = vmatmul.f32.gmra.mxu0 %v2298
    %v2738 = vpop.f32.mrf.mxu0
    %v2739 = vadd.f32 %v2701, %v2738
    %2740 = vmatmul.f32.gmra.mxu0 %v2307
    %v2741 = vpop.f32.mrf.mxu0
    %v2742 = vadd.f32 %v2704, %v2741
    %2743 = vmatmul.f32.gmra.mxu0 %v2316
    %v2744 = vpop.f32.mrf.mxu0
    %v2745 = vadd.f32 %v2707, %v2744
    %2746 = vmatmul.f32.gmra.mxu0 %v2325
    %v2747 = vpop.f32.mrf.mxu0
    %v2748 = vadd.f32 %v2710, %v2747
    %2749 = vmatmul.f32.gmra.mxu0 %v2334
    %v2750 = vpop.f32.mrf.mxu0
    %v2751 = vadd.f32 %v2713, %v2750
    %2752 = vmatmul.f32.gmra.mxu0 %v2343
    %v2753 = vpop.f32.mrf.mxu0
    %v2754 = vadd.f32 %v2716, %v2753
    %2755 = vdwg.mxu0
    %2756 = vmatpush.msra.mxu0 %v2473
    %2757 = vmatpush.msra.mxu0 %v2472
    %2758 = vmatpush.msra.mxu0 %v2471
    %2759 = vmatpush.msra.mxu0 %v2470
    %2760 = vmatpush.msra.mxu0 %v2469
    %2761 = vmatpush.msra.mxu0 %v2468
    %2762 = vmatpush.msra.mxu0 %v2467
    %2763 = vmatpush.msra.mxu0 %v2466
    %2764 = vmatpush.msra.mxu0 %v2465
    %2765 = vmatpush.msra.mxu0 %v2464
    %2766 = vmatpush.msra.mxu0 %v2463
    %2767 = vmatpush.msra.mxu0 %v2462
    %2768 = vmatpush.msra.mxu0 %v2461
    %2769 = vmatpush.msra.mxu0 %v2460
    %2770 = vmatpush.msra.mxu0 %v2459
    %2771 = vmatpush.msra.mxu0 %v2458
    %2772 = vmatmul.f32.gmra.mxu0 %v2290
    %v2773 = vpop.f32.mrf.mxu0
    %v2774 = vadd.f32 %v2736, %v2773
    %2775 = vmatmul.f32.gmra.mxu0 %v2299
    %v2776 = vpop.f32.mrf.mxu0
    %v2777 = vadd.f32 %v2739, %v2776
    %2778 = vmatmul.f32.gmra.mxu0 %v2308
    %v2779 = vpop.f32.mrf.mxu0
    %v2780 = vadd.f32 %v2742, %v2779
    %2781 = vmatmul.f32.gmra.mxu0 %v2317
    %v2782 = vpop.f32.mrf.mxu0
    %v2783 = vadd.f32 %v2745, %v2782
    %2784 = vmatmul.f32.gmra.mxu0 %v2326
    %v2785 = vpop.f32.mrf.mxu0
    %v2786 = vadd.f32 %v2748, %v2785
    %2787 = vmatmul.f32.gmra.mxu0 %v2335
    %v2788 = vpop.f32.mrf.mxu0
    %v2789 = vadd.f32 %v2751, %v2788
    %2790 = vmatmul.f32.gmra.mxu0 %v2344
    %v2791 = vpop.f32.mrf.mxu0
    %v2792 = vadd.f32 %v2754, %v2791
    %2793 = vdwg.mxu0
    %2794 = vmatpush.msra.mxu0 %v2489
    %2795 = vmatpush.msra.mxu0 %v2488
    %2796 = vmatpush.msra.mxu0 %v2487
    %2797 = vmatpush.msra.mxu0 %v2486
    %2798 = vmatpush.msra.mxu0 %v2485
    %2799 = vmatpush.msra.mxu0 %v2484
    %2800 = vmatpush.msra.mxu0 %v2483
    %2801 = vmatpush.msra.mxu0 %v2482
    %2802 = vmatpush.msra.mxu0 %v2481
    %2803 = vmatpush.msra.mxu0 %v2480
    %2804 = vmatpush.msra.mxu0 %v2479
    %2805 = vmatpush.msra.mxu0 %v2478
    %2806 = vmatpush.msra.mxu0 %v2477
    %2807 = vmatpush.msra.mxu0 %v2476
    %2808 = vmatpush.msra.mxu0 %v2475
    %2809 = vmatpush.msra.mxu0 %v2474
    %2810 = vmatmul.f32.gmra.mxu0 %v2291
    %v2811 = vpop.f32.mrf.mxu0
    %v2812 = vadd.f32 %v2774, %v2811
    %2813 = vmatmul.f32.gmra.mxu0 %v2300
    %v2814 = vpop.f32.mrf.mxu0
    %v2815 = vadd.f32 %v2777, %v2814
    %2816 = vmatmul.f32.gmra.mxu0 %v2309
    %v2817 = vpop.f32.mrf.mxu0
    %v2818 = vadd.f32 %v2780, %v2817
    %2819 = vmatmul.f32.gmra.mxu0 %v2318
    %v2820 = vpop.f32.mrf.mxu0
    %v2821 = vadd.f32 %v2783, %v2820
    %2822 = vmatmul.f32.gmra.mxu0 %v2327
    %v2823 = vpop.f32.mrf.mxu0
    %v2824 = vadd.f32 %v2786, %v2823
    %2825 = vmatmul.f32.gmra.mxu0 %v2336
    %v2826 = vpop.f32.mrf.mxu0
    %v2827 = vadd.f32 %v2789, %v2826
    %2828 = vmatmul.f32.gmra.mxu0 %v2345
    %v2829 = vpop.f32.mrf.mxu0
    %v2830 = vadd.f32 %v2792, %v2829
    %2831 = vdwg.mxu0
    %v2832 = vld [vmem:[#allocation32] sm:$0xff]
    %v2833 = vld [vmem:[#allocation32 + $0x8] sm:$0xff]
    %v2834 = vld [vmem:[#allocation32 + $0x10] sm:$0xff]
    %v2835 = vld [vmem:[#allocation32 + $0x18] sm:$0xff]
    %v2836 = vld [vmem:[#allocation32 + $0x20] sm:$0xff]
    %v2837 = vld [vmem:[#allocation32 + $0x28] sm:$0xff]
    %v2838 = vld [vmem:[#allocation32 + $0x30] sm:$0xff]
    %v2839 = vld [vmem:[#allocation32 + $0x38] sm:$0xff]
    %v2840 = vld [vmem:[#allocation32 + $0x40] sm:$0xff]
    %v2841 = vld [vmem:[#allocation32 + $0x48] sm:$0xff]
    %v2842 = vld [vmem:[#allocation32 + $0x50] sm:$0xff]
    %v2843 = vld [vmem:[#allocation32 + $0x58] sm:$0xff]
    %v2844 = vld [vmem:[#allocation32 + $0x60] sm:$0xff]
    %v2845 = vld [vmem:[#allocation32 + $0x68] sm:$0xff]
    %v2846 = vld [vmem:[#allocation32 + $0x70] sm:$0xff]
    %v2847 = vld [vmem:[#allocation32 + $0x78] sm:$0xff]
    %v2848 = vld [vmem:[#allocation32 + $0x80] sm:$0xff]
    %v2849 = vld [vmem:[#allocation32 + $0x88] sm:$0xff]
    %v2850 = vld [vmem:[#allocation32 + $0x90] sm:$0xff]
    %v2851 = vld [vmem:[#allocation32 + $0x98] sm:$0xff]
    %v2852 = vld [vmem:[#allocation32 + $0xa0] sm:$0xff]
    %v2853 = vld [vmem:[#allocation32 + $0xa8] sm:$0xff]
    %v2854 = vld [vmem:[#allocation32 + $0xb0] sm:$0xff]
    %v2855 = vld [vmem:[#allocation32 + $0xb8] sm:$0xff]
    %v2856 = vld [vmem:[#allocation32 + $0xc0] sm:$0xff]
    %v2857 = vld [vmem:[#allocation32 + $0xc8] sm:$0xff]
    %v2858 = vld [vmem:[#allocation32 + $0xd0] sm:$0xff]
    %v2859 = vld [vmem:[#allocation32 + $0xd8] sm:$0xff]
    %v2860 = vld [vmem:[#allocation32 + $0xe0] sm:$0xff]
    %v2861 = vld [vmem:[#allocation32 + $0xe8] sm:$0xff]
    %v2862 = vld [vmem:[#allocation32 + $0xf0] sm:$0xff]
    %v2863 = vld [vmem:[#allocation32 + $0xf8] sm:$0xff]
    %v2864 = vld [vmem:[#allocation32 + $0x100] sm:$0xff]
    %v2865 = vld [vmem:[#allocation32 + $0x108] sm:$0xff]
    %v2866 = vld [vmem:[#allocation32 + $0x110] sm:$0xff]
    %v2867 = vld [vmem:[#allocation32 + $0x118] sm:$0xff]
    %v2868 = vld [vmem:[#allocation32 + $0x120] sm:$0xff]
    %v2869 = vld [vmem:[#allocation32 + $0x128] sm:$0xff]
    %v2870 = vld [vmem:[#allocation32 + $0x130] sm:$0xff]
    %v2871 = vld [vmem:[#allocation32 + $0x138] sm:$0xff]
    %v2872 = vld [vmem:[#allocation32 + $0x140] sm:$0xff]
    %v2873 = vld [vmem:[#allocation32 + $0x148] sm:$0xff]
    %v2874 = vld [vmem:[#allocation32 + $0x150] sm:$0xff]
    %v2875 = vld [vmem:[#allocation32 + $0x158] sm:$0xff]
    %v2876 = vld [vmem:[#allocation32 + $0x160] sm:$0xff]
    %v2877 = vld [vmem:[#allocation32 + $0x168] sm:$0xff]
    %v2878 = vld [vmem:[#allocation32 + $0x170] sm:$0xff]
    %v2879 = vld [vmem:[#allocation32 + $0x178] sm:$0xff]
    %v2880 = vld [vmem:[#allocation32 + $0x180] sm:$0x1]
    %v2881 = vld [vmem:[#allocation32 + $0x188] sm:$0x1]
    %v2882 = vld [vmem:[#allocation32 + $0x190] sm:$0x1]
    %v2883 = vld [vmem:[#allocation32 + $0x198] sm:$0x1]
    %v2884 = vld [vmem:[#allocation32 + $0x1a0] sm:$0x1]
    %v2885 = vld [vmem:[#allocation32 + $0x1a8] sm:$0x1]
    %v2886 = vld [vmem:[#allocation32 + $0x1b0] sm:$0x1]
    %v2887 = vld [vmem:[#allocation32 + $0x1b8] sm:$0x1]
    %v2888 = vld [vmem:[%s2] sm:$0xff]
    %v2889 = vld [vmem:[%s2 + $0x8] sm:$0xff]
    %v2890 = vld [vmem:[%s2 + $0x10] sm:$0xff]
    %v2891 = vld [vmem:[%s2 + $0x18] sm:$0xff]
    %v2892 = vld [vmem:[%s2 + $0x20] sm:$0xff]
    %v2893 = vld [vmem:[%s2 + $0x28] sm:$0xff]
    %v2894 = vld [vmem:[%s2 + $0x30] sm:$0x1]
    %2902 = vrot.lane.b32.xlu0 %v2812, 96
    %v2903 = vpop.permute.xlu0 %2902
    %2904 = vrot.lane.b32.xlu0 %v2815, 96
    %v2905 = vpop.permute.xlu0 %2904
    %2906 = vrot.lane.b32.xlu0 %v2818, 96
    %v2907 = vpop.permute.xlu0 %2906
    %2908 = vrot.lane.b32.xlu0 %v2821, 96
    %v2909 = vpop.permute.xlu0 %2908
    %2910 = vrot.lane.b32.xlu0 %v2824, 96
    %v2911 = vpop.permute.xlu0 %2910
    %2912 = vrot.lane.b32.xlu0 %v2827, 96
    %v2913 = vpop.permute.xlu0 %2912
    %2914 = vrot.lane.b32.xlu0 %v2830, 96
    %v2915 = vpop.permute.xlu0 %2914
    %vm2923 = vcmask 785408
    %v2924 = vsel %vm2923, %v2839, %v2903
    %v2925 = vsel %vm2923, %v2847, %v2905
    %v2926 = vsel %vm2923, %v2855, %v2907
    %v2927 = vsel %vm2923, %v2863, %v2909
    %v2928 = vsel %vm2923, %v2871, %v2911
    %v2929 = vsel %vm2923, %v2879, %v2913
    %v2930 = vsel %vm2923, %v2887, %v2915
    %v2931 = vadd.f32 %v2832, %v2840
    %v2932 = vadd.f32 %v2931, %v2848
    %v2933 = vadd.f32 %v2932, %v2856
    %v2934 = vadd.f32 %v2933, %v2864
    %v2935 = vadd.f32 %v2934, %v2872
    %vm2936 = vcmask 1040384
    %v2937 = vsel %vm2936, %v2880, 0.0
    %v2938 = vadd.f32 %v2935, %v2937
    %v2939 = vrot.slane %v2938, 4
    %v2940 = vadd.f32 %v2938, %v2939
    %v2941 = vrot.slane %v2940, 2
    %v2942 = vadd.f32 %v2940, %v2941
    %v2943 = vrot.slane %v2942, 1
    %v2944 = vadd.f32 %v2942, %v2943
    %v2945 = vadd.f32 %v2833, %v2841
    %v2946 = vadd.f32 %v2945, %v2849
    %v2947 = vadd.f32 %v2946, %v2857
    %v2948 = vadd.f32 %v2947, %v2865
    %v2949 = vadd.f32 %v2948, %v2873
    %v2950 = vsel %vm2936, %v2881, 0.0
    %v2951 = vadd.f32 %v2949, %v2950
    %v2952 = vrot.slane %v2951, 4
    %v2953 = vadd.f32 %v2951, %v2952
    %v2954 = vrot.slane %v2953, 2
    %v2955 = vadd.f32 %v2953, %v2954
    %v2956 = vrot.slane %v2955, 1
    %v2957 = vadd.f32 %v2955, %v2956
    %v2958 = vadd.f32 %v2834, %v2842
    %v2959 = vadd.f32 %v2958, %v2850
    %v2960 = vadd.f32 %v2959, %v2858
    %v2961 = vadd.f32 %v2960, %v2866
    %v2962 = vadd.f32 %v2961, %v2874
    %v2963 = vsel %vm2936, %v2882, 0.0
    %v2964 = vadd.f32 %v2962, %v2963
    %v2965 = vrot.slane %v2964, 4
    %v2966 = vadd.f32 %v2964, %v2965
    %v2967 = vrot.slane %v2966, 2
    %v2968 = vadd.f32 %v2966, %v2967
    %v2969 = vrot.slane %v2968, 1
    %v2970 = vadd.f32 %v2968, %v2969
    %v2971 = vadd.f32 %v2835, %v2843
    %v2972 = vadd.f32 %v2971, %v2851
    %v2973 = vadd.f32 %v2972, %v2859
    %v2974 = vadd.f32 %v2973, %v2867
    %v2975 = vadd.f32 %v2974, %v2875
    %v2976 = vsel %vm2936, %v2883, 0.0
    %v2977 = vadd.f32 %v2975, %v2976
    %v2978 = vrot.slane %v2977, 4
    %v2979 = vadd.f32 %v2977, %v2978
    %v2980 = vrot.slane %v2979, 2
    %v2981 = vadd.f32 %v2979, %v2980
    %v2982 = vrot.slane %v2981, 1
    %v2983 = vadd.f32 %v2981, %v2982
    %v2984 = vadd.f32 %v2836, %v2844
    %v2985 = vadd.f32 %v2984, %v2852
    %v2986 = vadd.f32 %v2985, %v2860
    %v2987 = vadd.f32 %v2986, %v2868
    %v2988 = vadd.f32 %v2987, %v2876
    %v2989 = vsel %vm2936, %v2884, 0.0
    %v2990 = vadd.f32 %v2988, %v2989
    %v2991 = vrot.slane %v2990, 4
    %v2992 = vadd.f32 %v2990, %v2991
    %v2993 = vrot.slane %v2992, 2
    %v2994 = vadd.f32 %v2992, %v2993
    %v2995 = vrot.slane %v2994, 1
    %v2996 = vadd.f32 %v2994, %v2995
    %v2997 = vadd.f32 %v2837, %v2845
    %v2998 = vadd.f32 %v2997, %v2853
    %v2999 = vadd.f32 %v2998, %v2861
    %v3000 = vadd.f32 %v2999, %v2869
    %v3001 = vadd.f32 %v3000, %v2877
    %v3002 = vsel %vm2936, %v2885, 0.0
    %v3003 = vadd.f32 %v3001, %v3002
    %v3004 = vrot.slane %v3003, 4
    %v3005 = vadd.f32 %v3003, %v3004
    %v3006 = vrot.slane %v3005, 2
    %v3007 = vadd.f32 %v3005, %v3006
    %v3008 = vrot.slane %v3007, 1
    %v3009 = vadd.f32 %v3007, %v3008
    %v3010 = vadd.f32 %v2838, %v2846
    %v3011 = vadd.f32 %v3010, %v2854
    %v3012 = vadd.f32 %v3011, %v2862
    %v3013 = vadd.f32 %v3012, %v2870
    %v3014 = vadd.f32 %v3013, %v2878
    %v3015 = vsel %vm2936, %v2886, 0.0
    %v3016 = vadd.f32 %v3014, %v3015
    %v3017 = vrot.slane %v3016, 4
    %v3018 = vadd.f32 %v3016, %v3017
    %v3019 = vrot.slane %v3018, 2
    %v3020 = vadd.f32 %v3018, %v3019
    %v3021 = vrot.slane %v3020, 1
    %v3022 = vadd.f32 %v3020, %v3021
    %v3023 = vadd.f32 %v2924, %v2925
    %v3024 = vadd.f32 %v3023, %v2926
    %v3025 = vadd.f32 %v3024, %v2927
    %v3026 = vadd.f32 %v3025, %v2928
    %v3027 = vadd.f32 %v3026, %v2929
    %v3028 = vsel %vm2936, %v2930, 0.0
    %v3029 = vadd.f32 %v3027, %v3028
    %v3030 = vrot.slane %v3029, 4
    %v3031 = vadd.f32 %v3029, %v3030
    %v3032 = vrot.slane %v3031, 2
    %v3033 = vadd.f32 %v3031, %v3032
    %v3034 = vrot.slane %v3033, 1
    %v3035 = vadd.f32 %v3033, %v3034
    %vm3036 = vcmask 261120
    %v3037 = vsel %vm3036, %v2888, 0.0
    %v3038 = vsel %vm3036, %v2889, 0.0
    %v3039 = vadd.f32 %v3037, %v3038
    %v3040 = vsel %vm3036, %v2890, 0.0
    %v3041 = vadd.f32 %v3039, %v3040
    %v3042 = vsel %vm3036, %v2891, 0.0
    %v3043 = vadd.f32 %v3041, %v3042
    %v3044 = vsel %vm3036, %v2892, 0.0
    %v3045 = vadd.f32 %v3043, %v3044
    %v3046 = vsel %vm3036, %v2893, 0.0
    %v3047 = vadd.f32 %v3045, %v3046
    %vm3048 = vcmask 253952
    %v3049 = vsel %vm3048, %v2894, 0.0
    %v3050 = vadd.f32 %v3047, %v3049
    %v3051 = vrot.slane %v3050, 4
    %v3052 = vadd.f32 %v3050, %v3051
    %v3053 = vrot.slane %v3052, 2
    %v3054 = vadd.f32 %v3052, %v3053
    %v3055 = vrot.slane %v3054, 1
    %v3056 = vadd.f32 %v3054, %v3055
    %v3057 = vrcp.pop 49.0
    %v3058 = vmul.f32 49.0, %v3057
    %v3059 = vsub.f32 1.0, %v3058
    %v3060 = vmul.f32 %v3057, %v3059
    %v3061 = vadd.f32 %v3057, %v3060
    %vm3062 = vweird.f32 %v3057
    %v3063 = vsel %vm3062, %v3057, %v3061
    %v3064 = vmul.f32 %v2944, %v3063
    %v3065 = vmul.f32 %v2957, %v3063
    %v3066 = vmul.f32 %v2970, %v3063
    %v3067 = vmul.f32 %v2983, %v3063
    %v3068 = vmul.f32 %v2996, %v3063
    %v3069 = vmul.f32 %v3009, %v3063
    %v3070 = vmul.f32 %v3022, %v3063
    %v3071 = vmul.f32 %v3035, %v3063
    %v3072 = vmul.f32 %v3056, %v3063
    %v3073 = vsub.f32 %v2832, %v3064
    %v3074 = vsub.f32 %v2833, %v3065
    %v3075 = vsub.f32 %v2834, %v3066
    %v3076 = vsub.f32 %v2835, %v3067
    %v3077 = vsub.f32 %v2836, %v3068
    %v3078 = vsub.f32 %v2837, %v3069
    %v3079 = vsub.f32 %v2838, %v3070
    %v3080 = vsub.f32 %v2924, %v3071
    %v3081 = vsub.f32 %v2888, %v3072
    %v3082 = vsub.f32 %v2840, %v3064
    %v3083 = vsub.f32 %v2841, %v3065
    %v3084 = vsub.f32 %v2842, %v3066
    %v3085 = vsub.f32 %v2843, %v3067
    %v3086 = vsub.f32 %v2844, %v3068
    %v3087 = vsub.f32 %v2845, %v3069
    %v3088 = vsub.f32 %v2846, %v3070
    %v3089 = vsub.f32 %v2925, %v3071
    %v3090 = vsub.f32 %v2889, %v3072
    %v3091 = vsub.f32 %v2848, %v3064
    %v3092 = vsub.f32 %v2849, %v3065
    %v3093 = vsub.f32 %v2850, %v3066
    %v3094 = vsub.f32 %v2851, %v3067
    %v3095 = vsub.f32 %v2852, %v3068
    %v3096 = vsub.f32 %v2853, %v3069
    %v3097 = vsub.f32 %v2854, %v3070
    %v3098 = vsub.f32 %v2926, %v3071
    %v3099 = vsub.f32 %v2890, %v3072
    %v3100 = vsub.f32 %v2856, %v3064
    %v3101 = vsub.f32 %v2857, %v3065
    %v3102 = vsub.f32 %v2858, %v3066
    %v3103 = vsub.f32 %v2859, %v3067
    %v3104 = vsub.f32 %v2860, %v3068
    %v3105 = vsub.f32 %v2861, %v3069
    %v3106 = vsub.f32 %v2862, %v3070
    %v3107 = vsub.f32 %v2927, %v3071
    %v3108 = vsub.f32 %v2891, %v3072
    %v3109 = vsub.f32 %v2864, %v3064
    %v3110 = vsub.f32 %v2865, %v3065
    %v3111 = vsub.f32 %v2866, %v3066
    %v3112 = vsub.f32 %v2867, %v3067
    %v3113 = vsub.f32 %v2868, %v3068
    %v3114 = vsub.f32 %v2869, %v3069
    %v3115 = vsub.f32 %v2870, %v3070
    %v3116 = vsub.f32 %v2928, %v3071
    %v3117 = vsub.f32 %v2892, %v3072
    %v3118 = vsub.f32 %v2872, %v3064
    %v3119 = vsub.f32 %v2873, %v3065
    %v3120 = vsub.f32 %v2874, %v3066
    %v3121 = vsub.f32 %v2875, %v3067
    %v3122 = vsub.f32 %v2876, %v3068
    %v3123 = vsub.f32 %v2877, %v3069
    %v3124 = vsub.f32 %v2878, %v3070
    %v3125 = vsub.f32 %v2929, %v3071
    %v3126 = vsub.f32 %v2893, %v3072
    %v3127 = vsub.f32 %v2880, %v3064
    %v3128 = vsub.f32 %v2881, %v3065
    %v3129 = vsub.f32 %v2882, %v3066
    %v3130 = vsub.f32 %v2883, %v3067
    %v3131 = vsub.f32 %v2884, %v3068
    %v3132 = vsub.f32 %v2885, %v3069
    %v3133 = vsub.f32 %v2886, %v3070
    %v3134 = vsub.f32 %v2930, %v3071
    %v3135 = vsub.f32 %v2894, %v3072
    %v3136 = vmul.f32 %v3073, %v3073
    %v3137 = vmul.f32 %v3074, %v3074
    %v3138 = vmul.f32 %v3075, %v3075
    %v3139 = vmul.f32 %v3076, %v3076
    %v3140 = vmul.f32 %v3077, %v3077
    %v3141 = vmul.f32 %v3078, %v3078
    %v3142 = vmul.f32 %v3079, %v3079
    %v3143 = vmul.f32 %v3080, %v3080
    %v3144 = vmul.f32 %v3081, %v3081
    %v3145 = vmul.f32 %v3082, %v3082
    %v3146 = vmul.f32 %v3083, %v3083
    %v3147 = vmul.f32 %v3084, %v3084
    %v3148 = vmul.f32 %v3085, %v3085
    %v3149 = vmul.f32 %v3086, %v3086
    %v3150 = vmul.f32 %v3087, %v3087
    %v3151 = vmul.f32 %v3088, %v3088
    %v3152 = vmul.f32 %v3089, %v3089
    %v3153 = vmul.f32 %v3090, %v3090
    %v3154 = vmul.f32 %v3091, %v3091
    %v3155 = vmul.f32 %v3092, %v3092
    %v3156 = vmul.f32 %v3093, %v3093
    %v3157 = vmul.f32 %v3094, %v3094
    %v3158 = vmul.f32 %v3095, %v3095
    %v3159 = vmul.f32 %v3096, %v3096
    %v3160 = vmul.f32 %v3097, %v3097
    %v3161 = vmul.f32 %v3098, %v3098
    %v3162 = vmul.f32 %v3099, %v3099
    %v3163 = vmul.f32 %v3100, %v3100
    %v3164 = vmul.f32 %v3101, %v3101
    %v3165 = vmul.f32 %v3102, %v3102
    %v3166 = vmul.f32 %v3103, %v3103
    %v3167 = vmul.f32 %v3104, %v3104
    %v3168 = vmul.f32 %v3105, %v3105
    %v3169 = vmul.f32 %v3106, %v3106
    %v3170 = vmul.f32 %v3107, %v3107
    %v3171 = vmul.f32 %v3108, %v3108
    %v3172 = vmul.f32 %v3109, %v3109
    %v3173 = vmul.f32 %v3110, %v3110
    %v3174 = vmul.f32 %v3111, %v3111
    %v3175 = vmul.f32 %v3112, %v3112
    %v3176 = vmul.f32 %v3113, %v3113
    %v3177 = vmul.f32 %v3114, %v3114
    %v3178 = vmul.f32 %v3115, %v3115
    %v3179 = vmul.f32 %v3116, %v3116
    %v3180 = vmul.f32 %v3117, %v3117
    %v3181 = vmul.f32 %v3118, %v3118
    %v3182 = vmul.f32 %v3119, %v3119
    %v3183 = vmul.f32 %v3120, %v3120
    %v3184 = vmul.f32 %v3121, %v3121
    %v3185 = vmul.f32 %v3122, %v3122
    %v3186 = vmul.f32 %v3123, %v3123
    %v3187 = vmul.f32 %v3124, %v3124
    %v3188 = vmul.f32 %v3125, %v3125
    %v3189 = vmul.f32 %v3126, %v3126
    %v3190 = vmul.f32 %v3127, %v3127
    %v3191 = vmul.f32 %v3128, %v3128
    %v3192 = vmul.f32 %v3129, %v3129
    %v3193 = vmul.f32 %v3130, %v3130
    %v3194 = vmul.f32 %v3131, %v3131
    %v3195 = vmul.f32 %v3132, %v3132
    %v3196 = vmul.f32 %v3133, %v3133
    %v3197 = vmul.f32 %v3134, %v3134
    %v3198 = vmul.f32 %v3135, %v3135
    %v3199 = vadd.f32 %v3136, %v3145
    %v3200 = vadd.f32 %v3199, %v3154
    %v3201 = vadd.f32 %v3200, %v3163
    %v3202 = vadd.f32 %v3201, %v3172
    %v3203 = vadd.f32 %v3202, %v3181
    %v3204 = vsel %vm2936, %v3190, 0.0
    %v3205 = vadd.f32 %v3203, %v3204
    %v3206 = vrot.slane %v3205, 4
    %v3207 = vadd.f32 %v3205, %v3206
    %v3208 = vrot.slane %v3207, 2
    %v3209 = vadd.f32 %v3207, %v3208
    %v3210 = vrot.slane %v3209, 1
    %v3211 = vadd.f32 %v3209, %v3210
    %v3212 = vadd.f32 %v3137, %v3146
    %v3213 = vadd.f32 %v3212, %v3155
    %v3214 = vadd.f32 %v3213, %v3164
    %v3215 = vadd.f32 %v3214, %v3173
    %v3216 = vadd.f32 %v3215, %v3182
    %v3217 = vsel %vm2936, %v3191, 0.0
    %v3218 = vadd.f32 %v3216, %v3217
    %v3219 = vrot.slane %v3218, 4
    %v3220 = vadd.f32 %v3218, %v3219
    %v3221 = vrot.slane %v3220, 2
    %v3222 = vadd.f32 %v3220, %v3221
    %v3223 = vrot.slane %v3222, 1
    %v3224 = vadd.f32 %v3222, %v3223
    %v3225 = vadd.f32 %v3138, %v3147
    %v3226 = vadd.f32 %v3225, %v3156
    %v3227 = vadd.f32 %v3226, %v3165
    %v3228 = vadd.f32 %v3227, %v3174
    %v3229 = vadd.f32 %v3228, %v3183
    %v3230 = vsel %vm2936, %v3192, 0.0
    %v3231 = vadd.f32 %v3229, %v3230
    %v3232 = vrot.slane %v3231, 4
    %v3233 = vadd.f32 %v3231, %v3232
    %v3234 = vrot.slane %v3233, 2
    %v3235 = vadd.f32 %v3233, %v3234
    %v3236 = vrot.slane %v3235, 1
    %v3237 = vadd.f32 %v3235, %v3236
    %v3238 = vadd.f32 %v3139, %v3148
    %v3239 = vadd.f32 %v3238, %v3157
    %v3240 = vadd.f32 %v3239, %v3166
    %v3241 = vadd.f32 %v3240, %v3175
    %v3242 = vadd.f32 %v3241, %v3184
    %v3243 = vsel %vm2936, %v3193, 0.0
    %v3244 = vadd.f32 %v3242, %v3243
    %v3245 = vrot.slane %v3244, 4
    %v3246 = vadd.f32 %v3244, %v3245
    %v3247 = vrot.slane %v3246, 2
    %v3248 = vadd.f32 %v3246, %v3247
    %v3249 = vrot.slane %v3248, 1
    %v3250 = vadd.f32 %v3248, %v3249
    %v3251 = vadd.f32 %v3140, %v3149
    %v3252 = vadd.f32 %v3251, %v3158
    %v3253 = vadd.f32 %v3252, %v3167
    %v3254 = vadd.f32 %v3253, %v3176
    %v3255 = vadd.f32 %v3254, %v3185
    %v3256 = vsel %vm2936, %v3194, 0.0
    %v3257 = vadd.f32 %v3255, %v3256
    %v3258 = vrot.slane %v3257, 4
    %v3259 = vadd.f32 %v3257, %v3258
    %v3260 = vrot.slane %v3259, 2
    %v3261 = vadd.f32 %v3259, %v3260
    %v3262 = vrot.slane %v3261, 1
    %v3263 = vadd.f32 %v3261, %v3262
    %v3264 = vadd.f32 %v3141, %v3150
    %v3265 = vadd.f32 %v3264, %v3159
    %v3266 = vadd.f32 %v3265, %v3168
    %v3267 = vadd.f32 %v3266, %v3177
    %v3268 = vadd.f32 %v3267, %v3186
    %v3269 = vsel %vm2936, %v3195, 0.0
    %v3270 = vadd.f32 %v3268, %v3269
    %v3271 = vrot.slane %v3270, 4
    %v3272 = vadd.f32 %v3270, %v3271
    %v3273 = vrot.slane %v3272, 2
    %v3274 = vadd.f32 %v3272, %v3273
    %v3275 = vrot.slane %v3274, 1
    %v3276 = vadd.f32 %v3274, %v3275
    %v3277 = vadd.f32 %v3142, %v3151
    %v3278 = vadd.f32 %v3277, %v3160
    %v3279 = vadd.f32 %v3278, %v3169
    %v3280 = vadd.f32 %v3279, %v3178
    %v3281 = vadd.f32 %v3280, %v3187
    %v3282 = vsel %vm2936, %v3196, 0.0
    %v3283 = vadd.f32 %v3281, %v3282
    %v3284 = vrot.slane %v3283, 4
    %v3285 = vadd.f32 %v3283, %v3284
    %v3286 = vrot.slane %v3285, 2
    %v3287 = vadd.f32 %v3285, %v3286
    %v3288 = vrot.slane %v3287, 1
    %v3289 = vadd.f32 %v3287, %v3288
    %v3290 = vadd.f32 %v3143, %v3152
    %v3291 = vadd.f32 %v3290, %v3161
    %v3292 = vadd.f32 %v3291, %v3170
    %v3293 = vadd.f32 %v3292, %v3179
    %v3294 = vadd.f32 %v3293, %v3188
    %v3295 = vsel %vm2936, %v3197, 0.0
    %v3296 = vadd.f32 %v3294, %v3295
    %v3297 = vrot.slane %v3296, 4
    %v3298 = vadd.f32 %v3296, %v3297
    %v3299 = vrot.slane %v3298, 2
    %v3300 = vadd.f32 %v3298, %v3299
    %v3301 = vrot.slane %v3300, 1
    %v3302 = vadd.f32 %v3300, %v3301
    %v3303 = vsel %vm3036, %v3144, 0.0
    %v3304 = vsel %vm3036, %v3153, 0.0
    %v3305 = vadd.f32 %v3303, %v3304
    %v3306 = vsel %vm3036, %v3162, 0.0
    %v3307 = vadd.f32 %v3305, %v3306
    %v3308 = vsel %vm3036, %v3171, 0.0
    %v3309 = vadd.f32 %v3307, %v3308
    %v3310 = vsel %vm3036, %v3180, 0.0
    %v3311 = vadd.f32 %v3309, %v3310
    %v3312 = vsel %vm3036, %v3189, 0.0
    %v3313 = vadd.f32 %v3311, %v3312
    %v3314 = vsel %vm3048, %v3198, 0.0
    %v3315 = vadd.f32 %v3313, %v3314
    %v3316 = vrot.slane %v3315, 4
    %v3317 = vadd.f32 %v3315, %v3316
    %v3318 = vrot.slane %v3317, 2
    %v3319 = vadd.f32 %v3317, %v3318
    %v3320 = vrot.slane %v3319, 1
    %v3321 = vadd.f32 %v3319, %v3320
    %v3322 = vmul.f32 %v3211, %v3063
    %v3323 = vmul.f32 %v3224, %v3063
    %v3324 = vmul.f32 %v3237, %v3063
    %v3325 = vmul.f32 %v3250, %v3063
    %v3326 = vmul.f32 %v3263, %v3063
    %v3327 = vmul.f32 %v3276, %v3063
    %v3328 = vmul.f32 %v3289, %v3063
    %v3329 = vmul.f32 %v3302, %v3063
    %v3330 = vmul.f32 %v3321, %v3063
    %v3331 = vld [vmem:[#allocation33] ss:$2 sm:$0xff]
    %s3332 = scalar_lea.vmem [#allocation33], 16
    %v3333 = vld [vmem:[%s3332] ss:$2 sm:$0x1]
    %v3334 = vadd.f32 %v3322, 1e-05
    %v3335 = vadd.f32 %v3323, 1e-05
    %v3336 = vadd.f32 %v3324, 1e-05
    %v3337 = vadd.f32 %v3325, 1e-05
    %v3338 = vadd.f32 %v3326, 1e-05
    %v3339 = vadd.f32 %v3327, 1e-05
    %v3340 = vadd.f32 %v3328, 1e-05
    %v3341 = vadd.f32 %v3329, 1e-05
    %v3342 = vadd.f32 %v3330, 1e-05
    %v3343 = vrsqrt.pop %v3334
    %v3344 = vmul.f32 %v3343, %v3334
    %v3345 = vmul.f32 %v3344, %v3343
    %v3346 = vmul.f32 0.5, %v3345
    %v3347 = vsub.f32 1.5, %v3346
    %v3348 = vmul.f32 %v3343, %v3347
    %vm3349 = vweird.f32 %v3334
    %vm3350 = vweird.f32 %v3343
    %vm3351 = vmor %vm3349, %vm3350
    %v3352 = vsel %vm3351, %v3343, %v3348
    %v3353 = vrsqrt.pop %v3335
    %v3354 = vmul.f32 %v3353, %v3335
    %v3355 = vmul.f32 %v3354, %v3353
    %v3356 = vmul.f32 0.5, %v3355
    %v3357 = vsub.f32 1.5, %v3356
    %v3358 = vmul.f32 %v3353, %v3357
    %vm3359 = vweird.f32 %v3335
    %vm3360 = vweird.f32 %v3353
    %vm3361 = vmor %vm3359, %vm3360
    %v3362 = vsel %vm3361, %v3353, %v3358
    %v3363 = vrsqrt.pop %v3336
    %v3364 = vmul.f32 %v3363, %v3336
    %v3365 = vmul.f32 %v3364, %v3363
    %v3366 = vmul.f32 0.5, %v3365
    %v3367 = vsub.f32 1.5, %v3366
    %v3368 = vmul.f32 %v3363, %v3367
    %vm3369 = vweird.f32 %v3336
    %vm3370 = vweird.f32 %v3363
    %vm3371 = vmor %vm3369, %vm3370
    %v3372 = vsel %vm3371, %v3363, %v3368
    %v3373 = vrsqrt.pop %v3337
    %v3374 = vmul.f32 %v3373, %v3337
    %v3375 = vmul.f32 %v3374, %v3373
    %v3376 = vmul.f32 0.5, %v3375
    %v3377 = vsub.f32 1.5, %v3376
    %v3378 = vmul.f32 %v3373, %v3377
    %vm3379 = vweird.f32 %v3337
    %vm3380 = vweird.f32 %v3373
    %vm3381 = vmor %vm3379, %vm3380
    %v3382 = vsel %vm3381, %v3373, %v3378
    %v3383 = vrsqrt.pop %v3338
    %v3384 = vmul.f32 %v3383, %v3338
    %v3385 = vmul.f32 %v3384, %v3383
    %v3386 = vmul.f32 0.5, %v3385
    %v3387 = vsub.f32 1.5, %v3386
    %v3388 = vmul.f32 %v3383, %v3387
    %vm3389 = vweird.f32 %v3338
    %vm3390 = vweird.f32 %v3383
    %vm3391 = vmor %vm3389, %vm3390
    %v3392 = vsel %vm3391, %v3383, %v3388
    %v3393 = vrsqrt.pop %v3339
    %v3394 = vmul.f32 %v3393, %v3339
    %v3395 = vmul.f32 %v3394, %v3393
    %v3396 = vmul.f32 0.5, %v3395
    %v3397 = vsub.f32 1.5, %v3396
    %v3398 = vmul.f32 %v3393, %v3397
    %vm3399 = vweird.f32 %v3339
    %vm3400 = vweird.f32 %v3393
    %vm3401 = vmor %vm3399, %vm3400
    %v3402 = vsel %vm3401, %v3393, %v3398
    %v3403 = vrsqrt.pop %v3340
    %v3404 = vmul.f32 %v3403, %v3340
    %v3405 = vmul.f32 %v3404, %v3403
    %v3406 = vmul.f32 0.5, %v3405
    %v3407 = vsub.f32 1.5, %v3406
    %v3408 = vmul.f32 %v3403, %v3407
    %vm3409 = vweird.f32 %v3340
    %vm3410 = vweird.f32 %v3403
    %vm3411 = vmor %vm3409, %vm3410
    %v3412 = vsel %vm3411, %v3403, %v3408
    %v3413 = vrsqrt.pop %v3341
    %v3414 = vmul.f32 %v3413, %v3341
    %v3415 = vmul.f32 %v3414, %v3413
    %v3416 = vmul.f32 0.5, %v3415
    %v3417 = vsub.f32 1.5, %v3416
    %v3418 = vmul.f32 %v3413, %v3417
    %vm3419 = vweird.f32 %v3341
    %vm3420 = vweird.f32 %v3413
    %vm3421 = vmor %vm3419, %vm3420
    %v3422 = vsel %vm3421, %v3413, %v3418
    %v3423 = vrsqrt.pop %v3342
    %v3424 = vmul.f32 %v3423, %v3342
    %v3425 = vmul.f32 %v3424, %v3423
    %v3426 = vmul.f32 0.5, %v3425
    %v3427 = vsub.f32 1.5, %v3426
    %v3428 = vmul.f32 %v3423, %v3427
    %vm3429 = vweird.f32 %v3342
    %vm3430 = vweird.f32 %v3423
    %vm3431 = vmor %vm3429, %vm3430
    %v3432 = vsel %vm3431, %v3423, %v3428
    %v3441 = vrot.slane %v3362, 7
    %v3442 = vrot.slane %v3372, 6
    %v3443 = vrot.slane %v3382, 5
    %v3444 = vrot.slane %v3392, 4
    %v3445 = vrot.slane %v3402, 3
    %v3446 = vrot.slane %v3412, 2
    %v3447 = vrot.slane %v3422, 1
    %v3448 = vsel %vm2936, %v3352, %v3441
    %vm3449 = vcmask 1042434
    %v3450 = vsel %vm3449, %v3442, %v3443
    %vm3451 = vcmask 1041408
    %v3452 = vsel %vm3451, %v3448, %v3450
    %vm3453 = vcmask 1044484
    %v3454 = vsel %vm3453, %v3444, %v3445
    %vm3455 = vcmask 1046534
    %v3456 = vsel %vm3455, %v3446, %v3447
    %vm3457 = vcmask 1045508
    %v3458 = vsel %vm3457, %v3454, %v3456
    %vm3459 = vcmask 1043456
    %v3460 = vsel %vm3459, %v3452, %v3458
    %v3462 = vmul.f32 %v3331, %v3460
    %v3463 = vmul.f32 %v3333, %v3432
    %s3464 = scalar_lea.vmem [#allocation33], 1
    %v3465 = vld [vmem:[%s3464] ss:$2 sm:$0xff]
    %s3466 = scalar_lea.vmem [#allocation33], 17
    %v3467 = vld [vmem:[%s3466] ss:$2 sm:$0x1]
    %v3470 = vperm.slane %v3462, 0
    %v3471 = vperm.slane %v3462, 1
    %v3472 = vperm.slane %v3462, 2
    %v3473 = vperm.slane %v3462, 3
    %v3474 = vperm.slane %v3462, 4
    %v3475 = vperm.slane %v3462, 5
    %v3476 = vperm.slane %v3462, 6
    %v3477 = vperm.slane %v3462, 7
    %v3478 = vperm.slane %v3463, 0
    %v3488 = vmul.f32 %v3064, %v3470
    %v3489 = vmul.f32 %v3065, %v3471
    %v3490 = vmul.f32 %v3066, %v3472
    %v3491 = vmul.f32 %v3067, %v3473
    %v3492 = vmul.f32 %v3068, %v3474
    %v3493 = vmul.f32 %v3069, %v3475
    %v3494 = vmul.f32 %v3070, %v3476
    %v3495 = vmul.f32 %v3071, %v3477
    %v3496 = vmul.f32 %v3072, %v3478
    %v3505 = vrot.slane %v3489, 7
    %v3506 = vrot.slane %v3490, 6
    %v3507 = vrot.slane %v3491, 5
    %v3508 = vrot.slane %v3492, 4
    %v3509 = vrot.slane %v3493, 3
    %v3510 = vrot.slane %v3494, 2
    %v3511 = vrot.slane %v3495, 1
    %v3512 = vsel %vm2936, %v3488, %v3505
    %v3513 = vsel %vm3449, %v3506, %v3507
    %v3514 = vsel %vm3451, %v3512, %v3513
    %v3515 = vsel %vm3453, %v3508, %v3509
    %v3516 = vsel %vm3455, %v3510, %v3511
    %v3517 = vsel %vm3457, %v3515, %v3516
    %v3518 = vsel %vm3459, %v3514, %v3517
    %v3520 = vsub.f32 %v3465, %v3518
    %v3521 = vsub.f32 %v3467, %v3496
    %v3522 = vmul.f32 %v2832, %v3470
    %v3523 = vmul.f32 %v2833, %v3471
    %v3524 = vmul.f32 %v2834, %v3472
    %v3525 = vmul.f32 %v2835, %v3473
    %v3526 = vmul.f32 %v2836, %v3474
    %v3527 = vmul.f32 %v2837, %v3475
    %v3528 = vmul.f32 %v2838, %v3476
    %v3529 = vmul.f32 %v2924, %v3477
    %v3530 = vmul.f32 %v2888, %v3478
    %v3531 = vmul.f32 %v2840, %v3470
    %v3532 = vmul.f32 %v2841, %v3471
    %v3533 = vmul.f32 %v2842, %v3472
    %v3534 = vmul.f32 %v2843, %v3473
    %v3535 = vmul.f32 %v2844, %v3474
    %v3536 = vmul.f32 %v2845, %v3475
    %v3537 = vmul.f32 %v2846, %v3476
    %v3538 = vmul.f32 %v2925, %v3477
    %v3539 = vmul.f32 %v2889, %v3478
    %v3540 = vmul.f32 %v2848, %v3470
    %v3541 = vmul.f32 %v2849, %v3471
    %v3542 = vmul.f32 %v2850, %v3472
    %v3543 = vmul.f32 %v2851, %v3473
    %v3544 = vmul.f32 %v2852, %v3474
    %v3545 = vmul.f32 %v2853, %v3475
    %v3546 = vmul.f32 %v2854, %v3476
    %v3547 = vmul.f32 %v2926, %v3477
    %v3548 = vmul.f32 %v2890, %v3478
    %v3549 = vmul.f32 %v2856, %v3470
    %v3550 = vmul.f32 %v2857, %v3471
    %v3551 = vmul.f32 %v2858, %v3472
    %v3552 = vmul.f32 %v2859, %v3473
    %v3553 = vmul.f32 %v2860, %v3474
    %v3554 = vmul.f32 %v2861, %v3475
    %v3555 = vmul.f32 %v2862, %v3476
    %v3556 = vmul.f32 %v2927, %v3477
    %v3557 = vmul.f32 %v2891, %v3478
    %v3558 = vmul.f32 %v2864, %v3470
    %v3559 = vmul.f32 %v2865, %v3471
    %v3560 = vmul.f32 %v2866, %v3472
    %v3561 = vmul.f32 %v2867, %v3473
    %v3562 = vmul.f32 %v2868, %v3474
    %v3563 = vmul.f32 %v2869, %v3475
    %v3564 = vmul.f32 %v2870, %v3476
    %v3565 = vmul.f32 %v2928, %v3477
    %v3566 = vmul.f32 %v2892, %v3478
    %v3567 = vmul.f32 %v2872, %v3470
    %v3568 = vmul.f32 %v2873, %v3471
    %v3569 = vmul.f32 %v2874, %v3472
    %v3570 = vmul.f32 %v2875, %v3473
    %v3571 = vmul.f32 %v2876, %v3474
    %v3572 = vmul.f32 %v2877, %v3475
    %v3573 = vmul.f32 %v2878, %v3476
    %v3574 = vmul.f32 %v2929, %v3477
    %v3575 = vmul.f32 %v2893, %v3478
    %v3576 = vmul.f32 %v2880, %v3470
    %v3577 = vmul.f32 %v2881, %v3471
    %v3578 = vmul.f32 %v2882, %v3472
    %v3579 = vmul.f32 %v2883, %v3473
    %v3580 = vmul.f32 %v2884, %v3474
    %v3581 = vmul.f32 %v2885, %v3475
    %v3582 = vmul.f32 %v2886, %v3476
    %v3583 = vmul.f32 %v2930, %v3477
    %v3584 = vmul.f32 %v2894, %v3478
    %v3587 = vperm.slane %v3520, 0
    %v3588 = vperm.slane %v3520, 1
    %v3589 = vperm.slane %v3520, 2
    %v3590 = vperm.slane %v3520, 3
    %v3591 = vperm.slane %v3520, 4
    %v3592 = vperm.slane %v3520, 5
    %v3593 = vperm.slane %v3520, 6
    %v3594 = vperm.slane %v3520, 7
    %v3595 = vperm.slane %v3521, 0
    %v3605 = vadd.f32 %v3522, %v3587
    %v3606 = vadd.f32 %v3523, %v3588
    %v3607 = vadd.f32 %v3524, %v3589
    %v3608 = vadd.f32 %v3525, %v3590
    %v3609 = vadd.f32 %v3526, %v3591
    %v3610 = vadd.f32 %v3527, %v3592
    %v3611 = vadd.f32 %v3528, %v3593
    %v3612 = vadd.f32 %v3529, %v3594
    %v3613 = vadd.f32 %v3530, %v3595
    %v3614 = vadd.f32 %v3531, %v3587
    %v3615 = vadd.f32 %v3532, %v3588
    %v3616 = vadd.f32 %v3533, %v3589
    %v3617 = vadd.f32 %v3534, %v3590
    %v3618 = vadd.f32 %v3535, %v3591
    %v3619 = vadd.f32 %v3536, %v3592
    %v3620 = vadd.f32 %v3537, %v3593
    %v3621 = vadd.f32 %v3538, %v3594
    %v3622 = vadd.f32 %v3539, %v3595
    %v3623 = vadd.f32 %v3540, %v3587
    %v3624 = vadd.f32 %v3541, %v3588
    %v3625 = vadd.f32 %v3542, %v3589
    %v3626 = vadd.f32 %v3543, %v3590
    %v3627 = vadd.f32 %v3544, %v3591
    %v3628 = vadd.f32 %v3545, %v3592
    %v3629 = vadd.f32 %v3546, %v3593
    %v3630 = vadd.f32 %v3547, %v3594
    %v3631 = vadd.f32 %v3548, %v3595
    %v3632 = vadd.f32 %v3549, %v3587
    %v3633 = vadd.f32 %v3550, %v3588
    %v3634 = vadd.f32 %v3551, %v3589
    %v3635 = vadd.f32 %v3552, %v3590
    %v3636 = vadd.f32 %v3553, %v3591
    %v3637 = vadd.f32 %v3554, %v3592
    %v3638 = vadd.f32 %v3555, %v3593
    %v3639 = vadd.f32 %v3556, %v3594
    %v3640 = vadd.f32 %v3557, %v3595
    %v3641 = vadd.f32 %v3558, %v3587
    %v3642 = vadd.f32 %v3559, %v3588
    %v3643 = vadd.f32 %v3560, %v3589
    %v3644 = vadd.f32 %v3561, %v3590
    %v3645 = vadd.f32 %v3562, %v3591
    %v3646 = vadd.f32 %v3563, %v3592
    %v3647 = vadd.f32 %v3564, %v3593
    %v3648 = vadd.f32 %v3565, %v3594
    %v3649 = vadd.f32 %v3566, %v3595
    %v3650 = vadd.f32 %v3567, %v3587
    %v3651 = vadd.f32 %v3568, %v3588
    %v3652 = vadd.f32 %v3569, %v3589
    %v3653 = vadd.f32 %v3570, %v3590
    %v3654 = vadd.f32 %v3571, %v3591
    %v3655 = vadd.f32 %v3572, %v3592
    %v3656 = vadd.f32 %v3573, %v3593
    %v3657 = vadd.f32 %v3574, %v3594
    %v3658 = vadd.f32 %v3575, %v3595
    %v3659 = vadd.f32 %v3576, %v3587
    %v3660 = vadd.f32 %v3577, %v3588
    %v3661 = vadd.f32 %v3578, %v3589
    %v3662 = vadd.f32 %v3579, %v3590
    %v3663 = vadd.f32 %v3580, %v3591
    %v3664 = vadd.f32 %v3581, %v3592
    %v3665 = vadd.f32 %v3582, %v3593
    %v3666 = vadd.f32 %v3583, %v3594
    %v3667 = vadd.f32 %v3584, %v3595
    %3668 = vst [vmem:[%s10] sm:$0xff] %v3605
    %3669 = vst [vmem:[%s10 + $0x8] sm:$0xff] %v3606
    %3670 = vst [vmem:[%s10 + $0x10] sm:$0xff] %v3607
    %3671 = vst [vmem:[%s10 + $0x18] sm:$0xff] %v3608
    %3672 = vst [vmem:[%s10 + $0x20] sm:$0xff] %v3609
    %3673 = vst [vmem:[%s10 + $0x28] sm:$0xff] %v3610
    %3674 = vst [vmem:[%s10 + $0x30] sm:$0xff] %v3611
    %3675 = vst [vmem:[%s10 + $0x38] sm:$0xff] %v3612
    %3676 = vst.msk [vmem:[%s10 + $0x40] sm:$0xff] %vm3036, %v3613
    %3677 = vst [vmem:[%s10 + $0x48] sm:$0xff] %v3614
    %3678 = vst [vmem:[%s10 + $0x50] sm:$0xff] %v3615
    %3679 = vst [vmem:[%s10 + $0x58] sm:$0xff] %v3616
    %3680 = vst [vmem:[%s10 + $0x60] sm:$0xff] %v3617
    %3681 = vst [vmem:[%s10 + $0x68] sm:$0xff] %v3618
    %3682 = vst [vmem:[%s10 + $0x70] sm:$0xff] %v3619
    %3683 = vst [vmem:[%s10 + $0x78] sm:$0xff] %v3620
    %3684 = vst [vmem:[%s10 + $0x80] sm:$0xff] %v3621
    %3685 = vst.msk [vmem:[%s10 + $0x88] sm:$0xff] %vm3036, %v3622
    %3686 = vst [vmem:[%s10 + $0x90] sm:$0xff] %v3623
    %3687 = vst [vmem:[%s10 + $0x98] sm:$0xff] %v3624
    %3688 = vst [vmem:[%s10 + $0xa0] sm:$0xff] %v3625
    %3689 = vst [vmem:[%s10 + $0xa8] sm:$0xff] %v3626
    %3690 = vst [vmem:[%s10 + $0xb0] sm:$0xff] %v3627
    %3691 = vst [vmem:[%s10 + $0xb8] sm:$0xff] %v3628
    %3692 = vst [vmem:[%s10 + $0xc0] sm:$0xff] %v3629
    %3693 = vst [vmem:[%s10 + $0xc8] sm:$0xff] %v3630
    %3694 = vst.msk [vmem:[%s10 + $0xd0] sm:$0xff] %vm3036, %v3631
    %3695 = vst [vmem:[%s10 + $0xd8] sm:$0xff] %v3632
    %3696 = vst [vmem:[%s10 + $0xe0] sm:$0xff] %v3633
    %3697 = vst [vmem:[%s10 + $0xe8] sm:$0xff] %v3634
    %3698 = vst [vmem:[%s10 + $0xf0] sm:$0xff] %v3635
    %3699 = vst [vmem:[%s10 + $0xf8] sm:$0xff] %v3636
    %3700 = vst [vmem:[%s10 + $0x100] sm:$0xff] %v3637
    %3701 = vst [vmem:[%s10 + $0x108] sm:$0xff] %v3638
    %3702 = vst [vmem:[%s10 + $0x110] sm:$0xff] %v3639
    %3703 = vst.msk [vmem:[%s10 + $0x118] sm:$0xff] %vm3036, %v3640
    %3704 = vst [vmem:[%s10 + $0x120] sm:$0xff] %v3641
    %3705 = vst [vmem:[%s10 + $0x128] sm:$0xff] %v3642
    %3706 = vst [vmem:[%s10 + $0x130] sm:$0xff] %v3643
    %3707 = vst [vmem:[%s10 + $0x138] sm:$0xff] %v3644
    %3708 = vst [vmem:[%s10 + $0x140] sm:$0xff] %v3645
    %3709 = vst [vmem:[%s10 + $0x148] sm:$0xff] %v3646
    %3710 = vst [vmem:[%s10 + $0x150] sm:$0xff] %v3647
    %3711 = vst [vmem:[%s10 + $0x158] sm:$0xff] %v3648
    %3712 = vst.msk [vmem:[%s10 + $0x160] sm:$0xff] %vm3036, %v3649
    %3713 = vst [vmem:[%s10 + $0x168] sm:$0xff] %v3650
    %3714 = vst [vmem:[%s10 + $0x170] sm:$0xff] %v3651
    %3715 = vst [vmem:[%s10 + $0x178] sm:$0xff] %v3652
    %3716 = vst [vmem:[%s10 + $0x180] sm:$0xff] %v3653
    %3717 = vst [vmem:[%s10 + $0x188] sm:$0xff] %v3654
    %3718 = vst [vmem:[%s10 + $0x190] sm:$0xff] %v3655
    %3719 = vst [vmem:[%s10 + $0x198] sm:$0xff] %v3656
    %3720 = vst [vmem:[%s10 + $0x1a0] sm:$0xff] %v3657
    %3721 = vst.msk [vmem:[%s10 + $0x1a8] sm:$0xff] %vm3036, %v3658
    %3722 = vst [vmem:[%s10 + $0x1b0] sm:$0x1] %v3659
    %3723 = vst [vmem:[%s10 + $0x1b8] sm:$0x1] %v3660
    %3724 = vst [vmem:[%s10 + $0x1c0] sm:$0x1] %v3661
    %3725 = vst [vmem:[%s10 + $0x1c8] sm:$0x1] %v3662
    %3726 = vst [vmem:[%s10 + $0x1d0] sm:$0x1] %v3663
    %3727 = vst [vmem:[%s10 + $0x1d8] sm:$0x1] %v3664
    %3728 = vst [vmem:[%s10 + $0x1e0] sm:$0x1] %v3665
    %3729 = vst [vmem:[%s10 + $0x1e8] sm:$0x1] %v3666
    %3730 = vst.msk [vmem:[%s10 + $0x1f0] sm:$0x1] %vm3048, %v3667
    // Predicated region
    $region38: #{forward.2} parent=1 // pred_check
      _
    $region39: #{forward.2} parent=1 // pred_check_branch
      %3732 = sbr.rel (0) target = $region41
    $region40: #{forward.2} parent=1 // pred_region
      _
    $region41: #{forward.2} parent=1 // pred_fallthru
      _
    // Predicated region
    $region42: #{forward.2} parent=1 // pred_check
      _
    $region43: #{forward.2} parent=1 // pred_check_branch
      %3734 = sbr.rel (0) target = $region45
    $region44: #{forward.2} parent=1 // pred_region
      _
    $region45: #{forward.2} parent=1 // pred_fallthru
      _

</llo_original>
